<compile_context>
chip_gen: v6e
topology: v6e:2x2x1
jax: 0.10.0
libtpu: 0.0.40
codegen_flags: <defaults>
</compile_context>

<pallas_src>
import functools
import math

import jax
import jax.numpy as jnp
from jax import lax
from jax.experimental import pallas as pl
from jax.experimental.pallas import tpu as pltpu

LN_EPS = 1e-5


# ---------------------------------------------------------------------------
# In-kernel helpers (traced inline into the fused kernel)
# ---------------------------------------------------------------------------
def _layernorm(y, gamma, beta):
    mean = jnp.mean(y, axis=-1, keepdims=True)
    var = jnp.mean((y - mean) ** 2, axis=-1, keepdims=True)
    return (y - mean) * lax.rsqrt(var + LN_EPS) * gamma + beta


def _mha(x_q, x_kv, wq, bq, wk, bk, wv, bv, wo, bo, g, b, h, d_k, d_v, scale):
    """LayerNorm(x_q + SDPA(x_q, x_kv, x_kv)) for one batch element."""
    # Fold the 1/sqrt(d_k) score scaling into q right after the projection
    # (scales nq*h*d_k values once instead of nq*nk per head).
    q = (jnp.dot(x_q, wq, preferred_element_type=jnp.float32) + bq) * scale
    k = jnp.dot(x_kv, wk, preferred_element_type=jnp.float32) + bk
    v = jnp.dot(x_kv, wv, preferred_element_type=jnp.float32) + bv

    nq = x_q.shape[0]
    d_model = wo.shape[1]
    # Accumulate each head directly into the output projection:
    #   concat(head_0..head_{h-1}) @ wo == sum_h head_h @ wo[h*d_v:(h+1)*d_v]
    # -> no lane-axis concatenate, one fewer relayout per head.
    o = jnp.zeros((nq, d_model), jnp.float32)
    for hi in range(h):                              # h is small & static
        qh = q[:, hi * d_k:(hi + 1) * d_k]           # (nq, d_k)
        kh = k[:, hi * d_k:(hi + 1) * d_k]           # (nk, d_k)
        vh = v[:, hi * d_v:(hi + 1) * d_v]           # (nk, d_v)
        # q @ k.T without materializing a transpose: contract both on dim 1.
        att = lax.dot_general(qh, kh, (((1,), (1,)), ((), ())),
                              preferred_element_type=jnp.float32)
        att = jnp.exp(att - jnp.max(att, axis=-1, keepdims=True))
        # EUP-approx reciprocal keeps the divide off the busy VPU slot.
        inv = pl.reciprocal(jnp.sum(att, axis=-1, keepdims=True), approx=True)
        att = att * inv
        head = jnp.dot(att, vh, preferred_element_type=jnp.float32)   # (nq, d_v)
        o = o + jnp.dot(head, wo[hi * d_v:(hi + 1) * d_v, :],
                        preferred_element_type=jnp.float32)
    o = o + bo
    return _layernorm(x_q + o, g, b)


# ---------------------------------------------------------------------------
# Fused decoder-layer kernel: one batch element per grid step
# ---------------------------------------------------------------------------
def _decoder_layer_kernel(h, d_k, d_v, scale,
                          x_ref, enc_ref,
                          # self-attention MHA (inner residual + LN)
                          s_wq, s_bq, s_wk, s_bk, s_wv, s_bv, s_wo, s_bo, s_g, s_b,
                          ln1_g, ln1_b,
                          # cross-attention MHA (inner residual + LN)
                          c_wq, c_bq, c_wk, c_bk, c_wv, c_bv, c_wo, c_bo, c_g, c_b,
                          ln2_g, ln2_b,
                          # position-wise FFN (+ residual + LN)
                          f_w1, f_b1, f_w2, f_b2, f_g, f_b,
                          out_ref):
    x = x_ref[0]       # (nq, d_model)
    enc = enc_ref[0]   # (nk, d_model)

    # self-attention: MultiHeadAttention -> layer_norm(queries + attn)
    sa = _mha(x, x, s_wq[...], s_bq[...], s_wk[...], s_bk[...], s_wv[...],
              s_bv[...], s_wo[...], s_bo[...], s_g[...], s_b[...],
              h, d_k, d_v, scale)
    # DecoderLayer.lnorm1(input + self_att)
    sa = _layernorm(x + sa, ln1_g[...], ln1_b[...])

    # cross-attention against the encoder output
    ea = _mha(sa, enc, c_wq[...], c_bq[...], c_wk[...], c_bk[...], c_wv[...],
              c_bv[...], c_wo[...], c_bo[...], c_g[...], c_b[...],
              h, d_k, d_v, scale)
    # DecoderLayer.lnorm2(self_att + enc_att)
    ea = _layernorm(sa + ea, ln2_g[...], ln2_b[...])

    # position-wise feed-forward: layer_norm(x + fc2(relu(fc1(x))))
    hdn = jnp.maximum(
        jnp.dot(ea, f_w1[...], preferred_element_type=jnp.float32) + f_b1[...],
        0.0)
    ff = jnp.dot(hdn, f_w2[...], preferred_element_type=jnp.float32) + f_b2[...]
    out_ref[0] = _layernorm(ea + ff, f_g[...], f_b[...]).astype(out_ref.dtype)


# ---------------------------------------------------------------------------
# pallas_call wrapper
# ---------------------------------------------------------------------------
def _const_spec(shape):
    nd = len(shape)
    return pl.BlockSpec(shape, lambda b: (0,) * nd)   # weight resident in VMEM


def decoder_layer(params, x, enc_output, h, d_k, d_v):
    b_s, nq, dm = x.shape
    nk = enc_output.shape[1]
    sa_p, ca_p, ff_p = params["self_att"], params["enc_att"], params["pwff"]
    weights = [
        sa_p["wq"], sa_p["bq"], sa_p["wk"], sa_p["bk"], sa_p["wv"], sa_p["bv"],
        sa_p["wo"], sa_p["bo"], sa_p["ln_g"], sa_p["ln_b"],
        params["lnorm1_g"], params["lnorm1_b"],
        ca_p["wq"], ca_p["bq"], ca_p["wk"], ca_p["bk"], ca_p["wv"], ca_p["bv"],
        ca_p["wo"], ca_p["bo"], ca_p["ln_g"], ca_p["ln_b"],
        params["lnorm2_g"], params["lnorm2_b"],
        ff_p["w1"], ff_p["b1"], ff_p["w2"], ff_p["b2"], ff_p["ln_g"], ff_p["ln_b"],
    ]
    kernel = functools.partial(_decoder_layer_kernel, h, d_k, d_v,
                               1.0 / math.sqrt(d_k))
    # NOTE: at production sizes (d_model>=512, d_ff>=2048) cast weights /
    # activations to bf16 for the MXU (keep f32 accumulation), single-buffer
    # the constant-index weight specs and set vmem_limit_bytes so the
    # weight-resident layout fits v7x's 64 MiB VMEM.
    return pl.pallas_call(
        kernel,
        out_shape=jax.ShapeDtypeStruct((b_s, nq, dm), jnp.float32),
        grid=(b_s,),
        in_specs=[pl.BlockSpec((1, nq, dm), lambda b: (b, 0, 0)),
                  pl.BlockSpec((1, nk, dm), lambda b: (b, 0, 0))]
                 + [_const_spec(w.shape) for w in weights],
        out_specs=pl.BlockSpec((1, nq, dm), lambda b: (b, 0, 0)),
        compiler_params=pltpu.CompilerParams(
            dimension_semantics=("parallel",)),
    )(x, enc_output, *weights)


# ---------------------------------------------------------------------------
# Deterministic parameter init + pure-JAX reference
# ---------------------------------------------------------------------------
def _xavier(key, fan_in, fan_out):
    bound = math.sqrt(6.0 / (fan_in + fan_out))
    return jax.random.uniform(key, (fan_in, fan_out), jnp.float32, -bound, bound)


def make_params(key, d_model, d_k, d_v, h, d_ff):
    ks = jax.random.split(key, 16)

    def mha_params(k0, k1, k2, k3):
        return dict(
            wq=_xavier(k0, d_model, h * d_k), bq=jnp.zeros((1, h * d_k), jnp.float32),
            wk=_xavier(k1, d_model, h * d_k), bk=jnp.zeros((1, h * d_k), jnp.float32),
            wv=_xavier(k2, d_model, h * d_v), bv=jnp.zeros((1, h * d_v), jnp.float32),
            wo=_xavier(k3, h * d_v, d_model), bo=jnp.zeros((1, d_model), jnp.float32),
            ln_g=jnp.ones((1, d_model), jnp.float32),
            ln_b=jnp.zeros((1, d_model), jnp.float32),
        )

    return dict(
        self_att=mha_params(ks[0], ks[1], ks[2], ks[3]),
        enc_att=mha_params(ks[4], ks[5], ks[6], ks[7]),
        lnorm1_g=jnp.ones((1, d_model), jnp.float32),
        lnorm1_b=jnp.zeros((1, d_model), jnp.float32),
        lnorm2_g=jnp.ones((1, d_model), jnp.float32),
        lnorm2_b=jnp.zeros((1, d_model), jnp.float32),
        pwff=dict(
            w1=_xavier(ks[8], d_model, d_ff),
            b1=0.01 * jax.random.normal(ks[9], (1, d_ff), jnp.float32),
            w2=_xavier(ks[10], d_ff, d_model),
            b2=0.01 * jax.random.normal(ks[11], (1, d_model), jnp.float32),
            ln_g=jnp.ones((1, d_model), jnp.float32),
            ln_b=jnp.zeros((1, d_model), jnp.float32),
        ),
    )


def _ref_ln(y, g, b):
    mean = jnp.mean(y, -1, keepdims=True)
    var = jnp.mean((y - mean) ** 2, -1, keepdims=True)
    return (y - mean) / jnp.sqrt(var + LN_EPS) * g + b


def _ref_mha(x_q, x_kv, p, h, d_k, d_v):
    b, nq, dm = x_q.shape
    nk = x_kv.shape[1]
    q = (x_q @ p["wq"] + p["bq"]).reshape(b, nq, h, d_k).transpose(0, 2, 1, 3)
    k = (x_kv @ p["wk"] + p["bk"]).reshape(b, nk, h, d_k).transpose(0, 2, 3, 1)
    v = (x_kv @ p["wv"] + p["bv"]).reshape(b, nk, h, d_v).transpose(0, 2, 1, 3)
    att = jax.nn.softmax(q @ k / math.sqrt(d_k), -1)
    o = (att @ v).transpose(0, 2, 1, 3).reshape(b, nq, h * d_v)
    o = o @ p["wo"] + p["bo"]
    return _ref_ln(x_q + o, p["ln_g"], p["ln_b"])


def _ref_decoder_layer(params, x, enc, h, d_k, d_v):
    sa = _ref_mha(x, x, params["self_att"], h, d_k, d_v)
    sa = _ref_ln(x + sa, params["lnorm1_g"], params["lnorm1_b"])
    ea = _ref_mha(sa, enc, params["enc_att"], h, d_k, d_v)
    ea = _ref_ln(sa + ea, params["lnorm2_g"], params["lnorm2_b"])
    p = params["pwff"]
    ff = jnp.maximum(ea @ p["w1"] + p["b1"], 0.0) @ p["w2"] + p["b2"]
    return _ref_ln(ea + ff, p["ln_g"], p["ln_b"])


# ---------------------------------------------------------------------------
if __name__ == "__main__":
    d_model, d_k, d_v, h, d_ff = 32, 8, 8, 4, 64
    b_s, nq, nk = 2, 8, 16

    key = jax.random.PRNGKey(0)
    k_params, k_x, k_enc = jax.random.split(key, 3)

    params = make_params(k_params, d_model, d_k, d_v, h, d_ff)
    x = jax.random.normal(k_x, (b_s, nq, d_model), jnp.float32)
    enc_output = jax.random.normal(k_enc, (b_s, nk, d_model), jnp.float32)

    out = decoder_layer(params, x, enc_output, h, d_k, d_v)
    out = jax.block_until_ready(out)

    ref = _ref_decoder_layer(params, x, enc_output, h, d_k, d_v)
    assert out.shape == (b_s, nq, d_model)
    # tolerance relaxed vs pure-f32 because the softmax denominator uses the
    # EUP approximate reciprocal (pl.reciprocal(approx=True)).
    assert jnp.allclose(out, ref, atol=1e-2, rtol=1e-2), "mismatch vs JAX reference"

    print("KERNEL_OK")
</pallas_src>

<mosaic_0001>
module attributes {stable_mosaic.version = 11 : i64} {
  func.func @_decoder_layer_kernel(%arg0: i32, %arg1: memref<1x8x32xf32, #tpu.memory_space<vmem>>, %arg2: memref<1x16x32xf32, #tpu.memory_space<vmem>>, %arg3: memref<32x32xf32, #tpu.memory_space<vmem>>, %arg4: memref<1x32xf32, #tpu.memory_space<vmem>>, %arg5: memref<32x32xf32, #tpu.memory_space<vmem>>, %arg6: memref<1x32xf32, #tpu.memory_space<vmem>>, %arg7: memref<32x32xf32, #tpu.memory_space<vmem>>, %arg8: memref<1x32xf32, #tpu.memory_space<vmem>>, %arg9: memref<32x32xf32, #tpu.memory_space<vmem>>, %arg10: memref<1x32xf32, #tpu.memory_space<vmem>>, %arg11: memref<1x32xf32, #tpu.memory_space<vmem>>, %arg12: memref<1x32xf32, #tpu.memory_space<vmem>>, %arg13: memref<1x32xf32, #tpu.memory_space<vmem>>, %arg14: memref<1x32xf32, #tpu.memory_space<vmem>>, %arg15: memref<32x32xf32, #tpu.memory_space<vmem>>, %arg16: memref<1x32xf32, #tpu.memory_space<vmem>>, %arg17: memref<32x32xf32, #tpu.memory_space<vmem>>, %arg18: memref<1x32xf32, #tpu.memory_space<vmem>>, %arg19: memref<32x32xf32, #tpu.memory_space<vmem>>, %arg20: memref<1x32xf32, #tpu.memory_space<vmem>>, %arg21: memref<32x32xf32, #tpu.memory_space<vmem>>, %arg22: memref<1x32xf32, #tpu.memory_space<vmem>>, %arg23: memref<1x32xf32, #tpu.memory_space<vmem>>, %arg24: memref<1x32xf32, #tpu.memory_space<vmem>>, %arg25: memref<1x32xf32, #tpu.memory_space<vmem>>, %arg26: memref<1x32xf32, #tpu.memory_space<vmem>>, %arg27: memref<32x64xf32, #tpu.memory_space<vmem>>, %arg28: memref<1x64xf32, #tpu.memory_space<vmem>>, %arg29: memref<64x32xf32, #tpu.memory_space<vmem>>, %arg30: memref<1x32xf32, #tpu.memory_space<vmem>>, %arg31: memref<1x32xf32, #tpu.memory_space<vmem>>, %arg32: memref<1x32xf32, #tpu.memory_space<vmem>>, %arg33: memref<1x8x32xf32, #tpu.memory_space<vmem>>) attributes {dimension_semantics = [#tpu.dimension_semantics<parallel>], iteration_bounds = array<i64: 2>, scalar_prefetch = 0 : i64, scratch_operands = 0 : i64, tpu.core_type = #tpu.core_type<tc>, window_params = [{transform_indices = @transform_0, window_bounds = array<i64: 1, 8, 32>}, {transform_indices = @transform_1, window_bounds = array<i64: 1, 16, 32>}, {pipeline_mode = #tpu.pipeline_mode<synchronous>, transform_indices = @transform_2, window_bounds = array<i64: 32, 32>}, {pipeline_mode = #tpu.pipeline_mode<synchronous>, transform_indices = @transform_3, window_bounds = array<i64: 1, 32>}, {pipeline_mode = #tpu.pipeline_mode<synchronous>, transform_indices = @transform_4, window_bounds = array<i64: 32, 32>}, {pipeline_mode = #tpu.pipeline_mode<synchronous>, transform_indices = @transform_5, window_bounds = array<i64: 1, 32>}, {pipeline_mode = #tpu.pipeline_mode<synchronous>, transform_indices = @transform_6, window_bounds = array<i64: 32, 32>}, {pipeline_mode = #tpu.pipeline_mode<synchronous>, transform_indices = @transform_7, window_bounds = array<i64: 1, 32>}, {pipeline_mode = #tpu.pipeline_mode<synchronous>, transform_indices = @transform_8, window_bounds = array<i64: 32, 32>}, {pipeline_mode = #tpu.pipeline_mode<synchronous>, transform_indices = @transform_9, window_bounds = array<i64: 1, 32>}, {pipeline_mode = #tpu.pipeline_mode<synchronous>, transform_indices = @transform_10, window_bounds = array<i64: 1, 32>}, {pipeline_mode = #tpu.pipeline_mode<synchronous>, transform_indices = @transform_11, window_bounds = array<i64: 1, 32>}, {pipeline_mode = #tpu.pipeline_mode<synchronous>, transform_indices = @transform_12, window_bounds = array<i64: 1, 32>}, {pipeline_mode = #tpu.pipeline_mode<synchronous>, transform_indices = @transform_13, window_bounds = array<i64: 1, 32>}, {pipeline_mode = #tpu.pipeline_mode<synchronous>, transform_indices = @transform_14, window_bounds = array<i64: 32, 32>}, {pipeline_mode = #tpu.pipeline_mode<synchronous>, transform_indices = @transform_15, window_bounds = array<i64: 1, 32>}, {pipeline_mode = #tpu.pipeline_mode<synchronous>, transform_indices = @transform_16, window_bounds = array<i64: 32, 32>}, {pipeline_mode = #tpu.pipeline_mode<synchronous>, transform_indices = @transform_17, window_bounds = array<i64: 1, 32>}, {pipeline_mode = #tpu.pipeline_mode<synchronous>, transform_indices = @transform_18, window_bounds = array<i64: 32, 32>}, {pipeline_mode = #tpu.pipeline_mode<synchronous>, transform_indices = @transform_19, window_bounds = array<i64: 1, 32>}, {pipeline_mode = #tpu.pipeline_mode<synchronous>, transform_indices = @transform_20, window_bounds = array<i64: 32, 32>}, {pipeline_mode = #tpu.pipeline_mode<synchronous>, transform_indices = @transform_21, window_bounds = array<i64: 1, 32>}, {pipeline_mode = #tpu.pipeline_mode<synchronous>, transform_indices = @transform_22, window_bounds = array<i64: 1, 32>}, {pipeline_mode = #tpu.pipeline_mode<synchronous>, transform_indices = @transform_23, window_bounds = array<i64: 1, 32>}, {pipeline_mode = #tpu.pipeline_mode<synchronous>, transform_indices = @transform_24, window_bounds = array<i64: 1, 32>}, {pipeline_mode = #tpu.pipeline_mode<synchronous>, transform_indices = @transform_25, window_bounds = array<i64: 1, 32>}, {pipeline_mode = #tpu.pipeline_mode<synchronous>, transform_indices = @transform_26, window_bounds = array<i64: 32, 64>}, {pipeline_mode = #tpu.pipeline_mode<synchronous>, transform_indices = @transform_27, window_bounds = array<i64: 1, 64>}, {pipeline_mode = #tpu.pipeline_mode<synchronous>, transform_indices = @transform_28, window_bounds = array<i64: 64, 32>}, {pipeline_mode = #tpu.pipeline_mode<synchronous>, transform_indices = @transform_29, window_bounds = array<i64: 1, 32>}, {pipeline_mode = #tpu.pipeline_mode<synchronous>, transform_indices = @transform_30, window_bounds = array<i64: 1, 32>}, {pipeline_mode = #tpu.pipeline_mode<synchronous>, transform_indices = @transform_31, window_bounds = array<i64: 1, 32>}, {transform_indices = @transform_32, window_bounds = array<i64: 1, 8, 32>}]} {
    %c0 = arith.constant 0 : index
    %c0_0 = arith.constant 0 : index
    %c0_1 = arith.constant 0 : index
    %0 = vector.load %arg1[%c0, %c0_0, %c0_1] : memref<1x8x32xf32, #tpu.memory_space<vmem>>, vector<1x8x32xf32>
    %1 = vector.shape_cast %0 : vector<1x8x32xf32> to vector<8x32xf32>
    %c0_2 = arith.constant 0 : index
    %c0_3 = arith.constant 0 : index
    %c0_4 = arith.constant 0 : index
    %2 = vector.load %arg2[%c0_2, %c0_3, %c0_4] : memref<1x16x32xf32, #tpu.memory_space<vmem>>, vector<1x16x32xf32>
    %3 = vector.shape_cast %2 : vector<1x16x32xf32> to vector<16x32xf32>
    %c0_5 = arith.constant 0 : index
    %c0_6 = arith.constant 0 : index
    %4 = vector.load %arg3[%c0_5, %c0_6] : memref<32x32xf32, #tpu.memory_space<vmem>>, vector<32x32xf32>
    %c0_7 = arith.constant 0 : index
    %c0_8 = arith.constant 0 : index
    %5 = vector.load %arg4[%c0_7, %c0_8] : memref<1x32xf32, #tpu.memory_space<vmem>>, vector<1x32xf32>
    %c0_9 = arith.constant 0 : index
    %c0_10 = arith.constant 0 : index
    %6 = vector.load %arg5[%c0_9, %c0_10] : memref<32x32xf32, #tpu.memory_space<vmem>>, vector<32x32xf32>
    %c0_11 = arith.constant 0 : index
    %c0_12 = arith.constant 0 : index
    %7 = vector.load %arg6[%c0_11, %c0_12] : memref<1x32xf32, #tpu.memory_space<vmem>>, vector<1x32xf32>
    %c0_13 = arith.constant 0 : index
    %c0_14 = arith.constant 0 : index
    %8 = vector.load %arg7[%c0_13, %c0_14] : memref<32x32xf32, #tpu.memory_space<vmem>>, vector<32x32xf32>
    %c0_15 = arith.constant 0 : index
    %c0_16 = arith.constant 0 : index
    %9 = vector.load %arg8[%c0_15, %c0_16] : memref<1x32xf32, #tpu.memory_space<vmem>>, vector<1x32xf32>
    %c0_17 = arith.constant 0 : index
    %c0_18 = arith.constant 0 : index
    %10 = vector.load %arg9[%c0_17, %c0_18] : memref<32x32xf32, #tpu.memory_space<vmem>>, vector<32x32xf32>
    %c0_19 = arith.constant 0 : index
    %c0_20 = arith.constant 0 : index
    %11 = vector.load %arg10[%c0_19, %c0_20] : memref<1x32xf32, #tpu.memory_space<vmem>>, vector<1x32xf32>
    %c0_21 = arith.constant 0 : index
    %c0_22 = arith.constant 0 : index
    %12 = vector.load %arg11[%c0_21, %c0_22] : memref<1x32xf32, #tpu.memory_space<vmem>>, vector<1x32xf32>
    %c0_23 = arith.constant 0 : index
    %c0_24 = arith.constant 0 : index
    %13 = vector.load %arg12[%c0_23, %c0_24] : memref<1x32xf32, #tpu.memory_space<vmem>>, vector<1x32xf32>
    %cst = arith.constant dense<0.000000e+00> : vector<8x32xf32>
    %14 = tpu.matmul %1, %4, %cst {dimension_numbers = #tpu.dot_dimension_numbers<[1], [0], [0], [1], [0, 0, 1, 1], [], []>} : vector<8x32xf32>, vector<32x32xf32>, vector<8x32xf32> -> vector<8x32xf32>
    %15 = vector.broadcast %5 : vector<1x32xf32> to vector<8x32xf32>
    %16 = arith.addf %14, %15 : vector<8x32xf32>
    %cst_25 = arith.constant 0.353553385 : f32
    %17 = vector.broadcast %cst_25 : f32 to vector<8x32xf32>
    %18 = arith.mulf %16, %17 : vector<8x32xf32>
    %cst_26 = arith.constant dense<0.000000e+00> : vector<8x32xf32>
    %19 = tpu.matmul %1, %6, %cst_26 {dimension_numbers = #tpu.dot_dimension_numbers<[1], [0], [0], [1], [0, 0, 1, 1], [], []>} : vector<8x32xf32>, vector<32x32xf32>, vector<8x32xf32> -> vector<8x32xf32>
    %20 = vector.broadcast %7 : vector<1x32xf32> to vector<8x32xf32>
    %21 = arith.addf %19, %20 : vector<8x32xf32>
    %cst_27 = arith.constant dense<0.000000e+00> : vector<8x32xf32>
    %22 = tpu.matmul %1, %8, %cst_27 {dimension_numbers = #tpu.dot_dimension_numbers<[1], [0], [0], [1], [0, 0, 1, 1], [], []>} : vector<8x32xf32>, vector<32x32xf32>, vector<8x32xf32> -> vector<8x32xf32>
    %23 = vector.broadcast %9 : vector<1x32xf32> to vector<8x32xf32>
    %24 = arith.addf %22, %23 : vector<8x32xf32>
    %cst_28 = arith.constant 0.000000e+00 : f32
    %25 = vector.broadcast %cst_28 : f32 to vector<8x32xf32>
    %26 = vector.extract_strided_slice %18 {offsets = [0, 0], sizes = [8, 8], strides = [1, 1]} : vector<8x32xf32> to vector<8x8xf32>
    %27 = vector.extract_strided_slice %21 {offsets = [0, 0], sizes = [8, 8], strides = [1, 1]} : vector<8x32xf32> to vector<8x8xf32>
    %28 = vector.extract_strided_slice %24 {offsets = [0, 0], sizes = [8, 8], strides = [1, 1]} : vector<8x32xf32> to vector<8x8xf32>
    %cst_29 = arith.constant dense<0.000000e+00> : vector<8x8xf32>
    %29 = tpu.matmul %26, %27, %cst_29 {dimension_numbers = #tpu.dot_dimension_numbers<[1], [1], [0], [0], [0, 0, 1, 0], [], []>} : vector<8x8xf32>, vector<8x8xf32>, vector<8x8xf32> -> vector<8x8xf32>
    %cst_30 = arith.constant dense<0xFF800000> : vector<8xf32>
    %30 = vector.multi_reduction <maximumf>, %29, %cst_30 [1] : vector<8x8xf32> to vector<8xf32>
    %31 = vector.shape_cast %30 : vector<8xf32> to vector<8x1xf32>
    %32 = vector.broadcast %31 : vector<8x1xf32> to vector<8x8xf32>
    %33 = arith.subf %29, %32 : vector<8x8xf32>
    %34 = math.exp %33 : vector<8x8xf32>
    %cst_31 = arith.constant dense<0.000000e+00> : vector<8xf32>
    %35 = vector.multi_reduction <add>, %34, %cst_31 [1] : vector<8x8xf32> to vector<8xf32>
    %36 = vector.shape_cast %35 : vector<8xf32> to vector<8x1xf32>
    %37 = tpu.reciprocal %36 {approx = true} : vector<8x1xf32> -> vector<8x1xf32>
    %38 = vector.broadcast %37 : vector<8x1xf32> to vector<8x8xf32>
    %39 = arith.mulf %34, %38 : vector<8x8xf32>
    %cst_32 = arith.constant dense<0.000000e+00> : vector<8x8xf32>
    %40 = tpu.matmul %39, %28, %cst_32 {dimension_numbers = #tpu.dot_dimension_numbers<[1], [0], [0], [1], [0, 0, 1, 1], [], []>} : vector<8x8xf32>, vector<8x8xf32>, vector<8x8xf32> -> vector<8x8xf32>
    %41 = vector.extract_strided_slice %10 {offsets = [0, 0], sizes = [8, 32], strides = [1, 1]} : vector<32x32xf32> to vector<8x32xf32>
    %cst_33 = arith.constant dense<0.000000e+00> : vector<8x32xf32>
    %42 = tpu.matmul %40, %41, %cst_33 {dimension_numbers = #tpu.dot_dimension_numbers<[1], [0], [0], [1], [0, 0, 1, 1], [], []>} : vector<8x8xf32>, vector<8x32xf32>, vector<8x32xf32> -> vector<8x32xf32>
    %43 = arith.addf %25, %42 : vector<8x32xf32>
    %44 = vector.extract_strided_slice %18 {offsets = [0, 8], sizes = [8, 8], strides = [1, 1]} : vector<8x32xf32> to vector<8x8xf32>
    %45 = vector.extract_strided_slice %21 {offsets = [0, 8], sizes = [8, 8], strides = [1, 1]} : vector<8x32xf32> to vector<8x8xf32>
    %46 = vector.extract_strided_slice %24 {offsets = [0, 8], sizes = [8, 8], strides = [1, 1]} : vector<8x32xf32> to vector<8x8xf32>
    %cst_34 = arith.constant dense<0.000000e+00> : vector<8x8xf32>
    %47 = tpu.matmul %44, %45, %cst_34 {dimension_numbers = #tpu.dot_dimension_numbers<[1], [1], [0], [0], [0, 0, 1, 0], [], []>} : vector<8x8xf32>, vector<8x8xf32>, vector<8x8xf32> -> vector<8x8xf32>
    %cst_35 = arith.constant dense<0xFF800000> : vector<8xf32>
    %48 = vector.multi_reduction <maximumf>, %47, %cst_35 [1] : vector<8x8xf32> to vector<8xf32>
    %49 = vector.shape_cast %48 : vector<8xf32> to vector<8x1xf32>
    %50 = vector.broadcast %49 : vector<8x1xf32> to vector<8x8xf32>
    %51 = arith.subf %47, %50 : vector<8x8xf32>
    %52 = math.exp %51 : vector<8x8xf32>
    %cst_36 = arith.constant dense<0.000000e+00> : vector<8xf32>
    %53 = vector.multi_reduction <add>, %52, %cst_36 [1] : vector<8x8xf32> to vector<8xf32>
    %54 = vector.shape_cast %53 : vector<8xf32> to vector<8x1xf32>
    %55 = tpu.reciprocal %54 {approx = true} : vector<8x1xf32> -> vector<8x1xf32>
    %56 = vector.broadcast %55 : vector<8x1xf32> to vector<8x8xf32>
    %57 = arith.mulf %52, %56 : vector<8x8xf32>
    %cst_37 = arith.constant dense<0.000000e+00> : vector<8x8xf32>
    %58 = tpu.matmul %57, %46, %cst_37 {dimension_numbers = #tpu.dot_dimension_numbers<[1], [0], [0], [1], [0, 0, 1, 1], [], []>} : vector<8x8xf32>, vector<8x8xf32>, vector<8x8xf32> -> vector<8x8xf32>
    %59 = vector.extract_strided_slice %10 {offsets = [8, 0], sizes = [8, 32], strides = [1, 1]} : vector<32x32xf32> to vector<8x32xf32>
    %cst_38 = arith.constant dense<0.000000e+00> : vector<8x32xf32>
    %60 = tpu.matmul %58, %59, %cst_38 {dimension_numbers = #tpu.dot_dimension_numbers<[1], [0], [0], [1], [0, 0, 1, 1], [], []>} : vector<8x8xf32>, vector<8x32xf32>, vector<8x32xf32> -> vector<8x32xf32>
    %61 = arith.addf %43, %60 : vector<8x32xf32>
    %62 = vector.extract_strided_slice %18 {offsets = [0, 16], sizes = [8, 8], strides = [1, 1]} : vector<8x32xf32> to vector<8x8xf32>
    %63 = vector.extract_strided_slice %21 {offsets = [0, 16], sizes = [8, 8], strides = [1, 1]} : vector<8x32xf32> to vector<8x8xf32>
    %64 = vector.extract_strided_slice %24 {offsets = [0, 16], sizes = [8, 8], strides = [1, 1]} : vector<8x32xf32> to vector<8x8xf32>
    %cst_39 = arith.constant dense<0.000000e+00> : vector<8x8xf32>
    %65 = tpu.matmul %62, %63, %cst_39 {dimension_numbers = #tpu.dot_dimension_numbers<[1], [1], [0], [0], [0, 0, 1, 0], [], []>} : vector<8x8xf32>, vector<8x8xf32>, vector<8x8xf32> -> vector<8x8xf32>
    %cst_40 = arith.constant dense<0xFF800000> : vector<8xf32>
    %66 = vector.multi_reduction <maximumf>, %65, %cst_40 [1] : vector<8x8xf32> to vector<8xf32>
    %67 = vector.shape_cast %66 : vector<8xf32> to vector<8x1xf32>
    %68 = vector.broadcast %67 : vector<8x1xf32> to vector<8x8xf32>
    %69 = arith.subf %65, %68 : vector<8x8xf32>
    %70 = math.exp %69 : vector<8x8xf32>
    %cst_41 = arith.constant dense<0.000000e+00> : vector<8xf32>
    %71 = vector.multi_reduction <add>, %70, %cst_41 [1] : vector<8x8xf32> to vector<8xf32>
    %72 = vector.shape_cast %71 : vector<8xf32> to vector<8x1xf32>
    %73 = tpu.reciprocal %72 {approx = true} : vector<8x1xf32> -> vector<8x1xf32>
    %74 = vector.broadcast %73 : vector<8x1xf32> to vector<8x8xf32>
    %75 = arith.mulf %70, %74 : vector<8x8xf32>
    %cst_42 = arith.constant dense<0.000000e+00> : vector<8x8xf32>
    %76 = tpu.matmul %75, %64, %cst_42 {dimension_numbers = #tpu.dot_dimension_numbers<[1], [0], [0], [1], [0, 0, 1, 1], [], []>} : vector<8x8xf32>, vector<8x8xf32>, vector<8x8xf32> -> vector<8x8xf32>
    %77 = vector.extract_strided_slice %10 {offsets = [16, 0], sizes = [8, 32], strides = [1, 1]} : vector<32x32xf32> to vector<8x32xf32>
    %cst_43 = arith.constant dense<0.000000e+00> : vector<8x32xf32>
    %78 = tpu.matmul %76, %77, %cst_43 {dimension_numbers = #tpu.dot_dimension_numbers<[1], [0], [0], [1], [0, 0, 1, 1], [], []>} : vector<8x8xf32>, vector<8x32xf32>, vector<8x32xf32> -> vector<8x32xf32>
    %79 = arith.addf %61, %78 : vector<8x32xf32>
    %80 = vector.extract_strided_slice %18 {offsets = [0, 24], sizes = [8, 8], strides = [1, 1]} : vector<8x32xf32> to vector<8x8xf32>
    %81 = vector.extract_strided_slice %21 {offsets = [0, 24], sizes = [8, 8], strides = [1, 1]} : vector<8x32xf32> to vector<8x8xf32>
    %82 = vector.extract_strided_slice %24 {offsets = [0, 24], sizes = [8, 8], strides = [1, 1]} : vector<8x32xf32> to vector<8x8xf32>
    %cst_44 = arith.constant dense<0.000000e+00> : vector<8x8xf32>
    %83 = tpu.matmul %80, %81, %cst_44 {dimension_numbers = #tpu.dot_dimension_numbers<[1], [1], [0], [0], [0, 0, 1, 0], [], []>} : vector<8x8xf32>, vector<8x8xf32>, vector<8x8xf32> -> vector<8x8xf32>
    %cst_45 = arith.constant dense<0xFF800000> : vector<8xf32>
    %84 = vector.multi_reduction <maximumf>, %83, %cst_45 [1] : vector<8x8xf32> to vector<8xf32>
    %85 = vector.shape_cast %84 : vector<8xf32> to vector<8x1xf32>
    %86 = vector.broadcast %85 : vector<8x1xf32> to vector<8x8xf32>
    %87 = arith.subf %83, %86 : vector<8x8xf32>
    %88 = math.exp %87 : vector<8x8xf32>
    %cst_46 = arith.constant dense<0.000000e+00> : vector<8xf32>
    %89 = vector.multi_reduction <add>, %88, %cst_46 [1] : vector<8x8xf32> to vector<8xf32>
    %90 = vector.shape_cast %89 : vector<8xf32> to vector<8x1xf32>
    %91 = tpu.reciprocal %90 {approx = true} : vector<8x1xf32> -> vector<8x1xf32>
    %92 = vector.broadcast %91 : vector<8x1xf32> to vector<8x8xf32>
    %93 = arith.mulf %88, %92 : vector<8x8xf32>
    %cst_47 = arith.constant dense<0.000000e+00> : vector<8x8xf32>
    %94 = tpu.matmul %93, %82, %cst_47 {dimension_numbers = #tpu.dot_dimension_numbers<[1], [0], [0], [1], [0, 0, 1, 1], [], []>} : vector<8x8xf32>, vector<8x8xf32>, vector<8x8xf32> -> vector<8x8xf32>
    %95 = vector.extract_strided_slice %10 {offsets = [24, 0], sizes = [8, 32], strides = [1, 1]} : vector<32x32xf32> to vector<8x32xf32>
    %cst_48 = arith.constant dense<0.000000e+00> : vector<8x32xf32>
    %96 = tpu.matmul %94, %95, %cst_48 {dimension_numbers = #tpu.dot_dimension_numbers<[1], [0], [0], [1], [0, 0, 1, 1], [], []>} : vector<8x8xf32>, vector<8x32xf32>, vector<8x32xf32> -> vector<8x32xf32>
    %97 = arith.addf %79, %96 : vector<8x32xf32>
    %98 = vector.broadcast %11 : vector<1x32xf32> to vector<8x32xf32>
    %99 = arith.addf %97, %98 : vector<8x32xf32>
    %100 = arith.addf %1, %99 : vector<8x32xf32>
    %cst_49 = arith.constant dense<0.000000e+00> : vector<8xf32>
    %101 = vector.multi_reduction <add>, %100, %cst_49 [1] : vector<8x32xf32> to vector<8xf32>
    %102 = vector.shape_cast %101 : vector<8xf32> to vector<8x1xf32>
    %cst_50 = arith.constant 3.200000e+01 : f32
    %103 = vector.broadcast %cst_50 : f32 to vector<8x1xf32>
    %104 = arith.divf %102, %103 : vector<8x1xf32>
    %105 = vector.broadcast %104 : vector<8x1xf32> to vector<8x32xf32>
    %106 = arith.subf %100, %105 : vector<8x32xf32>
    %107 = arith.mulf %106, %106 : vector<8x32xf32>
    %cst_51 = arith.constant dense<0.000000e+00> : vector<8xf32>
    %108 = vector.multi_reduction <add>, %107, %cst_51 [1] : vector<8x32xf32> to vector<8xf32>
    %109 = vector.shape_cast %108 : vector<8xf32> to vector<8x1xf32>
    %cst_52 = arith.constant 3.200000e+01 : f32
    %110 = vector.broadcast %cst_52 : f32 to vector<8x1xf32>
    %111 = arith.divf %109, %110 : vector<8x1xf32>
    %112 = vector.broadcast %104 : vector<8x1xf32> to vector<8x32xf32>
    %113 = arith.subf %100, %112 : vector<8x32xf32>
    %cst_53 = arith.constant 9.99999974E-6 : f32
    %114 = vector.broadcast %cst_53 : f32 to vector<8x1xf32>
    %115 = arith.addf %111, %114 : vector<8x1xf32>
    %116 = math.rsqrt %115 : vector<8x1xf32>
    %117 = vector.broadcast %116 : vector<8x1xf32> to vector<8x32xf32>
    %118 = arith.mulf %113, %117 : vector<8x32xf32>
    %119 = vector.broadcast %12 : vector<1x32xf32> to vector<8x32xf32>
    %120 = arith.mulf %118, %119 : vector<8x32xf32>
    %121 = vector.broadcast %13 : vector<1x32xf32> to vector<8x32xf32>
    %122 = arith.addf %120, %121 : vector<8x32xf32>
    %123 = arith.addf %1, %122 : vector<8x32xf32>
    %c0_54 = arith.constant 0 : index
    %c0_55 = arith.constant 0 : index
    %124 = vector.load %arg13[%c0_54, %c0_55] : memref<1x32xf32, #tpu.memory_space<vmem>>, vector<1x32xf32>
    %c0_56 = arith.constant 0 : index
    %c0_57 = arith.constant 0 : index
    %125 = vector.load %arg14[%c0_56, %c0_57] : memref<1x32xf32, #tpu.memory_space<vmem>>, vector<1x32xf32>
    %cst_58 = arith.constant dense<0.000000e+00> : vector<8xf32>
    %126 = vector.multi_reduction <add>, %123, %cst_58 [1] : vector<8x32xf32> to vector<8xf32>
    %127 = vector.shape_cast %126 : vector<8xf32> to vector<8x1xf32>
    %cst_59 = arith.constant 3.200000e+01 : f32
    %128 = vector.broadcast %cst_59 : f32 to vector<8x1xf32>
    %129 = arith.divf %127, %128 : vector<8x1xf32>
    %130 = vector.broadcast %129 : vector<8x1xf32> to vector<8x32xf32>
    %131 = arith.subf %123, %130 : vector<8x32xf32>
    %132 = arith.mulf %131, %131 : vector<8x32xf32>
    %cst_60 = arith.constant dense<0.000000e+00> : vector<8xf32>
    %133 = vector.multi_reduction <add>, %132, %cst_60 [1] : vector<8x32xf32> to vector<8xf32>
    %134 = vector.shape_cast %133 : vector<8xf32> to vector<8x1xf32>
    %cst_61 = arith.constant 3.200000e+01 : f32
    %135 = vector.broadcast %cst_61 : f32 to vector<8x1xf32>
    %136 = arith.divf %134, %135 : vector<8x1xf32>
    %137 = vector.broadcast %129 : vector<8x1xf32> to vector<8x32xf32>
    %138 = arith.subf %123, %137 : vector<8x32xf32>
    %cst_62 = arith.constant 9.99999974E-6 : f32
    %139 = vector.broadcast %cst_62 : f32 to vector<8x1xf32>
    %140 = arith.addf %136, %139 : vector<8x1xf32>
    %141 = math.rsqrt %140 : vector<8x1xf32>
    %142 = vector.broadcast %141 : vector<8x1xf32> to vector<8x32xf32>
    %143 = arith.mulf %138, %142 : vector<8x32xf32>
    %144 = vector.broadcast %124 : vector<1x32xf32> to vector<8x32xf32>
    %145 = arith.mulf %143, %144 : vector<8x32xf32>
    %146 = vector.broadcast %125 : vector<1x32xf32> to vector<8x32xf32>
    %147 = arith.addf %145, %146 : vector<8x32xf32>
    %c0_63 = arith.constant 0 : index
    %c0_64 = arith.constant 0 : index
    %148 = vector.load %arg15[%c0_63, %c0_64] : memref<32x32xf32, #tpu.memory_space<vmem>>, vector<32x32xf32>
    %c0_65 = arith.constant 0 : index
    %c0_66 = arith.constant 0 : index
    %149 = vector.load %arg16[%c0_65, %c0_66] : memref<1x32xf32, #tpu.memory_space<vmem>>, vector<1x32xf32>
    %c0_67 = arith.constant 0 : index
    %c0_68 = arith.constant 0 : index
    %150 = vector.load %arg17[%c0_67, %c0_68] : memref<32x32xf32, #tpu.memory_space<vmem>>, vector<32x32xf32>
    %c0_69 = arith.constant 0 : index
    %c0_70 = arith.constant 0 : index
    %151 = vector.load %arg18[%c0_69, %c0_70] : memref<1x32xf32, #tpu.memory_space<vmem>>, vector<1x32xf32>
    %c0_71 = arith.constant 0 : index
    %c0_72 = arith.constant 0 : index
    %152 = vector.load %arg19[%c0_71, %c0_72] : memref<32x32xf32, #tpu.memory_space<vmem>>, vector<32x32xf32>
    %c0_73 = arith.constant 0 : index
    %c0_74 = arith.constant 0 : index
    %153 = vector.load %arg20[%c0_73, %c0_74] : memref<1x32xf32, #tpu.memory_space<vmem>>, vector<1x32xf32>
    %c0_75 = arith.constant 0 : index
    %c0_76 = arith.constant 0 : index
    %154 = vector.load %arg21[%c0_75, %c0_76] : memref<32x32xf32, #tpu.memory_space<vmem>>, vector<32x32xf32>
    %c0_77 = arith.constant 0 : index
    %c0_78 = arith.constant 0 : index
    %155 = vector.load %arg22[%c0_77, %c0_78] : memref<1x32xf32, #tpu.memory_space<vmem>>, vector<1x32xf32>
    %c0_79 = arith.constant 0 : index
    %c0_80 = arith.constant 0 : index
    %156 = vector.load %arg23[%c0_79, %c0_80] : memref<1x32xf32, #tpu.memory_space<vmem>>, vector<1x32xf32>
    %c0_81 = arith.constant 0 : index
    %c0_82 = arith.constant 0 : index
    %157 = vector.load %arg24[%c0_81, %c0_82] : memref<1x32xf32, #tpu.memory_space<vmem>>, vector<1x32xf32>
    %cst_83 = arith.constant dense<0.000000e+00> : vector<8x32xf32>
    %158 = tpu.matmul %147, %148, %cst_83 {dimension_numbers = #tpu.dot_dimension_numbers<[1], [0], [0], [1], [0, 0, 1, 1], [], []>} : vector<8x32xf32>, vector<32x32xf32>, vector<8x32xf32> -> vector<8x32xf32>
    %159 = vector.broadcast %149 : vector<1x32xf32> to vector<8x32xf32>
    %160 = arith.addf %158, %159 : vector<8x32xf32>
    %cst_84 = arith.constant 0.353553385 : f32
    %161 = vector.broadcast %cst_84 : f32 to vector<8x32xf32>
    %162 = arith.mulf %160, %161 : vector<8x32xf32>
    %cst_85 = arith.constant dense<0.000000e+00> : vector<16x32xf32>
    %163 = tpu.matmul %3, %150, %cst_85 {dimension_numbers = #tpu.dot_dimension_numbers<[1], [0], [0], [1], [0, 0, 1, 1], [], []>} : vector<16x32xf32>, vector<32x32xf32>, vector<16x32xf32> -> vector<16x32xf32>
    %164 = vector.broadcast %151 : vector<1x32xf32> to vector<16x32xf32>
    %165 = arith.addf %163, %164 : vector<16x32xf32>
    %cst_86 = arith.constant dense<0.000000e+00> : vector<16x32xf32>
    %166 = tpu.matmul %3, %152, %cst_86 {dimension_numbers = #tpu.dot_dimension_numbers<[1], [0], [0], [1], [0, 0, 1, 1], [], []>} : vector<16x32xf32>, vector<32x32xf32>, vector<16x32xf32> -> vector<16x32xf32>
    %167 = vector.broadcast %153 : vector<1x32xf32> to vector<16x32xf32>
    %168 = arith.addf %166, %167 : vector<16x32xf32>
    %cst_87 = arith.constant 0.000000e+00 : f32
    %169 = vector.broadcast %cst_87 : f32 to vector<8x32xf32>
    %170 = vector.extract_strided_slice %162 {offsets = [0, 0], sizes = [8, 8], strides = [1, 1]} : vector<8x32xf32> to vector<8x8xf32>
    %171 = vector.extract_strided_slice %165 {offsets = [0, 0], sizes = [16, 8], strides = [1, 1]} : vector<16x32xf32> to vector<16x8xf32>
    %172 = vector.extract_strided_slice %168 {offsets = [0, 0], sizes = [16, 8], strides = [1, 1]} : vector<16x32xf32> to vector<16x8xf32>
    %cst_88 = arith.constant dense<0.000000e+00> : vector<8x16xf32>
    %173 = tpu.matmul %170, %171, %cst_88 {dimension_numbers = #tpu.dot_dimension_numbers<[1], [1], [0], [0], [0, 0, 1, 0], [], []>} : vector<8x8xf32>, vector<16x8xf32>, vector<8x16xf32> -> vector<8x16xf32>
    %cst_89 = arith.constant dense<0xFF800000> : vector<8xf32>
    %174 = vector.multi_reduction <maximumf>, %173, %cst_89 [1] : vector<8x16xf32> to vector<8xf32>
    %175 = vector.shape_cast %174 : vector<8xf32> to vector<8x1xf32>
    %176 = vector.broadcast %175 : vector<8x1xf32> to vector<8x16xf32>
    %177 = arith.subf %173, %176 : vector<8x16xf32>
    %178 = math.exp %177 : vector<8x16xf32>
    %cst_90 = arith.constant dense<0.000000e+00> : vector<8xf32>
    %179 = vector.multi_reduction <add>, %178, %cst_90 [1] : vector<8x16xf32> to vector<8xf32>
    %180 = vector.shape_cast %179 : vector<8xf32> to vector<8x1xf32>
    %181 = tpu.reciprocal %180 {approx = true} : vector<8x1xf32> -> vector<8x1xf32>
    %182 = vector.broadcast %181 : vector<8x1xf32> to vector<8x16xf32>
    %183 = arith.mulf %178, %182 : vector<8x16xf32>
    %cst_91 = arith.constant dense<0.000000e+00> : vector<8x8xf32>
    %184 = tpu.matmul %183, %172, %cst_91 {dimension_numbers = #tpu.dot_dimension_numbers<[1], [0], [0], [1], [0, 0, 1, 1], [], []>} : vector<8x16xf32>, vector<16x8xf32>, vector<8x8xf32> -> vector<8x8xf32>
    %185 = vector.extract_strided_slice %154 {offsets = [0, 0], sizes = [8, 32], strides = [1, 1]} : vector<32x32xf32> to vector<8x32xf32>
    %cst_92 = arith.constant dense<0.000000e+00> : vector<8x32xf32>
    %186 = tpu.matmul %184, %185, %cst_92 {dimension_numbers = #tpu.dot_dimension_numbers<[1], [0], [0], [1], [0, 0, 1, 1], [], []>} : vector<8x8xf32>, vector<8x32xf32>, vector<8x32xf32> -> vector<8x32xf32>
    %187 = arith.addf %169, %186 : vector<8x32xf32>
    %188 = vector.extract_strided_slice %162 {offsets = [0, 8], sizes = [8, 8], strides = [1, 1]} : vector<8x32xf32> to vector<8x8xf32>
    %189 = vector.extract_strided_slice %165 {offsets = [0, 8], sizes = [16, 8], strides = [1, 1]} : vector<16x32xf32> to vector<16x8xf32>
    %190 = vector.extract_strided_slice %168 {offsets = [0, 8], sizes = [16, 8], strides = [1, 1]} : vector<16x32xf32> to vector<16x8xf32>
    %cst_93 = arith.constant dense<0.000000e+00> : vector<8x16xf32>
    %191 = tpu.matmul %188, %189, %cst_93 {dimension_numbers = #tpu.dot_dimension_numbers<[1], [1], [0], [0], [0, 0, 1, 0], [], []>} : vector<8x8xf32>, vector<16x8xf32>, vector<8x16xf32> -> vector<8x16xf32>
    %cst_94 = arith.constant dense<0xFF800000> : vector<8xf32>
    %192 = vector.multi_reduction <maximumf>, %191, %cst_94 [1] : vector<8x16xf32> to vector<8xf32>
    %193 = vector.shape_cast %192 : vector<8xf32> to vector<8x1xf32>
    %194 = vector.broadcast %193 : vector<8x1xf32> to vector<8x16xf32>
    %195 = arith.subf %191, %194 : vector<8x16xf32>
    %196 = math.exp %195 : vector<8x16xf32>
    %cst_95 = arith.constant dense<0.000000e+00> : vector<8xf32>
    %197 = vector.multi_reduction <add>, %196, %cst_95 [1] : vector<8x16xf32> to vector<8xf32>
    %198 = vector.shape_cast %197 : vector<8xf32> to vector<8x1xf32>
    %199 = tpu.reciprocal %198 {approx = true} : vector<8x1xf32> -> vector<8x1xf32>
    %200 = vector.broadcast %199 : vector<8x1xf32> to vector<8x16xf32>
    %201 = arith.mulf %196, %200 : vector<8x16xf32>
    %cst_96 = arith.constant dense<0.000000e+00> : vector<8x8xf32>
    %202 = tpu.matmul %201, %190, %cst_96 {dimension_numbers = #tpu.dot_dimension_numbers<[1], [0], [0], [1], [0, 0, 1, 1], [], []>} : vector<8x16xf32>, vector<16x8xf32>, vector<8x8xf32> -> vector<8x8xf32>
    %203 = vector.extract_strided_slice %154 {offsets = [8, 0], sizes = [8, 32], strides = [1, 1]} : vector<32x32xf32> to vector<8x32xf32>
    %cst_97 = arith.constant dense<0.000000e+00> : vector<8x32xf32>
    %204 = tpu.matmul %202, %203, %cst_97 {dimension_numbers = #tpu.dot_dimension_numbers<[1], [0], [0], [1], [0, 0, 1, 1], [], []>} : vector<8x8xf32>, vector<8x32xf32>, vector<8x32xf32> -> vector<8x32xf32>
    %205 = arith.addf %187, %204 : vector<8x32xf32>
    %206 = vector.extract_strided_slice %162 {offsets = [0, 16], sizes = [8, 8], strides = [1, 1]} : vector<8x32xf32> to vector<8x8xf32>
    %207 = vector.extract_strided_slice %165 {offsets = [0, 16], sizes = [16, 8], strides = [1, 1]} : vector<16x32xf32> to vector<16x8xf32>
    %208 = vector.extract_strided_slice %168 {offsets = [0, 16], sizes = [16, 8], strides = [1, 1]} : vector<16x32xf32> to vector<16x8xf32>
    %cst_98 = arith.constant dense<0.000000e+00> : vector<8x16xf32>
    %209 = tpu.matmul %206, %207, %cst_98 {dimension_numbers = #tpu.dot_dimension_numbers<[1], [1], [0], [0], [0, 0, 1, 0], [], []>} : vector<8x8xf32>, vector<16x8xf32>, vector<8x16xf32> -> vector<8x16xf32>
    %cst_99 = arith.constant dense<0xFF800000> : vector<8xf32>
    %210 = vector.multi_reduction <maximumf>, %209, %cst_99 [1] : vector<8x16xf32> to vector<8xf32>
    %211 = vector.shape_cast %210 : vector<8xf32> to vector<8x1xf32>
    %212 = vector.broadcast %211 : vector<8x1xf32> to vector<8x16xf32>
    %213 = arith.subf %209, %212 : vector<8x16xf32>
    %214 = math.exp %213 : vector<8x16xf32>
    %cst_100 = arith.constant dense<0.000000e+00> : vector<8xf32>
    %215 = vector.multi_reduction <add>, %214, %cst_100 [1] : vector<8x16xf32> to vector<8xf32>
    %216 = vector.shape_cast %215 : vector<8xf32> to vector<8x1xf32>
    %217 = tpu.reciprocal %216 {approx = true} : vector<8x1xf32> -> vector<8x1xf32>
    %218 = vector.broadcast %217 : vector<8x1xf32> to vector<8x16xf32>
    %219 = arith.mulf %214, %218 : vector<8x16xf32>
    %cst_101 = arith.constant dense<0.000000e+00> : vector<8x8xf32>
    %220 = tpu.matmul %219, %208, %cst_101 {dimension_numbers = #tpu.dot_dimension_numbers<[1], [0], [0], [1], [0, 0, 1, 1], [], []>} : vector<8x16xf32>, vector<16x8xf32>, vector<8x8xf32> -> vector<8x8xf32>
    %221 = vector.extract_strided_slice %154 {offsets = [16, 0], sizes = [8, 32], strides = [1, 1]} : vector<32x32xf32> to vector<8x32xf32>
    %cst_102 = arith.constant dense<0.000000e+00> : vector<8x32xf32>
    %222 = tpu.matmul %220, %221, %cst_102 {dimension_numbers = #tpu.dot_dimension_numbers<[1], [0], [0], [1], [0, 0, 1, 1], [], []>} : vector<8x8xf32>, vector<8x32xf32>, vector<8x32xf32> -> vector<8x32xf32>
    %223 = arith.addf %205, %222 : vector<8x32xf32>
    %224 = vector.extract_strided_slice %162 {offsets = [0, 24], sizes = [8, 8], strides = [1, 1]} : vector<8x32xf32> to vector<8x8xf32>
    %225 = vector.extract_strided_slice %165 {offsets = [0, 24], sizes = [16, 8], strides = [1, 1]} : vector<16x32xf32> to vector<16x8xf32>
    %226 = vector.extract_strided_slice %168 {offsets = [0, 24], sizes = [16, 8], strides = [1, 1]} : vector<16x32xf32> to vector<16x8xf32>
    %cst_103 = arith.constant dense<0.000000e+00> : vector<8x16xf32>
    %227 = tpu.matmul %224, %225, %cst_103 {dimension_numbers = #tpu.dot_dimension_numbers<[1], [1], [0], [0], [0, 0, 1, 0], [], []>} : vector<8x8xf32>, vector<16x8xf32>, vector<8x16xf32> -> vector<8x16xf32>
    %cst_104 = arith.constant dense<0xFF800000> : vector<8xf32>
    %228 = vector.multi_reduction <maximumf>, %227, %cst_104 [1] : vector<8x16xf32> to vector<8xf32>
    %229 = vector.shape_cast %228 : vector<8xf32> to vector<8x1xf32>
    %230 = vector.broadcast %229 : vector<8x1xf32> to vector<8x16xf32>
    %231 = arith.subf %227, %230 : vector<8x16xf32>
    %232 = math.exp %231 : vector<8x16xf32>
    %cst_105 = arith.constant dense<0.000000e+00> : vector<8xf32>
    %233 = vector.multi_reduction <add>, %232, %cst_105 [1] : vector<8x16xf32> to vector<8xf32>
    %234 = vector.shape_cast %233 : vector<8xf32> to vector<8x1xf32>
    %235 = tpu.reciprocal %234 {approx = true} : vector<8x1xf32> -> vector<8x1xf32>
    %236 = vector.broadcast %235 : vector<8x1xf32> to vector<8x16xf32>
    %237 = arith.mulf %232, %236 : vector<8x16xf32>
    %cst_106 = arith.constant dense<0.000000e+00> : vector<8x8xf32>
    %238 = tpu.matmul %237, %226, %cst_106 {dimension_numbers = #tpu.dot_dimension_numbers<[1], [0], [0], [1], [0, 0, 1, 1], [], []>} : vector<8x16xf32>, vector<16x8xf32>, vector<8x8xf32> -> vector<8x8xf32>
    %239 = vector.extract_strided_slice %154 {offsets = [24, 0], sizes = [8, 32], strides = [1, 1]} : vector<32x32xf32> to vector<8x32xf32>
    %cst_107 = arith.constant dense<0.000000e+00> : vector<8x32xf32>
    %240 = tpu.matmul %238, %239, %cst_107 {dimension_numbers = #tpu.dot_dimension_numbers<[1], [0], [0], [1], [0, 0, 1, 1], [], []>} : vector<8x8xf32>, vector<8x32xf32>, vector<8x32xf32> -> vector<8x32xf32>
    %241 = arith.addf %223, %240 : vector<8x32xf32>
    %242 = vector.broadcast %155 : vector<1x32xf32> to vector<8x32xf32>
    %243 = arith.addf %241, %242 : vector<8x32xf32>
    %244 = arith.addf %147, %243 : vector<8x32xf32>
    %cst_108 = arith.constant dense<0.000000e+00> : vector<8xf32>
    %245 = vector.multi_reduction <add>, %244, %cst_108 [1] : vector<8x32xf32> to vector<8xf32>
    %246 = vector.shape_cast %245 : vector<8xf32> to vector<8x1xf32>
    %cst_109 = arith.constant 3.200000e+01 : f32
    %247 = vector.broadcast %cst_109 : f32 to vector<8x1xf32>
    %248 = arith.divf %246, %247 : vector<8x1xf32>
    %249 = vector.broadcast %248 : vector<8x1xf32> to vector<8x32xf32>
    %250 = arith.subf %244, %249 : vector<8x32xf32>
    %251 = arith.mulf %250, %250 : vector<8x32xf32>
    %cst_110 = arith.constant dense<0.000000e+00> : vector<8xf32>
    %252 = vector.multi_reduction <add>, %251, %cst_110 [1] : vector<8x32xf32> to vector<8xf32>
    %253 = vector.shape_cast %252 : vector<8xf32> to vector<8x1xf32>
    %cst_111 = arith.constant 3.200000e+01 : f32
    %254 = vector.broadcast %cst_111 : f32 to vector<8x1xf32>
    %255 = arith.divf %253, %254 : vector<8x1xf32>
    %256 = vector.broadcast %248 : vector<8x1xf32> to vector<8x32xf32>
    %257 = arith.subf %244, %256 : vector<8x32xf32>
    %cst_112 = arith.constant 9.99999974E-6 : f32
    %258 = vector.broadcast %cst_112 : f32 to vector<8x1xf32>
    %259 = arith.addf %255, %258 : vector<8x1xf32>
    %260 = math.rsqrt %259 : vector<8x1xf32>
    %261 = vector.broadcast %260 : vector<8x1xf32> to vector<8x32xf32>
    %262 = arith.mulf %257, %261 : vector<8x32xf32>
    %263 = vector.broadcast %156 : vector<1x32xf32> to vector<8x32xf32>
    %264 = arith.mulf %262, %263 : vector<8x32xf32>
    %265 = vector.broadcast %157 : vector<1x32xf32> to vector<8x32xf32>
    %266 = arith.addf %264, %265 : vector<8x32xf32>
    %267 = arith.addf %147, %266 : vector<8x32xf32>
    %c0_113 = arith.constant 0 : index
    %c0_114 = arith.constant 0 : index
    %268 = vector.load %arg25[%c0_113, %c0_114] : memref<1x32xf32, #tpu.memory_space<vmem>>, vector<1x32xf32>
    %c0_115 = arith.constant 0 : index
    %c0_116 = arith.constant 0 : index
    %269 = vector.load %arg26[%c0_115, %c0_116] : memref<1x32xf32, #tpu.memory_space<vmem>>, vector<1x32xf32>
    %cst_117 = arith.constant dense<0.000000e+00> : vector<8xf32>
    %270 = vector.multi_reduction <add>, %267, %cst_117 [1] : vector<8x32xf32> to vector<8xf32>
    %271 = vector.shape_cast %270 : vector<8xf32> to vector<8x1xf32>
    %cst_118 = arith.constant 3.200000e+01 : f32
    %272 = vector.broadcast %cst_118 : f32 to vector<8x1xf32>
    %273 = arith.divf %271, %272 : vector<8x1xf32>
    %274 = vector.broadcast %273 : vector<8x1xf32> to vector<8x32xf32>
    %275 = arith.subf %267, %274 : vector<8x32xf32>
    %276 = arith.mulf %275, %275 : vector<8x32xf32>
    %cst_119 = arith.constant dense<0.000000e+00> : vector<8xf32>
    %277 = vector.multi_reduction <add>, %276, %cst_119 [1] : vector<8x32xf32> to vector<8xf32>
    %278 = vector.shape_cast %277 : vector<8xf32> to vector<8x1xf32>
    %cst_120 = arith.constant 3.200000e+01 : f32
    %279 = vector.broadcast %cst_120 : f32 to vector<8x1xf32>
    %280 = arith.divf %278, %279 : vector<8x1xf32>
    %281 = vector.broadcast %273 : vector<8x1xf32> to vector<8x32xf32>
    %282 = arith.subf %267, %281 : vector<8x32xf32>
    %cst_121 = arith.constant 9.99999974E-6 : f32
    %283 = vector.broadcast %cst_121 : f32 to vector<8x1xf32>
    %284 = arith.addf %280, %283 : vector<8x1xf32>
    %285 = math.rsqrt %284 : vector<8x1xf32>
    %286 = vector.broadcast %285 : vector<8x1xf32> to vector<8x32xf32>
    %287 = arith.mulf %282, %286 : vector<8x32xf32>
    %288 = vector.broadcast %268 : vector<1x32xf32> to vector<8x32xf32>
    %289 = arith.mulf %287, %288 : vector<8x32xf32>
    %290 = vector.broadcast %269 : vector<1x32xf32> to vector<8x32xf32>
    %291 = arith.addf %289, %290 : vector<8x32xf32>
    %c0_122 = arith.constant 0 : index
    %c0_123 = arith.constant 0 : index
    %292 = vector.load %arg27[%c0_122, %c0_123] : memref<32x64xf32, #tpu.memory_space<vmem>>, vector<32x64xf32>
    %cst_124 = arith.constant dense<0.000000e+00> : vector<8x64xf32>
    %293 = tpu.matmul %291, %292, %cst_124 {dimension_numbers = #tpu.dot_dimension_numbers<[1], [0], [0], [1], [0, 0, 1, 1], [], []>} : vector<8x32xf32>, vector<32x64xf32>, vector<8x64xf32> -> vector<8x64xf32>
    %c0_125 = arith.constant 0 : index
    %c0_126 = arith.constant 0 : index
    %294 = vector.load %arg28[%c0_125, %c0_126] : memref<1x64xf32, #tpu.memory_space<vmem>>, vector<1x64xf32>
    %295 = vector.broadcast %294 : vector<1x64xf32> to vector<8x64xf32>
    %296 = arith.addf %293, %295 : vector<8x64xf32>
    %cst_127 = arith.constant 0.000000e+00 : f32
    %297 = vector.broadcast %cst_127 : f32 to vector<8x64xf32>
    %298 = arith.maximumf %296, %297 : vector<8x64xf32>
    %c0_128 = arith.constant 0 : index
    %c0_129 = arith.constant 0 : index
    %299 = vector.load %arg29[%c0_128, %c0_129] : memref<64x32xf32, #tpu.memory_space<vmem>>, vector<64x32xf32>
    %cst_130 = arith.constant dense<0.000000e+00> : vector<8x32xf32>
    %300 = tpu.matmul %298, %299, %cst_130 {dimension_numbers = #tpu.dot_dimension_numbers<[1], [0], [0], [1], [0, 0, 1, 1], [], []>} : vector<8x64xf32>, vector<64x32xf32>, vector<8x32xf32> -> vector<8x32xf32>
    %c0_131 = arith.constant 0 : index
    %c0_132 = arith.constant 0 : index
    %301 = vector.load %arg30[%c0_131, %c0_132] : memref<1x32xf32, #tpu.memory_space<vmem>>, vector<1x32xf32>
    %302 = vector.broadcast %301 : vector<1x32xf32> to vector<8x32xf32>
    %303 = arith.addf %300, %302 : vector<8x32xf32>
    %304 = arith.addf %291, %303 : vector<8x32xf32>
    %c0_133 = arith.constant 0 : index
    %c0_134 = arith.constant 0 : index
    %305 = vector.load %arg31[%c0_133, %c0_134] : memref<1x32xf32, #tpu.memory_space<vmem>>, vector<1x32xf32>
    %c0_135 = arith.constant 0 : index
    %c0_136 = arith.constant 0 : index
    %306 = vector.load %arg32[%c0_135, %c0_136] : memref<1x32xf32, #tpu.memory_space<vmem>>, vector<1x32xf32>
    %cst_137 = arith.constant dense<0.000000e+00> : vector<8xf32>
    %307 = vector.multi_reduction <add>, %304, %cst_137 [1] : vector<8x32xf32> to vector<8xf32>
    %308 = vector.shape_cast %307 : vector<8xf32> to vector<8x1xf32>
    %cst_138 = arith.constant 3.200000e+01 : f32
    %309 = vector.broadcast %cst_138 : f32 to vector<8x1xf32>
    %310 = arith.divf %308, %309 : vector<8x1xf32>
    %311 = vector.broadcast %310 : vector<8x1xf32> to vector<8x32xf32>
    %312 = arith.subf %304, %311 : vector<8x32xf32>
    %313 = arith.mulf %312, %312 : vector<8x32xf32>
    %cst_139 = arith.constant dense<0.000000e+00> : vector<8xf32>
    %314 = vector.multi_reduction <add>, %313, %cst_139 [1] : vector<8x32xf32> to vector<8xf32>
    %315 = vector.shape_cast %314 : vector<8xf32> to vector<8x1xf32>
    %cst_140 = arith.constant 3.200000e+01 : f32
    %316 = vector.broadcast %cst_140 : f32 to vector<8x1xf32>
    %317 = arith.divf %315, %316 : vector<8x1xf32>
    %318 = vector.broadcast %310 : vector<8x1xf32> to vector<8x32xf32>
    %319 = arith.subf %304, %318 : vector<8x32xf32>
    %cst_141 = arith.constant 9.99999974E-6 : f32
    %320 = vector.broadcast %cst_141 : f32 to vector<8x1xf32>
    %321 = arith.addf %317, %320 : vector<8x1xf32>
    %322 = math.rsqrt %321 : vector<8x1xf32>
    %323 = vector.broadcast %322 : vector<8x1xf32> to vector<8x32xf32>
    %324 = arith.mulf %319, %323 : vector<8x32xf32>
    %325 = vector.broadcast %305 : vector<1x32xf32> to vector<8x32xf32>
    %326 = arith.mulf %324, %325 : vector<8x32xf32>
    %327 = vector.broadcast %306 : vector<1x32xf32> to vector<8x32xf32>
    %328 = arith.addf %326, %327 : vector<8x32xf32>
    %c0_142 = arith.constant 0 : index
    %c0_143 = arith.constant 0 : index
    %c0_144 = arith.constant 0 : index
    %329 = vector.load %arg33[%c0_142, %c0_143, %c0_144] : memref<1x8x32xf32, #tpu.memory_space<vmem>>, vector<1x8x32xf32>
    %330 = vector.shape_cast %329 : vector<1x8x32xf32> to vector<8x32xf32>
    %331 = vector.shape_cast %328 : vector<8x32xf32> to vector<1x8x32xf32>
    tpu.vector_store %arg33[%c0_142, %c0_143, %c0_144], %331 {strides = array<i32>} : memref<1x8x32xf32, #tpu.memory_space<vmem>>, vector<1x8x32xf32>,
    return
  }
  func.func @transform_0(%arg0: i32) -> (i32, i32, i32) {
    %c0_i32 = arith.constant 0 : i32
    %c0_i32_0 = arith.constant 0 : i32
    %c0_i32_1 = arith.constant 0 : i32
    return %arg0, %c0_i32, %c0_i32_0 : i32, i32, i32
  }
  func.func @transform_1(%arg0: i32) -> (i32, i32, i32) {
    %c0_i32 = arith.constant 0 : i32
    %c0_i32_0 = arith.constant 0 : i32
    %c0_i32_1 = arith.constant 0 : i32
    return %arg0, %c0_i32, %c0_i32_0 : i32, i32, i32
  }
  func.func @transform_2(%arg0: i32) -> (i32, i32) {
    %c0_i32 = arith.constant 0 : i32
    %c0_i32_0 = arith.constant 0 : i32
    %c0_i32_1 = arith.constant 0 : i32
    return %c0_i32, %c0_i32_0 : i32, i32
  }
  func.func @transform_3(%arg0: i32) -> (i32, i32) {
    %c0_i32 = arith.constant 0 : i32
    %c0_i32_0 = arith.constant 0 : i32
    %c0_i32_1 = arith.constant 0 : i32
    return %c0_i32, %c0_i32_0 : i32, i32
  }
  func.func @transform_4(%arg0: i32) -> (i32, i32) {
    %c0_i32 = arith.constant 0 : i32
    %c0_i32_0 = arith.constant 0 : i32
    %c0_i32_1 = arith.constant 0 : i32
    return %c0_i32, %c0_i32_0 : i32, i32
  }
  func.func @transform_5(%arg0: i32) -> (i32, i32) {
    %c0_i32 = arith.constant 0 : i32
    %c0_i32_0 = arith.constant 0 : i32
    %c0_i32_1 = arith.constant 0 : i32
    return %c0_i32, %c0_i32_0 : i32, i32
  }
  func.func @transform_6(%arg0: i32) -> (i32, i32) {
    %c0_i32 = arith.constant 0 : i32
    %c0_i32_0 = arith.constant 0 : i32
    %c0_i32_1 = arith.constant 0 : i32
    return %c0_i32, %c0_i32_0 : i32, i32
  }
  func.func @transform_7(%arg0: i32) -> (i32, i32) {
    %c0_i32 = arith.constant 0 : i32
    %c0_i32_0 = arith.constant 0 : i32
    %c0_i32_1 = arith.constant 0 : i32
    return %c0_i32, %c0_i32_0 : i32, i32
  }
  func.func @transform_8(%arg0: i32) -> (i32, i32) {
    %c0_i32 = arith.constant 0 : i32
    %c0_i32_0 = arith.constant 0 : i32
    %c0_i32_1 = arith.constant 0 : i32
    return %c0_i32, %c0_i32_0 : i32, i32
  }
  func.func @transform_9(%arg0: i32) -> (i32, i32) {
    %c0_i32 = arith.constant 0 : i32
    %c0_i32_0 = arith.constant 0 : i32
    %c0_i32_1 = arith.constant 0 : i32
    return %c0_i32, %c0_i32_0 : i32, i32
  }
  func.func @transform_10(%arg0: i32) -> (i32, i32) {
    %c0_i32 = arith.constant 0 : i32
    %c0_i32_0 = arith.constant 0 : i32
    %c0_i32_1 = arith.constant 0 : i32
    return %c0_i32, %c0_i32_0 : i32, i32
  }
  func.func @transform_11(%arg0: i32) -> (i32, i32) {
    %c0_i32 = arith.constant 0 : i32
    %c0_i32_0 = arith.constant 0 : i32
    %c0_i32_1 = arith.constant 0 : i32
    return %c0_i32, %c0_i32_0 : i32, i32
  }
  func.func @transform_12(%arg0: i32) -> (i32, i32) {
    %c0_i32 = arith.constant 0 : i32
    %c0_i32_0 = arith.constant 0 : i32
    %c0_i32_1 = arith.constant 0 : i32
    return %c0_i32, %c0_i32_0 : i32, i32
  }
  func.func @transform_13(%arg0: i32) -> (i32, i32) {
    %c0_i32 = arith.constant 0 : i32
    %c0_i32_0 = arith.constant 0 : i32
    %c0_i32_1 = arith.constant 0 : i32
    return %c0_i32, %c0_i32_0 : i32, i32
  }
  func.func @transform_14(%arg0: i32) -> (i32, i32) {
    %c0_i32 = arith.constant 0 : i32
    %c0_i32_0 = arith.constant 0 : i32
    %c0_i32_1 = arith.constant 0 : i32
    return %c0_i32, %c0_i32_0 : i32, i32
  }
  func.func @transform_15(%arg0: i32) -> (i32, i32) {
    %c0_i32 = arith.constant 0 : i32
    %c0_i32_0 = arith.constant 0 : i32
    %c0_i32_1 = arith.constant 0 : i32
    return %c0_i32, %c0_i32_0 : i32, i32
  }
  func.func @transform_16(%arg0: i32) -> (i32, i32) {
    %c0_i32 = arith.constant 0 : i32
    %c0_i32_0 = arith.constant 0 : i32
    %c0_i32_1 = arith.constant 0 : i32
    return %c0_i32, %c0_i32_0 : i32, i32
  }
  func.func @transform_17(%arg0: i32) -> (i32, i32) {
    %c0_i32 = arith.constant 0 : i32
    %c0_i32_0 = arith.constant 0 : i32
    %c0_i32_1 = arith.constant 0 : i32
    return %c0_i32, %c0_i32_0 : i32, i32
  }
  func.func @transform_18(%arg0: i32) -> (i32, i32) {
    %c0_i32 = arith.constant 0 : i32
    %c0_i32_0 = arith.constant 0 : i32
    %c0_i32_1 = arith.constant 0 : i32
    return %c0_i32, %c0_i32_0 : i32, i32
  }
  func.func @transform_19(%arg0: i32) -> (i32, i32) {
    %c0_i32 = arith.constant 0 : i32
    %c0_i32_0 = arith.constant 0 : i32
    %c0_i32_1 = arith.constant 0 : i32
    return %c0_i32, %c0_i32_0 : i32, i32
  }
  func.func @transform_20(%arg0: i32) -> (i32, i32) {
    %c0_i32 = arith.constant 0 : i32
    %c0_i32_0 = arith.constant 0 : i32
    %c0_i32_1 = arith.constant 0 : i32
    return %c0_i32, %c0_i32_0 : i32, i32
  }
  func.func @transform_21(%arg0: i32) -> (i32, i32) {
    %c0_i32 = arith.constant 0 : i32
    %c0_i32_0 = arith.constant 0 : i32
    %c0_i32_1 = arith.constant 0 : i32
    return %c0_i32, %c0_i32_0 : i32, i32
  }
  func.func @transform_22(%arg0: i32) -> (i32, i32) {
    %c0_i32 = arith.constant 0 : i32
    %c0_i32_0 = arith.constant 0 : i32
    %c0_i32_1 = arith.constant 0 : i32
    return %c0_i32, %c0_i32_0 : i32, i32
  }
  func.func @transform_23(%arg0: i32) -> (i32, i32) {
    %c0_i32 = arith.constant 0 : i32
    %c0_i32_0 = arith.constant 0 : i32
    %c0_i32_1 = arith.constant 0 : i32
    return %c0_i32, %c0_i32_0 : i32, i32
  }
  func.func @transform_24(%arg0: i32) -> (i32, i32) {
    %c0_i32 = arith.constant 0 : i32
    %c0_i32_0 = arith.constant 0 : i32
    %c0_i32_1 = arith.constant 0 : i32
    return %c0_i32, %c0_i32_0 : i32, i32
  }
  func.func @transform_25(%arg0: i32) -> (i32, i32) {
    %c0_i32 = arith.constant 0 : i32
    %c0_i32_0 = arith.constant 0 : i32
    %c0_i32_1 = arith.constant 0 : i32
    return %c0_i32, %c0_i32_0 : i32, i32
  }
  func.func @transform_26(%arg0: i32) -> (i32, i32) {
    %c0_i32 = arith.constant 0 : i32
    %c0_i32_0 = arith.constant 0 : i32
    %c0_i32_1 = arith.constant 0 : i32
    return %c0_i32, %c0_i32_0 : i32, i32
  }
  func.func @transform_27(%arg0: i32) -> (i32, i32) {
    %c0_i32 = arith.constant 0 : i32
    %c0_i32_0 = arith.constant 0 : i32
    %c0_i32_1 = arith.constant 0 : i32
    return %c0_i32, %c0_i32_0 : i32, i32
  }
  func.func @transform_28(%arg0: i32) -> (i32, i32) {
    %c0_i32 = arith.constant 0 : i32
    %c0_i32_0 = arith.constant 0 : i32
    %c0_i32_1 = arith.constant 0 : i32
    return %c0_i32, %c0_i32_0 : i32, i32
  }
  func.func @transform_29(%arg0: i32) -> (i32, i32) {
    %c0_i32 = arith.constant 0 : i32
    %c0_i32_0 = arith.constant 0 : i32
    %c0_i32_1 = arith.constant 0 : i32
    return %c0_i32, %c0_i32_0 : i32, i32
  }
  func.func @transform_30(%arg0: i32) -> (i32, i32) {
    %c0_i32 = arith.constant 0 : i32
    %c0_i32_0 = arith.constant 0 : i32
    %c0_i32_1 = arith.constant 0 : i32
    return %c0_i32, %c0_i32_0 : i32, i32
  }
  func.func @transform_31(%arg0: i32) -> (i32, i32) {
    %c0_i32 = arith.constant 0 : i32
    %c0_i32_0 = arith.constant 0 : i32
    %c0_i32_1 = arith.constant 0 : i32
    return %c0_i32, %c0_i32_0 : i32, i32
  }
  func.func @transform_32(%arg0: i32) -> (i32, i32, i32) {
    %c0_i32 = arith.constant 0 : i32
    %c0_i32_0 = arith.constant 0 : i32
    %c0_i32_1 = arith.constant 0 : i32
    return %arg0, %c0_i32, %c0_i32_0 : i32, i32, i32
  }
}

</mosaic_0001>

<llo_original>
// kernel: tpu_custom_call.1
$region0: #{tpu_custom_call.1}
  #allocation0 [shape = 'u32[]', space=smem, size = 0x4, offset = 0x4, fixed_abs, tag = 'smem constant byte address 0x4 - core index']
  #allocation1 [shape = 'u32[144,128]{1,0:T(1,128)}', space=vmem, size = 0x12000, scoped, tag = 'internal scratch']
  %s0 = inlined_call_operand.smem [shape: u32[33], index: -1, kind: input, shape index: {}]
  %s1 = sld [smem:[%s0]]
  %s2 = scalar_lea.smem %s0, 1
  %s3 = sld [smem:[%s2]]
  %s4 = scalar_lea.smem %s0, 2
  %s5 = sld [smem:[%s4]]
  %s6 = scalar_lea.smem %s0, 3
  %s7 = sld [smem:[%s6]]
  %s8 = scalar_lea.smem %s0, 4
  %s9 = sld [smem:[%s8]]
  %s10 = scalar_lea.smem %s0, 5
  %s11 = sld [smem:[%s10]]
  %s12 = scalar_lea.smem %s0, 6
  %s13 = sld [smem:[%s12]]
  %s14 = scalar_lea.smem %s0, 7
  %s15 = sld [smem:[%s14]]
  %s16 = scalar_lea.smem %s0, 8
  %s17 = sld [smem:[%s16]]
  %s18 = scalar_lea.smem %s0, 9
  %s19 = sld [smem:[%s18]]
  %s20 = scalar_lea.smem %s0, 10
  %s21 = sld [smem:[%s20]]
  %s22 = scalar_lea.smem %s0, 11
  %s23 = sld [smem:[%s22]]
  %s24 = scalar_lea.smem %s0, 12
  %s25 = sld [smem:[%s24]]
  %s26 = scalar_lea.smem %s0, 13
  %s27 = sld [smem:[%s26]]
  %s28 = scalar_lea.smem %s0, 14
  %s29 = sld [smem:[%s28]]
  %s30 = scalar_lea.smem %s0, 15
  %s31 = sld [smem:[%s30]]
  %s32 = scalar_lea.smem %s0, 16
  %s33 = sld [smem:[%s32]]
  %s34 = scalar_lea.smem %s0, 17
  %s35 = sld [smem:[%s34]]
  %s36 = scalar_lea.smem %s0, 18
  %s37 = sld [smem:[%s36]]
  %s38 = scalar_lea.smem %s0, 19
  %s39 = sld [smem:[%s38]]
  %s40 = scalar_lea.smem %s0, 20
  %s41 = sld [smem:[%s40]]
  %s42 = scalar_lea.smem %s0, 21
  %s43 = sld [smem:[%s42]]
  %s44 = scalar_lea.smem %s0, 22
  %s45 = sld [smem:[%s44]]
  %s46 = scalar_lea.smem %s0, 23
  %s47 = sld [smem:[%s46]]
  %s48 = scalar_lea.smem %s0, 24
  %s49 = sld [smem:[%s48]]
  %s50 = scalar_lea.smem %s0, 25
  %s51 = sld [smem:[%s50]]
  %s52 = scalar_lea.smem %s0, 26
  %s53 = sld [smem:[%s52]]
  %s54 = scalar_lea.smem %s0, 27
  %s55 = sld [smem:[%s54]]
  %s56 = scalar_lea.smem %s0, 28
  %s57 = sld [smem:[%s56]]
  %s58 = scalar_lea.smem %s0, 29
  %s59 = sld [smem:[%s58]]
  %s60 = scalar_lea.smem %s0, 30
  %s61 = sld [smem:[%s60]]
  %s62 = scalar_lea.smem %s0, 31
  %s63 = sld [smem:[%s62]]
  %s64 = scalar_lea.smem %s0, 32
  %s65 = sld [smem:[%s64]]
  %s66 = sld [smem:[#allocation0]]
  $region229: #{tpu_custom_call.1} parent=0
    _
  %s68 = ssub.s32 1, %s66
  %s69 = scalar_select 0, %s68, %s66
  $region1: #{tpu_custom_call.1} parent=0
    #allocation2 [shape = 'u8[8192]{0}', space=vmem, size = 0x2000, scoped, tag = 'input window, operand 0']
    #allocation3 [shape = 's32[2]{0}', space=sflag, size = 0x8, scoped, tag = 'scoped memory for tpu_custom_call.1']
    #allocation4 [shape = 's32[2]{0}', space=sflag, size = 0x8, scoped, tag = 'scoped memory for tpu_custom_call.1']
    #allocation5 [shape = 'u8[512]{0}', space=vmem, size = 0x400, scoped, tag = 'input window, operand 3, single buffered']
    #allocation6 [shape = 's32[1]{0}', space=sflag, size = 0x4, scoped, tag = 'scoped memory for tpu_custom_call.1']
    #allocation7 [shape = 'u8[512]{0}', space=vmem, size = 0x400, scoped, tag = 'input window, operand 5, single buffered']
    #allocation8 [shape = 'u8[16384]{0}', space=vmem, size = 0x4000, scoped, tag = 'input window, operand 6, single buffered']
    #allocation9 [shape = 's32[1]{0}', space=sflag, size = 0x4, scoped, tag = 'scoped memory for tpu_custom_call.1']
    #allocation10 [shape = 'u8[512]{0}', space=vmem, size = 0x400, scoped, tag = 'input window, operand 7, single buffered']
    #allocation11 [shape = 'u8[16384]{0}', space=vmem, size = 0x4000, scoped, tag = 'input window, operand 8, single buffered']
    #allocation12 [shape = 's32[1]{0}', space=sflag, size = 0x4, scoped, tag = 'scoped memory for tpu_custom_call.1']
    #allocation13 [shape = 'u8[512]{0}', space=vmem, size = 0x400, scoped, tag = 'input window, operand 9, single buffered']
    #allocation14 [shape = 'u8[512]{0}', space=vmem, size = 0x400, scoped, tag = 'input window, operand 10, single buffered']
    #allocation15 [shape = 's32[1]{0}', space=sflag, size = 0x4, scoped, tag = 'scoped memory for tpu_custom_call.1']
    #allocation16 [shape = 'u8[512]{0}', space=vmem, size = 0x400, scoped, tag = 'input window, operand 11, single buffered']
    #allocation17 [shape = 'u8[512]{0}', space=vmem, size = 0x400, scoped, tag = 'input window, operand 12, single buffered']
    #allocation18 [shape = 's32[1]{0}', space=sflag, size = 0x4, scoped, tag = 'scoped memory for tpu_custom_call.1']
    #allocation19 [shape = 'u8[512]{0}', space=vmem, size = 0x400, scoped, tag = 'input window, operand 13, single buffered']
    #allocation20 [shape = 'u8[16384]{0}', space=vmem, size = 0x4000, scoped, tag = 'input window, operand 14, single buffered']
    #allocation21 [shape = 's32[1]{0}', space=sflag, size = 0x4, scoped, tag = 'scoped memory for tpu_custom_call.1']
    #allocation22 [shape = 'u8[512]{0}', space=vmem, size = 0x400, scoped, tag = 'input window, operand 15, single buffered']
    #allocation23 [shape = 'u8[16384]{0}', space=vmem, size = 0x4000, scoped, tag = 'input window, operand 16, single buffered']
    #allocation24 [shape = 's32[1]{0}', space=sflag, size = 0x4, scoped, tag = 'scoped memory for tpu_custom_call.1']
    #allocation25 [shape = 'u8[512]{0}', space=vmem, size = 0x400, scoped, tag = 'input window, operand 17, single buffered']
    #allocation26 [shape = 'u8[16384]{0}', space=vmem, size = 0x4000, scoped, tag = 'input window, operand 20, single buffered']
    #allocation27 [shape = 's32[1]{0}', space=sflag, size = 0x4, scoped, tag = 'scoped memory for tpu_custom_call.1']
    #allocation28 [shape = 'u8[16384]{0}', space=vmem, size = 0x4000, scoped, tag = 'input window, operand 26, single buffered']
    #allocation29 [shape = 'u8[8192]{0}', space=vmem, size = 0x2000, scoped, tag = 'output window, operand 0']
    %70 = vsyncpa [#allocation3], 0
    %s71 = scalar_lea.sflag [#allocation3], 1
    %72 = vsyncpa %s71, 0
    %73 = vsyncpa [#allocation6], 0
    %74 = vsyncpa [#allocation9], 0
    %75 = vsyncpa [#allocation12], 0
    %76 = vsyncpa [#allocation15], 0
    %77 = vsyncpa [#allocation18], 0
    %78 = vsyncpa [#allocation21], 0
    %79 = vsyncpa [#allocation24], 0
    %80 = vsyncpa [#allocation27], 0
    %81 = vsyncpa [#allocation4], 0
    %s82 = scalar_lea.sflag [#allocation4], 1
    %83 = vsyncpa %s82, 0
    loop: start=0, step=1, limit=4
    $region2: #{tpu_custom_call.1} parent=1 // loop_pre_header
      _
    $region3: #{tpu_custom_call.1} parent=1 // loop_header
      %s85 = sphi 0, %s89
      %p86 = scmp.ge.s32.totalorder %s85, 4
      %s95 = sphi 0, %s97
      %s98 = sphi 0, %s95
      %s99 = sphi 0, %s98
      %s115 = sphi 0, %s99
      %s121 = sphi 0, %s123
      %s124 = sphi 0, %s121
      %s125 = sphi 0, %s124
      %s141 = sphi 0, %s125
      %s145 = sphi 0, %s145
      %s147 = sphi 0, %s145
      %s148 = sphi 0, %s147
      %s162 = sphi 0, %s148
      %s166 = sphi 0, %s166
      %s168 = sphi 0, %s166
      %s169 = sphi 0, %s168
      %s183 = sphi 0, %s169
      %s187 = sphi 0, %s187
      %s189 = sphi 0, %s187
      %s190 = sphi 0, %s189
      %s204 = sphi 0, %s190
      %s208 = sphi 0, %s208
      %s210 = sphi 0, %s208
      %s211 = sphi 0, %s210
      %s225 = sphi 0, %s211
      %s229 = sphi 0, %s229
      %s231 = sphi 0, %s229
      %s232 = sphi 0, %s231
      %s246 = sphi 0, %s232
      %s250 = sphi 0, %s250
      %s252 = sphi 0, %s250
      %s253 = sphi 0, %s252
      %s267 = sphi 0, %s253
      %s271 = sphi 0, %s271
      %s273 = sphi 0, %s271
      %s274 = sphi 0, %s273
      %s288 = sphi 0, %s274
      %s292 = sphi 0, %s292
      %s294 = sphi 0, %s292
      %s295 = sphi 0, %s294
      %s309 = sphi 0, %s295
      %s313 = sphi 0, %s313
      %s315 = sphi 0, %s313
      %s316 = sphi 0, %s315
      %s330 = sphi 0, %s316
      %s334 = sphi 0, %s334
      %s336 = sphi 0, %s334
      %s337 = sphi 0, %s336
      %s351 = sphi 0, %s337
      %s355 = sphi 0, %s355
      %s357 = sphi 0, %s355
      %s358 = sphi 0, %s357
      %s372 = sphi 0, %s358
      %s376 = sphi 0, %s376
      %s378 = sphi 0, %s376
      %s379 = sphi 0, %s378
      %s393 = sphi 0, %s379
      %s397 = sphi 0, %s397
      %s399 = sphi 0, %s397
      %s400 = sphi 0, %s399
      %s414 = sphi 0, %s400
      %s418 = sphi 0, %s418
      %s420 = sphi 0, %s418
      %s421 = sphi 0, %s420
      %s435 = sphi 0, %s421
      %s439 = sphi 0, %s439
      %s441 = sphi 0, %s439
      %s442 = sphi 0, %s441
      %s456 = sphi 0, %s442
      %s460 = sphi 0, %s460
      %s462 = sphi 0, %s460
      %s463 = sphi 0, %s462
      %s477 = sphi 0, %s463
      %s481 = sphi 0, %s481
      %s483 = sphi 0, %s481
      %s484 = sphi 0, %s483
      %s498 = sphi 0, %s484
      %s502 = sphi 0, %s502
      %s504 = sphi 0, %s502
      %s505 = sphi 0, %s504
      %s519 = sphi 0, %s505
      %s523 = sphi 0, %s523
      %s525 = sphi 0, %s523
      %s526 = sphi 0, %s525
      %s540 = sphi 0, %s526
      %s544 = sphi 0, %s544
      %s546 = sphi 0, %s544
      %s547 = sphi 0, %s546
      %s561 = sphi 0, %s547
      %s565 = sphi 0, %s565
      %s567 = sphi 0, %s565
      %s568 = sphi 0, %s567
      %s582 = sphi 0, %s568
      %s586 = sphi 0, %s586
      %s588 = sphi 0, %s586
      %s589 = sphi 0, %s588
      %s603 = sphi 0, %s589
      %s607 = sphi 0, %s607
      %s609 = sphi 0, %s607
      %s610 = sphi 0, %s609
      %s624 = sphi 0, %s610
      %s628 = sphi 0, %s628
      %s630 = sphi 0, %s628
      %s631 = sphi 0, %s630
      %s645 = sphi 0, %s631
      %s649 = sphi 0, %s649
      %s651 = sphi 0, %s649
      %s652 = sphi 0, %s651
      %s666 = sphi 0, %s652
      %s670 = sphi 0, %s670
      %s672 = sphi 0, %s670
      %s673 = sphi 0, %s672
      %s687 = sphi 0, %s673
      %s691 = sphi 0, %s691
      %s693 = sphi 0, %s691
      %s694 = sphi 0, %s693
      %s708 = sphi 0, %s694
      %s712 = sphi 0, %s712
      %s714 = sphi 0, %s712
      %s715 = sphi 0, %s714
      %s729 = sphi 0, %s715
      %s733 = sphi 0, %s733
      %s735 = sphi 0, %s733
      %s736 = sphi 0, %s735
      %s750 = sphi 0, %s736
      %s754 = sphi 0, %s754
      %s756 = sphi 0, %s754
      %s757 = sphi 0, %s756
      %s771 = sphi 0, %s757
      %s777 = sphi 0, %s779
      %s780 = sphi 0, %s777
      %s781 = sphi 0, %s780
      %s797 = sphi 0, %s781
    $region4: #{tpu_custom_call.1} parent=1 // loop_header_branch
      %88 = sbr.rel (%p86) target = $region8
    $region5: #{tpu_custom_call.1} parent=1 // loop_body
      %s90 = ssub.s32 %s85, 1
      %s91 = ssub.s32 %s85, 2
      %s92 = sadd.s32 %s85, 1
      %s93 = ssub.s32 %s85, %s92
      %p94 = scmp.eq.s32.totalorder %s93, 0
      %s96 = sadd.s32 %s95, 1
      %s97 = scalar_select %p94, %s95, %s96
      %p100 = pneg %p94
      %p101 = scmp.eq.s32.totalorder %s85, 1
      %p102 = por %p100, %p101
      %p103 = scmp.ne.s32.totalorder %s95, %s98
      %p104 = scmp.eq.s32.totalorder %s85, 0
      %p105 = por %p103, %p104
      %p106 = scmp.ne.s32.totalorder %s95, %s98
      %p107 = scmp.eq.s32.totalorder %s90, 1
      %p108 = por %p106, %p107
      %p109 = scmp.ne.s32.totalorder %s98, %s99
      %p110 = scmp.eq.s32.totalorder %s90, 0
      %p111 = por %p109, %p110
      %p112 = scmp.ne.s32.totalorder %s98, %s99
      %p113 = scmp.eq.s32.totalorder %s91, 1
      %p114 = por %p112, %p113
      %p116 = scmp.ne.s32.totalorder %s99, %s115
      %p117 = scmp.eq.s32.totalorder %s91, 0
      %p118 = por %p116, %p117
      %s119 = ssub.s32 %s85, %s92
      %p120 = scmp.eq.s32.totalorder %s119, 0
      %s122 = sadd.s32 %s121, 1
      %s123 = scalar_select %p120, %s121, %s122
      %p126 = pneg %p120
      %p127 = scmp.eq.s32.totalorder %s85, 1
      %p128 = por %p126, %p127
      %p129 = scmp.ne.s32.totalorder %s121, %s124
      %p130 = scmp.eq.s32.totalorder %s85, 0
      %p131 = por %p129, %p130
      %p132 = scmp.ne.s32.totalorder %s121, %s124
      %p133 = scmp.eq.s32.totalorder %s90, 1
      %p134 = por %p132, %p133
      %p135 = scmp.ne.s32.totalorder %s124, %s125
      %p136 = scmp.eq.s32.totalorder %s90, 0
      %p137 = por %p135, %p136
      %p138 = scmp.ne.s32.totalorder %s124, %s125
      %p139 = scmp.eq.s32.totalorder %s91, 1
      %p140 = por %p138, %p139
      %p142 = scmp.ne.s32.totalorder %s125, %s141
      %p143 = scmp.eq.s32.totalorder %s91, 0
      %p144 = por %p142, %p143
      %s146 = sadd.s32 %s145, 1
      %p149 = scmp.eq.s32.totalorder %s85, 1
      %p150 = scmp.ne.s32.totalorder %s145, %s147
      %p151 = scmp.eq.s32.totalorder %s85, 0
      %p152 = por %p150, %p151
      %p153 = scmp.ne.s32.totalorder %s145, %s147
      %p154 = scmp.eq.s32.totalorder %s90, 1
      %p155 = por %p153, %p154
      %p156 = scmp.ne.s32.totalorder %s147, %s148
      %p157 = scmp.eq.s32.totalorder %s90, 0
      %p158 = por %p156, %p157
      %p159 = scmp.ne.s32.totalorder %s147, %s148
      %p160 = scmp.eq.s32.totalorder %s91, 1
      %p161 = por %p159, %p160
      %p163 = scmp.ne.s32.totalorder %s148, %s162
      %p164 = scmp.eq.s32.totalorder %s91, 0
      %p165 = por %p163, %p164
      %s167 = sadd.s32 %s166, 1
      %p170 = scmp.eq.s32.totalorder %s85, 1
      %p171 = scmp.ne.s32.totalorder %s166, %s168
      %p172 = scmp.eq.s32.totalorder %s85, 0
      %p173 = por %p171, %p172
      %p174 = scmp.ne.s32.totalorder %s166, %s168
      %p175 = scmp.eq.s32.totalorder %s90, 1
      %p176 = por %p174, %p175
      %p177 = scmp.ne.s32.totalorder %s168, %s169
      %p178 = scmp.eq.s32.totalorder %s90, 0
      %p179 = por %p177, %p178
      %p180 = scmp.ne.s32.totalorder %s168, %s169
      %p181 = scmp.eq.s32.totalorder %s91, 1
      %p182 = por %p180, %p181
      %p184 = scmp.ne.s32.totalorder %s169, %s183
      %p185 = scmp.eq.s32.totalorder %s91, 0
      %p186 = por %p184, %p185
      %s188 = sadd.s32 %s187, 1
      %p191 = scmp.eq.s32.totalorder %s85, 1
      %p192 = scmp.ne.s32.totalorder %s187, %s189
      %p193 = scmp.eq.s32.totalorder %s85, 0
      %p194 = por %p192, %p193
      %p195 = scmp.ne.s32.totalorder %s187, %s189
      %p196 = scmp.eq.s32.totalorder %s90, 1
      %p197 = por %p195, %p196
      %p198 = scmp.ne.s32.totalorder %s189, %s190
      %p199 = scmp.eq.s32.totalorder %s90, 0
      %p200 = por %p198, %p199
      %p201 = scmp.ne.s32.totalorder %s189, %s190
      %p202 = scmp.eq.s32.totalorder %s91, 1
      %p203 = por %p201, %p202
      %p205 = scmp.ne.s32.totalorder %s190, %s204
      %p206 = scmp.eq.s32.totalorder %s91, 0
      %p207 = por %p205, %p206
      %s209 = sadd.s32 %s208, 1
      %p212 = scmp.eq.s32.totalorder %s85, 1
      %p213 = scmp.ne.s32.totalorder %s208, %s210
      %p214 = scmp.eq.s32.totalorder %s85, 0
      %p215 = por %p213, %p214
      %p216 = scmp.ne.s32.totalorder %s208, %s210
      %p217 = scmp.eq.s32.totalorder %s90, 1
      %p218 = por %p216, %p217
      %p219 = scmp.ne.s32.totalorder %s210, %s211
      %p220 = scmp.eq.s32.totalorder %s90, 0
      %p221 = por %p219, %p220
      %p222 = scmp.ne.s32.totalorder %s210, %s211
      %p223 = scmp.eq.s32.totalorder %s91, 1
      %p224 = por %p222, %p223
      %p226 = scmp.ne.s32.totalorder %s211, %s225
      %p227 = scmp.eq.s32.totalorder %s91, 0
      %p228 = por %p226, %p227
      %s230 = sadd.s32 %s229, 1
      %p233 = scmp.eq.s32.totalorder %s85, 1
      %p234 = scmp.ne.s32.totalorder %s229, %s231
      %p235 = scmp.eq.s32.totalorder %s85, 0
      %p236 = por %p234, %p235
      %p237 = scmp.ne.s32.totalorder %s229, %s231
      %p238 = scmp.eq.s32.totalorder %s90, 1
      %p239 = por %p237, %p238
      %p240 = scmp.ne.s32.totalorder %s231, %s232
      %p241 = scmp.eq.s32.totalorder %s90, 0
      %p242 = por %p240, %p241
      %p243 = scmp.ne.s32.totalorder %s231, %s232
      %p244 = scmp.eq.s32.totalorder %s91, 1
      %p245 = por %p243, %p244
      %p247 = scmp.ne.s32.totalorder %s232, %s246
      %p248 = scmp.eq.s32.totalorder %s91, 0
      %p249 = por %p247, %p248
      %s251 = sadd.s32 %s250, 1
      %p254 = scmp.eq.s32.totalorder %s85, 1
      %p255 = scmp.ne.s32.totalorder %s250, %s252
      %p256 = scmp.eq.s32.totalorder %s85, 0
      %p257 = por %p255, %p256
      %p258 = scmp.ne.s32.totalorder %s250, %s252
      %p259 = scmp.eq.s32.totalorder %s90, 1
      %p260 = por %p258, %p259
      %p261 = scmp.ne.s32.totalorder %s252, %s253
      %p262 = scmp.eq.s32.totalorder %s90, 0
      %p263 = por %p261, %p262
      %p264 = scmp.ne.s32.totalorder %s252, %s253
      %p265 = scmp.eq.s32.totalorder %s91, 1
      %p266 = por %p264, %p265
      %p268 = scmp.ne.s32.totalorder %s253, %s267
      %p269 = scmp.eq.s32.totalorder %s91, 0
      %p270 = por %p268, %p269
      %s272 = sadd.s32 %s271, 1
      %p275 = scmp.eq.s32.totalorder %s85, 1
      %p276 = scmp.ne.s32.totalorder %s271, %s273
      %p277 = scmp.eq.s32.totalorder %s85, 0
      %p278 = por %p276, %p277
      %p279 = scmp.ne.s32.totalorder %s271, %s273
      %p280 = scmp.eq.s32.totalorder %s90, 1
      %p281 = por %p279, %p280
      %p282 = scmp.ne.s32.totalorder %s273, %s274
      %p283 = scmp.eq.s32.totalorder %s90, 0
      %p284 = por %p282, %p283
      %p285 = scmp.ne.s32.totalorder %s273, %s274
      %p286 = scmp.eq.s32.totalorder %s91, 1
      %p287 = por %p285, %p286
      %p289 = scmp.ne.s32.totalorder %s274, %s288
      %p290 = scmp.eq.s32.totalorder %s91, 0
      %p291 = por %p289, %p290
      %s293 = sadd.s32 %s292, 1
      %p296 = scmp.eq.s32.totalorder %s85, 1
      %p297 = scmp.ne.s32.totalorder %s292, %s294
      %p298 = scmp.eq.s32.totalorder %s85, 0
      %p299 = por %p297, %p298
      %p300 = scmp.ne.s32.totalorder %s292, %s294
      %p301 = scmp.eq.s32.totalorder %s90, 1
      %p302 = por %p300, %p301
      %p303 = scmp.ne.s32.totalorder %s294, %s295
      %p304 = scmp.eq.s32.totalorder %s90, 0
      %p305 = por %p303, %p304
      %p306 = scmp.ne.s32.totalorder %s294, %s295
      %p307 = scmp.eq.s32.totalorder %s91, 1
      %p308 = por %p306, %p307
      %p310 = scmp.ne.s32.totalorder %s295, %s309
      %p311 = scmp.eq.s32.totalorder %s91, 0
      %p312 = por %p310, %p311
      %s314 = sadd.s32 %s313, 1
      %p317 = scmp.eq.s32.totalorder %s85, 1
      %p318 = scmp.ne.s32.totalorder %s313, %s315
      %p319 = scmp.eq.s32.totalorder %s85, 0
      %p320 = por %p318, %p319
      %p321 = scmp.ne.s32.totalorder %s313, %s315
      %p322 = scmp.eq.s32.totalorder %s90, 1
      %p323 = por %p321, %p322
      %p324 = scmp.ne.s32.totalorder %s315, %s316
      %p325 = scmp.eq.s32.totalorder %s90, 0
      %p326 = por %p324, %p325
      %p327 = scmp.ne.s32.totalorder %s315, %s316
      %p328 = scmp.eq.s32.totalorder %s91, 1
      %p329 = por %p327, %p328
      %p331 = scmp.ne.s32.totalorder %s316, %s330
      %p332 = scmp.eq.s32.totalorder %s91, 0
      %p333 = por %p331, %p332
      %s335 = sadd.s32 %s334, 1
      %p338 = scmp.eq.s32.totalorder %s85, 1
      %p339 = scmp.ne.s32.totalorder %s334, %s336
      %p340 = scmp.eq.s32.totalorder %s85, 0
      %p341 = por %p339, %p340
      %p342 = scmp.ne.s32.totalorder %s334, %s336
      %p343 = scmp.eq.s32.totalorder %s90, 1
      %p344 = por %p342, %p343
      %p345 = scmp.ne.s32.totalorder %s336, %s337
      %p346 = scmp.eq.s32.totalorder %s90, 0
      %p347 = por %p345, %p346
      %p348 = scmp.ne.s32.totalorder %s336, %s337
      %p349 = scmp.eq.s32.totalorder %s91, 1
      %p350 = por %p348, %p349
      %p352 = scmp.ne.s32.totalorder %s337, %s351
      %p353 = scmp.eq.s32.totalorder %s91, 0
      %p354 = por %p352, %p353
      %s356 = sadd.s32 %s355, 1
      %p359 = scmp.eq.s32.totalorder %s85, 1
      %p360 = scmp.ne.s32.totalorder %s355, %s357
      %p361 = scmp.eq.s32.totalorder %s85, 0
      %p362 = por %p360, %p361
      %p363 = scmp.ne.s32.totalorder %s355, %s357
      %p364 = scmp.eq.s32.totalorder %s90, 1
      %p365 = por %p363, %p364
      %p366 = scmp.ne.s32.totalorder %s357, %s358
      %p367 = scmp.eq.s32.totalorder %s90, 0
      %p368 = por %p366, %p367
      %p369 = scmp.ne.s32.totalorder %s357, %s358
      %p370 = scmp.eq.s32.totalorder %s91, 1
      %p371 = por %p369, %p370
      %p373 = scmp.ne.s32.totalorder %s358, %s372
      %p374 = scmp.eq.s32.totalorder %s91, 0
      %p375 = por %p373, %p374
      %s377 = sadd.s32 %s376, 1
      %p380 = scmp.eq.s32.totalorder %s85, 1
      %p381 = scmp.ne.s32.totalorder %s376, %s378
      %p382 = scmp.eq.s32.totalorder %s85, 0
      %p383 = por %p381, %p382
      %p384 = scmp.ne.s32.totalorder %s376, %s378
      %p385 = scmp.eq.s32.totalorder %s90, 1
      %p386 = por %p384, %p385
      %p387 = scmp.ne.s32.totalorder %s378, %s379
      %p388 = scmp.eq.s32.totalorder %s90, 0
      %p389 = por %p387, %p388
      %p390 = scmp.ne.s32.totalorder %s378, %s379
      %p391 = scmp.eq.s32.totalorder %s91, 1
      %p392 = por %p390, %p391
      %p394 = scmp.ne.s32.totalorder %s379, %s393
      %p395 = scmp.eq.s32.totalorder %s91, 0
      %p396 = por %p394, %p395
      %s398 = sadd.s32 %s397, 1
      %p401 = scmp.eq.s32.totalorder %s85, 1
      %p402 = scmp.ne.s32.totalorder %s397, %s399
      %p403 = scmp.eq.s32.totalorder %s85, 0
      %p404 = por %p402, %p403
      %p405 = scmp.ne.s32.totalorder %s397, %s399
      %p406 = scmp.eq.s32.totalorder %s90, 1
      %p407 = por %p405, %p406
      %p408 = scmp.ne.s32.totalorder %s399, %s400
      %p409 = scmp.eq.s32.totalorder %s90, 0
      %p410 = por %p408, %p409
      %p411 = scmp.ne.s32.totalorder %s399, %s400
      %p412 = scmp.eq.s32.totalorder %s91, 1
      %p413 = por %p411, %p412
      %p415 = scmp.ne.s32.totalorder %s400, %s414
      %p416 = scmp.eq.s32.totalorder %s91, 0
      %p417 = por %p415, %p416
      %s419 = sadd.s32 %s418, 1
      %p422 = scmp.eq.s32.totalorder %s85, 1
      %p423 = scmp.ne.s32.totalorder %s418, %s420
      %p424 = scmp.eq.s32.totalorder %s85, 0
      %p425 = por %p423, %p424
      %p426 = scmp.ne.s32.totalorder %s418, %s420
      %p427 = scmp.eq.s32.totalorder %s90, 1
      %p428 = por %p426, %p427
      %p429 = scmp.ne.s32.totalorder %s420, %s421
      %p430 = scmp.eq.s32.totalorder %s90, 0
      %p431 = por %p429, %p430
      %p432 = scmp.ne.s32.totalorder %s420, %s421
      %p433 = scmp.eq.s32.totalorder %s91, 1
      %p434 = por %p432, %p433
      %p436 = scmp.ne.s32.totalorder %s421, %s435
      %p437 = scmp.eq.s32.totalorder %s91, 0
      %p438 = por %p436, %p437
      %s440 = sadd.s32 %s439, 1
      %p443 = scmp.eq.s32.totalorder %s85, 1
      %p444 = scmp.ne.s32.totalorder %s439, %s441
      %p445 = scmp.eq.s32.totalorder %s85, 0
      %p446 = por %p444, %p445
      %p447 = scmp.ne.s32.totalorder %s439, %s441
      %p448 = scmp.eq.s32.totalorder %s90, 1
      %p449 = por %p447, %p448
      %p450 = scmp.ne.s32.totalorder %s441, %s442
      %p451 = scmp.eq.s32.totalorder %s90, 0
      %p452 = por %p450, %p451
      %p453 = scmp.ne.s32.totalorder %s441, %s442
      %p454 = scmp.eq.s32.totalorder %s91, 1
      %p455 = por %p453, %p454
      %p457 = scmp.ne.s32.totalorder %s442, %s456
      %p458 = scmp.eq.s32.totalorder %s91, 0
      %p459 = por %p457, %p458
      %s461 = sadd.s32 %s460, 1
      %p464 = scmp.eq.s32.totalorder %s85, 1
      %p465 = scmp.ne.s32.totalorder %s460, %s462
      %p466 = scmp.eq.s32.totalorder %s85, 0
      %p467 = por %p465, %p466
      %p468 = scmp.ne.s32.totalorder %s460, %s462
      %p469 = scmp.eq.s32.totalorder %s90, 1
      %p470 = por %p468, %p469
      %p471 = scmp.ne.s32.totalorder %s462, %s463
      %p472 = scmp.eq.s32.totalorder %s90, 0
      %p473 = por %p471, %p472
      %p474 = scmp.ne.s32.totalorder %s462, %s463
      %p475 = scmp.eq.s32.totalorder %s91, 1
      %p476 = por %p474, %p475
      %p478 = scmp.ne.s32.totalorder %s463, %s477
      %p479 = scmp.eq.s32.totalorder %s91, 0
      %p480 = por %p478, %p479
      %s482 = sadd.s32 %s481, 1
      %p485 = scmp.eq.s32.totalorder %s85, 1
      %p486 = scmp.ne.s32.totalorder %s481, %s483
      %p487 = scmp.eq.s32.totalorder %s85, 0
      %p488 = por %p486, %p487
      %p489 = scmp.ne.s32.totalorder %s481, %s483
      %p490 = scmp.eq.s32.totalorder %s90, 1
      %p491 = por %p489, %p490
      %p492 = scmp.ne.s32.totalorder %s483, %s484
      %p493 = scmp.eq.s32.totalorder %s90, 0
      %p494 = por %p492, %p493
      %p495 = scmp.ne.s32.totalorder %s483, %s484
      %p496 = scmp.eq.s32.totalorder %s91, 1
      %p497 = por %p495, %p496
      %p499 = scmp.ne.s32.totalorder %s484, %s498
      %p500 = scmp.eq.s32.totalorder %s91, 0
      %p501 = por %p499, %p500
      %s503 = sadd.s32 %s502, 1
      %p506 = scmp.eq.s32.totalorder %s85, 1
      %p507 = scmp.ne.s32.totalorder %s502, %s504
      %p508 = scmp.eq.s32.totalorder %s85, 0
      %p509 = por %p507, %p508
      %p510 = scmp.ne.s32.totalorder %s502, %s504
      %p511 = scmp.eq.s32.totalorder %s90, 1
      %p512 = por %p510, %p511
      %p513 = scmp.ne.s32.totalorder %s504, %s505
      %p514 = scmp.eq.s32.totalorder %s90, 0
      %p515 = por %p513, %p514
      %p516 = scmp.ne.s32.totalorder %s504, %s505
      %p517 = scmp.eq.s32.totalorder %s91, 1
      %p518 = por %p516, %p517
      %p520 = scmp.ne.s32.totalorder %s505, %s519
      %p521 = scmp.eq.s32.totalorder %s91, 0
      %p522 = por %p520, %p521
      %s524 = sadd.s32 %s523, 1
      %p527 = scmp.eq.s32.totalorder %s85, 1
      %p528 = scmp.ne.s32.totalorder %s523, %s525
      %p529 = scmp.eq.s32.totalorder %s85, 0
      %p530 = por %p528, %p529
      %p531 = scmp.ne.s32.totalorder %s523, %s525
      %p532 = scmp.eq.s32.totalorder %s90, 1
      %p533 = por %p531, %p532
      %p534 = scmp.ne.s32.totalorder %s525, %s526
      %p535 = scmp.eq.s32.totalorder %s90, 0
      %p536 = por %p534, %p535
      %p537 = scmp.ne.s32.totalorder %s525, %s526
      %p538 = scmp.eq.s32.totalorder %s91, 1
      %p539 = por %p537, %p538
      %p541 = scmp.ne.s32.totalorder %s526, %s540
      %p542 = scmp.eq.s32.totalorder %s91, 0
      %p543 = por %p541, %p542
      %s545 = sadd.s32 %s544, 1
      %p548 = scmp.eq.s32.totalorder %s85, 1
      %p549 = scmp.ne.s32.totalorder %s544, %s546
      %p550 = scmp.eq.s32.totalorder %s85, 0
      %p551 = por %p549, %p550
      %p552 = scmp.ne.s32.totalorder %s544, %s546
      %p553 = scmp.eq.s32.totalorder %s90, 1
      %p554 = por %p552, %p553
      %p555 = scmp.ne.s32.totalorder %s546, %s547
      %p556 = scmp.eq.s32.totalorder %s90, 0
      %p557 = por %p555, %p556
      %p558 = scmp.ne.s32.totalorder %s546, %s547
      %p559 = scmp.eq.s32.totalorder %s91, 1
      %p560 = por %p558, %p559
      %p562 = scmp.ne.s32.totalorder %s547, %s561
      %p563 = scmp.eq.s32.totalorder %s91, 0
      %p564 = por %p562, %p563
      %s566 = sadd.s32 %s565, 1
      %p569 = scmp.eq.s32.totalorder %s85, 1
      %p570 = scmp.ne.s32.totalorder %s565, %s567
      %p571 = scmp.eq.s32.totalorder %s85, 0
      %p572 = por %p570, %p571
      %p573 = scmp.ne.s32.totalorder %s565, %s567
      %p574 = scmp.eq.s32.totalorder %s90, 1
      %p575 = por %p573, %p574
      %p576 = scmp.ne.s32.totalorder %s567, %s568
      %p577 = scmp.eq.s32.totalorder %s90, 0
      %p578 = por %p576, %p577
      %p579 = scmp.ne.s32.totalorder %s567, %s568
      %p580 = scmp.eq.s32.totalorder %s91, 1
      %p581 = por %p579, %p580
      %p583 = scmp.ne.s32.totalorder %s568, %s582
      %p584 = scmp.eq.s32.totalorder %s91, 0
      %p585 = por %p583, %p584
      %s587 = sadd.s32 %s586, 1
      %p590 = scmp.eq.s32.totalorder %s85, 1
      %p591 = scmp.ne.s32.totalorder %s586, %s588
      %p592 = scmp.eq.s32.totalorder %s85, 0
      %p593 = por %p591, %p592
      %p594 = scmp.ne.s32.totalorder %s586, %s588
      %p595 = scmp.eq.s32.totalorder %s90, 1
      %p596 = por %p594, %p595
      %p597 = scmp.ne.s32.totalorder %s588, %s589
      %p598 = scmp.eq.s32.totalorder %s90, 0
      %p599 = por %p597, %p598
      %p600 = scmp.ne.s32.totalorder %s588, %s589
      %p601 = scmp.eq.s32.totalorder %s91, 1
      %p602 = por %p600, %p601
      %p604 = scmp.ne.s32.totalorder %s589, %s603
      %p605 = scmp.eq.s32.totalorder %s91, 0
      %p606 = por %p604, %p605
      %s608 = sadd.s32 %s607, 1
      %p611 = scmp.eq.s32.totalorder %s85, 1
      %p612 = scmp.ne.s32.totalorder %s607, %s609
      %p613 = scmp.eq.s32.totalorder %s85, 0
      %p614 = por %p612, %p613
      %p615 = scmp.ne.s32.totalorder %s607, %s609
      %p616 = scmp.eq.s32.totalorder %s90, 1
      %p617 = por %p615, %p616
      %p618 = scmp.ne.s32.totalorder %s609, %s610
      %p619 = scmp.eq.s32.totalorder %s90, 0
      %p620 = por %p618, %p619
      %p621 = scmp.ne.s32.totalorder %s609, %s610
      %p622 = scmp.eq.s32.totalorder %s91, 1
      %p623 = por %p621, %p622
      %p625 = scmp.ne.s32.totalorder %s610, %s624
      %p626 = scmp.eq.s32.totalorder %s91, 0
      %p627 = por %p625, %p626
      %s629 = sadd.s32 %s628, 1
      %p632 = scmp.eq.s32.totalorder %s85, 1
      %p633 = scmp.ne.s32.totalorder %s628, %s630
      %p634 = scmp.eq.s32.totalorder %s85, 0
      %p635 = por %p633, %p634
      %p636 = scmp.ne.s32.totalorder %s628, %s630
      %p637 = scmp.eq.s32.totalorder %s90, 1
      %p638 = por %p636, %p637
      %p639 = scmp.ne.s32.totalorder %s630, %s631
      %p640 = scmp.eq.s32.totalorder %s90, 0
      %p641 = por %p639, %p640
      %p642 = scmp.ne.s32.totalorder %s630, %s631
      %p643 = scmp.eq.s32.totalorder %s91, 1
      %p644 = por %p642, %p643
      %p646 = scmp.ne.s32.totalorder %s631, %s645
      %p647 = scmp.eq.s32.totalorder %s91, 0
      %p648 = por %p646, %p647
      %s650 = sadd.s32 %s649, 1
      %p653 = scmp.eq.s32.totalorder %s85, 1
      %p654 = scmp.ne.s32.totalorder %s649, %s651
      %p655 = scmp.eq.s32.totalorder %s85, 0
      %p656 = por %p654, %p655
      %p657 = scmp.ne.s32.totalorder %s649, %s651
      %p658 = scmp.eq.s32.totalorder %s90, 1
      %p659 = por %p657, %p658
      %p660 = scmp.ne.s32.totalorder %s651, %s652
      %p661 = scmp.eq.s32.totalorder %s90, 0
      %p662 = por %p660, %p661
      %p663 = scmp.ne.s32.totalorder %s651, %s652
      %p664 = scmp.eq.s32.totalorder %s91, 1
      %p665 = por %p663, %p664
      %p667 = scmp.ne.s32.totalorder %s652, %s666
      %p668 = scmp.eq.s32.totalorder %s91, 0
      %p669 = por %p667, %p668
      %s671 = sadd.s32 %s670, 1
      %p674 = scmp.eq.s32.totalorder %s85, 1
      %p675 = scmp.ne.s32.totalorder %s670, %s672
      %p676 = scmp.eq.s32.totalorder %s85, 0
      %p677 = por %p675, %p676
      %p678 = scmp.ne.s32.totalorder %s670, %s672
      %p679 = scmp.eq.s32.totalorder %s90, 1
      %p680 = por %p678, %p679
      %p681 = scmp.ne.s32.totalorder %s672, %s673
      %p682 = scmp.eq.s32.totalorder %s90, 0
      %p683 = por %p681, %p682
      %p684 = scmp.ne.s32.totalorder %s672, %s673
      %p685 = scmp.eq.s32.totalorder %s91, 1
      %p686 = por %p684, %p685
      %p688 = scmp.ne.s32.totalorder %s673, %s687
      %p689 = scmp.eq.s32.totalorder %s91, 0
      %p690 = por %p688, %p689
      %s692 = sadd.s32 %s691, 1
      %p695 = scmp.eq.s32.totalorder %s85, 1
      %p696 = scmp.ne.s32.totalorder %s691, %s693
      %p697 = scmp.eq.s32.totalorder %s85, 0
      %p698 = por %p696, %p697
      %p699 = scmp.ne.s32.totalorder %s691, %s693
      %p700 = scmp.eq.s32.totalorder %s90, 1
      %p701 = por %p699, %p700
      %p702 = scmp.ne.s32.totalorder %s693, %s694
      %p703 = scmp.eq.s32.totalorder %s90, 0
      %p704 = por %p702, %p703
      %p705 = scmp.ne.s32.totalorder %s693, %s694
      %p706 = scmp.eq.s32.totalorder %s91, 1
      %p707 = por %p705, %p706
      %p709 = scmp.ne.s32.totalorder %s694, %s708
      %p710 = scmp.eq.s32.totalorder %s91, 0
      %p711 = por %p709, %p710
      %s713 = sadd.s32 %s712, 1
      %p716 = scmp.eq.s32.totalorder %s85, 1
      %p717 = scmp.ne.s32.totalorder %s712, %s714
      %p718 = scmp.eq.s32.totalorder %s85, 0
      %p719 = por %p717, %p718
      %p720 = scmp.ne.s32.totalorder %s712, %s714
      %p721 = scmp.eq.s32.totalorder %s90, 1
      %p722 = por %p720, %p721
      %p723 = scmp.ne.s32.totalorder %s714, %s715
      %p724 = scmp.eq.s32.totalorder %s90, 0
      %p725 = por %p723, %p724
      %p726 = scmp.ne.s32.totalorder %s714, %s715
      %p727 = scmp.eq.s32.totalorder %s91, 1
      %p728 = por %p726, %p727
      %p730 = scmp.ne.s32.totalorder %s715, %s729
      %p731 = scmp.eq.s32.totalorder %s91, 0
      %p732 = por %p730, %p731
      %s734 = sadd.s32 %s733, 1
      %p737 = scmp.eq.s32.totalorder %s85, 1
      %p738 = scmp.ne.s32.totalorder %s733, %s735
      %p739 = scmp.eq.s32.totalorder %s85, 0
      %p740 = por %p738, %p739
      %p741 = scmp.ne.s32.totalorder %s733, %s735
      %p742 = scmp.eq.s32.totalorder %s90, 1
      %p743 = por %p741, %p742
      %p744 = scmp.ne.s32.totalorder %s735, %s736
      %p745 = scmp.eq.s32.totalorder %s90, 0
      %p746 = por %p744, %p745
      %p747 = scmp.ne.s32.totalorder %s735, %s736
      %p748 = scmp.eq.s32.totalorder %s91, 1
      %p749 = por %p747, %p748
      %p751 = scmp.ne.s32.totalorder %s736, %s750
      %p752 = scmp.eq.s32.totalorder %s91, 0
      %p753 = por %p751, %p752
      %s755 = sadd.s32 %s754, 1
      %p758 = scmp.eq.s32.totalorder %s85, 1
      %p759 = scmp.ne.s32.totalorder %s754, %s756
      %p760 = scmp.eq.s32.totalorder %s85, 0
      %p761 = por %p759, %p760
      %p762 = scmp.ne.s32.totalorder %s754, %s756
      %p763 = scmp.eq.s32.totalorder %s90, 1
      %p764 = por %p762, %p763
      %p765 = scmp.ne.s32.totalorder %s756, %s757
      %p766 = scmp.eq.s32.totalorder %s90, 0
      %p767 = por %p765, %p766
      %p768 = scmp.ne.s32.totalorder %s756, %s757
      %p769 = scmp.eq.s32.totalorder %s91, 1
      %p770 = por %p768, %p769
      %p772 = scmp.ne.s32.totalorder %s757, %s771
      %p773 = scmp.eq.s32.totalorder %s91, 0
      %p774 = por %p772, %p773
      %s775 = ssub.s32 %s85, %s92
      %p776 = scmp.eq.s32.totalorder %s775, 0
      %s778 = sadd.s32 %s777, 1
      %s779 = scalar_select %p776, %s777, %s778
      %p782 = pneg %p776
      %p783 = scmp.eq.s32.totalorder %s85, 1
      %p784 = por %p782, %p783
      %p785 = scmp.ne.s32.totalorder %s777, %s780
      %p786 = scmp.eq.s32.totalorder %s85, 0
      %p787 = por %p785, %p786
      %p788 = scmp.ne.s32.totalorder %s777, %s780
      %p789 = scmp.eq.s32.totalorder %s90, 1
      %p790 = por %p788, %p789
      %p791 = scmp.ne.s32.totalorder %s780, %s781
      %p792 = scmp.eq.s32.totalorder %s90, 0
      %p793 = por %p791, %p792
      %p794 = scmp.ne.s32.totalorder %s780, %s781
      %p795 = scmp.eq.s32.totalorder %s91, 1
      %p796 = por %p794, %p795
      %p798 = scmp.ne.s32.totalorder %s781, %s797
      %p799 = scmp.eq.s32.totalorder %s91, 0
      %p800 = por %p798, %p799
      %p801 = scmp.le.s32.totalorder 1, %s85
      %p802 = scmp.lt.s32.totalorder %s85, 3
      %p803 = pnand %p801, %p802
      %p804 = pneg %p803
      // Predicated region
      $region9: #{tpu_custom_call.1} parent=5 // pred_check
        _
      $region10: #{tpu_custom_call.1} parent=5 // pred_check_branch
        %806 = sbr.rel (%p803) target = $region12
      $region11: #{tpu_custom_call.1} parent=5 // pred_region
        %s807 = ssub.s32 %s85, 1
        // Predicated region
        $region13: #{tpu_custom_call.1} parent=11 // pred_check
          %p808 = pneg %p158
        $region14: #{tpu_custom_call.1} parent=11 // pred_check_branch
          %810 = sbr.rel (%p808) target = $region16
        $region15: #{tpu_custom_call.1} parent=11 // pred_region
          _
        $region16: #{tpu_custom_call.1} parent=11 // pred_fallthru
          _
        // Predicated region
        $region17: #{tpu_custom_call.1} parent=11 // pred_check
          %p811 = pneg %p179
        $region18: #{tpu_custom_call.1} parent=11 // pred_check_branch
          %813 = sbr.rel (%p811) target = $region20
        $region19: #{tpu_custom_call.1} parent=11 // pred_region
          %s815 = ssub.s32 16, 16
          %816 = vsyncadd [#allocation6], %s815
          %s818 = sshll.u32 [#allocation5], 4
          %s819 = int_to_ptr.vmem [resolvable:$true] %s818
          %821 = dma.hbm_to_vmem [thread:$0]  %s7, 16, %s819, [#allocation6]
        $region20: #{tpu_custom_call.1} parent=11 // pred_fallthru
          _
        // Predicated region
        $region21: #{tpu_custom_call.1} parent=11 // pred_check
          %p822 = pneg %p200
        $region22: #{tpu_custom_call.1} parent=11 // pred_check_branch
          %824 = sbr.rel (%p822) target = $region24
        $region23: #{tpu_custom_call.1} parent=11 // pred_region
          _
        $region24: #{tpu_custom_call.1} parent=11 // pred_fallthru
          _
        // Predicated region
        $region25: #{tpu_custom_call.1} parent=11 // pred_check
          %p825 = pneg %p221
        $region26: #{tpu_custom_call.1} parent=11 // pred_check_branch
          %827 = sbr.rel (%p825) target = $region28
        $region27: #{tpu_custom_call.1} parent=11 // pred_region
          %s829 = ssub.s32 16, 16
          %830 = vsyncadd [#allocation6], %s829
          %s832 = sshll.u32 [#allocation7], 4
          %s833 = int_to_ptr.vmem [resolvable:$true] %s832
          %835 = dma.hbm_to_vmem [thread:$0]  %s11, 16, %s833, [#allocation6]
        $region28: #{tpu_custom_call.1} parent=11 // pred_fallthru
          _
        // Predicated region
        $region29: #{tpu_custom_call.1} parent=11 // pred_check
          %p836 = pneg %p242
        $region30: #{tpu_custom_call.1} parent=11 // pred_check_branch
          %838 = sbr.rel (%p836) target = $region32
        $region31: #{tpu_custom_call.1} parent=11 // pred_region
          %s840 = ssub.s32 512, 512
          %841 = vsyncadd [#allocation9], %s840
          %s842 = sshll.u32 [#allocation8], 4
          %s843 = int_to_ptr.vmem [resolvable:$true] %s842
          %848 = dma.hbm_to_vmem [thread:$0]  %s13, 512, %s843, [#allocation9], 128, 128, 8
        $region32: #{tpu_custom_call.1} parent=11 // pred_fallthru
          _
        // Predicated region
        $region33: #{tpu_custom_call.1} parent=11 // pred_check
          %p849 = pneg %p263
        $region34: #{tpu_custom_call.1} parent=11 // pred_check_branch
          %851 = sbr.rel (%p849) target = $region36
        $region35: #{tpu_custom_call.1} parent=11 // pred_region
          %s853 = ssub.s32 16, 16
          %854 = vsyncadd [#allocation9], %s853
          %s856 = sshll.u32 [#allocation10], 4
          %s857 = int_to_ptr.vmem [resolvable:$true] %s856
          %859 = dma.hbm_to_vmem [thread:$0]  %s15, 16, %s857, [#allocation9]
        $region36: #{tpu_custom_call.1} parent=11 // pred_fallthru
          _
        // Predicated region
        $region37: #{tpu_custom_call.1} parent=11 // pred_check
          %p860 = pneg %p284
        $region38: #{tpu_custom_call.1} parent=11 // pred_check_branch
          %862 = sbr.rel (%p860) target = $region40
        $region39: #{tpu_custom_call.1} parent=11 // pred_region
          %s864 = ssub.s32 512, 512
          %865 = vsyncadd [#allocation12], %s864
          %s866 = sshll.u32 [#allocation11], 4
          %s867 = int_to_ptr.vmem [resolvable:$true] %s866
          %872 = dma.hbm_to_vmem [thread:$0]  %s17, 512, %s867, [#allocation12], 128, 128, 8
        $region40: #{tpu_custom_call.1} parent=11 // pred_fallthru
          _
        // Predicated region
        $region41: #{tpu_custom_call.1} parent=11 // pred_check
          %p873 = pneg %p305
        $region42: #{tpu_custom_call.1} parent=11 // pred_check_branch
          %875 = sbr.rel (%p873) target = $region44
        $region43: #{tpu_custom_call.1} parent=11 // pred_region
          %s877 = ssub.s32 16, 16
          %878 = vsyncadd [#allocation12], %s877
          %s880 = sshll.u32 [#allocation13], 4
          %s881 = int_to_ptr.vmem [resolvable:$true] %s880
          %883 = dma.hbm_to_vmem [thread:$0]  %s19, 16, %s881, [#allocation12]
        $region44: #{tpu_custom_call.1} parent=11 // pred_fallthru
          _
        // Predicated region
        $region45: #{tpu_custom_call.1} parent=11 // pred_check
          %p884 = pneg %p326
        $region46: #{tpu_custom_call.1} parent=11 // pred_check_branch
          %886 = sbr.rel (%p884) target = $region48
        $region47: #{tpu_custom_call.1} parent=11 // pred_region
          %s888 = ssub.s32 16, 16
          %889 = vsyncadd [#allocation15], %s888
          %s891 = sshll.u32 [#allocation14], 4
          %s892 = int_to_ptr.vmem [resolvable:$true] %s891
          %894 = dma.hbm_to_vmem [thread:$0]  %s21, 16, %s892, [#allocation15]
        $region48: #{tpu_custom_call.1} parent=11 // pred_fallthru
          _
        // Predicated region
        $region49: #{tpu_custom_call.1} parent=11 // pred_check
          %p895 = pneg %p347
        $region50: #{tpu_custom_call.1} parent=11 // pred_check_branch
          %897 = sbr.rel (%p895) target = $region52
        $region51: #{tpu_custom_call.1} parent=11 // pred_region
          %s899 = ssub.s32 16, 16
          %900 = vsyncadd [#allocation15], %s899
          %s902 = sshll.u32 [#allocation16], 4
          %s903 = int_to_ptr.vmem [resolvable:$true] %s902
          %905 = dma.hbm_to_vmem [thread:$0]  %s23, 16, %s903, [#allocation15]
        $region52: #{tpu_custom_call.1} parent=11 // pred_fallthru
          _
        // Predicated region
        $region53: #{tpu_custom_call.1} parent=11 // pred_check
          %p906 = pneg %p368
        $region54: #{tpu_custom_call.1} parent=11 // pred_check_branch
          %908 = sbr.rel (%p906) target = $region56
        $region55: #{tpu_custom_call.1} parent=11 // pred_region
          %s910 = ssub.s32 16, 16
          %911 = vsyncadd [#allocation18], %s910
          %s913 = sshll.u32 [#allocation17], 4
          %s914 = int_to_ptr.vmem [resolvable:$true] %s913
          %916 = dma.hbm_to_vmem [thread:$0]  %s25, 16, %s914, [#allocation18]
        $region56: #{tpu_custom_call.1} parent=11 // pred_fallthru
          _
        // Predicated region
        $region57: #{tpu_custom_call.1} parent=11 // pred_check
          %p917 = pneg %p389
        $region58: #{tpu_custom_call.1} parent=11 // pred_check_branch
          %919 = sbr.rel (%p917) target = $region60
        $region59: #{tpu_custom_call.1} parent=11 // pred_region
          %s921 = ssub.s32 16, 16
          %922 = vsyncadd [#allocation18], %s921
          %s924 = sshll.u32 [#allocation19], 4
          %s925 = int_to_ptr.vmem [resolvable:$true] %s924
          %927 = dma.hbm_to_vmem [thread:$0]  %s27, 16, %s925, [#allocation18]
        $region60: #{tpu_custom_call.1} parent=11 // pred_fallthru
          _
        // Predicated region
        $region61: #{tpu_custom_call.1} parent=11 // pred_check
          %p928 = pneg %p410
        $region62: #{tpu_custom_call.1} parent=11 // pred_check_branch
          %930 = sbr.rel (%p928) target = $region64
        $region63: #{tpu_custom_call.1} parent=11 // pred_region
          %s932 = ssub.s32 512, 512
          %933 = vsyncadd [#allocation21], %s932
          %s934 = sshll.u32 [#allocation20], 4
          %s935 = int_to_ptr.vmem [resolvable:$true] %s934
          %940 = dma.hbm_to_vmem [thread:$0]  %s29, 512, %s935, [#allocation21], 128, 128, 8
        $region64: #{tpu_custom_call.1} parent=11 // pred_fallthru
          _
        // Predicated region
        $region65: #{tpu_custom_call.1} parent=11 // pred_check
          %p941 = pneg %p431
        $region66: #{tpu_custom_call.1} parent=11 // pred_check_branch
          %943 = sbr.rel (%p941) target = $region68
        $region67: #{tpu_custom_call.1} parent=11 // pred_region
          %s945 = ssub.s32 16, 16
          %946 = vsyncadd [#allocation21], %s945
          %s948 = sshll.u32 [#allocation22], 4
          %s949 = int_to_ptr.vmem [resolvable:$true] %s948
          %951 = dma.hbm_to_vmem [thread:$0]  %s31, 16, %s949, [#allocation21]
        $region68: #{tpu_custom_call.1} parent=11 // pred_fallthru
          _
        // Predicated region
        $region69: #{tpu_custom_call.1} parent=11 // pred_check
          %p952 = pneg %p452
        $region70: #{tpu_custom_call.1} parent=11 // pred_check_branch
          %954 = sbr.rel (%p952) target = $region72
        $region71: #{tpu_custom_call.1} parent=11 // pred_region
          %s956 = ssub.s32 512, 512
          %957 = vsyncadd [#allocation24], %s956
          %s958 = sshll.u32 [#allocation23], 4
          %s959 = int_to_ptr.vmem [resolvable:$true] %s958
          %964 = dma.hbm_to_vmem [thread:$0]  %s33, 512, %s959, [#allocation24], 128, 128, 8
        $region72: #{tpu_custom_call.1} parent=11 // pred_fallthru
          _
        // Predicated region
        $region73: #{tpu_custom_call.1} parent=11 // pred_check
          %p965 = pneg %p473
        $region74: #{tpu_custom_call.1} parent=11 // pred_check_branch
          %967 = sbr.rel (%p965) target = $region76
        $region75: #{tpu_custom_call.1} parent=11 // pred_region
          %s969 = ssub.s32 16, 16
          %970 = vsyncadd [#allocation24], %s969
          %s972 = sshll.u32 [#allocation25], 4
          %s973 = int_to_ptr.vmem [resolvable:$true] %s972
          %975 = dma.hbm_to_vmem [thread:$0]  %s35, 16, %s973, [#allocation24]
        $region76: #{tpu_custom_call.1} parent=11 // pred_fallthru
          _
        // Predicated region
        $region77: #{tpu_custom_call.1} parent=11 // pred_check
          %p976 = pneg %p494
        $region78: #{tpu_custom_call.1} parent=11 // pred_check_branch
          %978 = sbr.rel (%p976) target = $region80
        $region79: #{tpu_custom_call.1} parent=11 // pred_region
          _
        $region80: #{tpu_custom_call.1} parent=11 // pred_fallthru
          _
        // Predicated region
        $region81: #{tpu_custom_call.1} parent=11 // pred_check
          %p979 = pneg %p515
        $region82: #{tpu_custom_call.1} parent=11 // pred_check_branch
          %981 = sbr.rel (%p979) target = $region84
        $region83: #{tpu_custom_call.1} parent=11 // pred_region
          _
        $region84: #{tpu_custom_call.1} parent=11 // pred_fallthru
          _
        // Predicated region
        $region85: #{tpu_custom_call.1} parent=11 // pred_check
          %p982 = pneg %p536
        $region86: #{tpu_custom_call.1} parent=11 // pred_check_branch
          %984 = sbr.rel (%p982) target = $region88
        $region87: #{tpu_custom_call.1} parent=11 // pred_region
          %s986 = ssub.s32 512, 512
          %987 = vsyncadd [#allocation27], %s986
          %s988 = sshll.u32 [#allocation26], 4
          %s989 = int_to_ptr.vmem [resolvable:$true] %s988
          %994 = dma.hbm_to_vmem [thread:$0]  %s41, 512, %s989, [#allocation27], 128, 128, 8
        $region88: #{tpu_custom_call.1} parent=11 // pred_fallthru
          _
        // Predicated region
        $region89: #{tpu_custom_call.1} parent=11 // pred_check
          %p995 = pneg %p557
        $region90: #{tpu_custom_call.1} parent=11 // pred_check_branch
          %997 = sbr.rel (%p995) target = $region92
        $region91: #{tpu_custom_call.1} parent=11 // pred_region
          _
        $region92: #{tpu_custom_call.1} parent=11 // pred_fallthru
          _
        // Predicated region
        $region93: #{tpu_custom_call.1} parent=11 // pred_check
          %p998 = pneg %p578
        $region94: #{tpu_custom_call.1} parent=11 // pred_check_branch
          %1000 = sbr.rel (%p998) target = $region96
        $region95: #{tpu_custom_call.1} parent=11 // pred_region
          _
        $region96: #{tpu_custom_call.1} parent=11 // pred_fallthru
          _
        // Predicated region
        $region97: #{tpu_custom_call.1} parent=11 // pred_check
          %p1001 = pneg %p599
        $region98: #{tpu_custom_call.1} parent=11 // pred_check_branch
          %1003 = sbr.rel (%p1001) target = $region100
        $region99: #{tpu_custom_call.1} parent=11 // pred_region
          _
        $region100: #{tpu_custom_call.1} parent=11 // pred_fallthru
          _
        // Predicated region
        $region101: #{tpu_custom_call.1} parent=11 // pred_check
          %p1004 = pneg %p620
        $region102: #{tpu_custom_call.1} parent=11 // pred_check_branch
          %1006 = sbr.rel (%p1004) target = $region104
        $region103: #{tpu_custom_call.1} parent=11 // pred_region
          _
        $region104: #{tpu_custom_call.1} parent=11 // pred_fallthru
          _
        // Predicated region
        $region105: #{tpu_custom_call.1} parent=11 // pred_check
          %p1007 = pneg %p641
        $region106: #{tpu_custom_call.1} parent=11 // pred_check_branch
          %1009 = sbr.rel (%p1007) target = $region108
        $region107: #{tpu_custom_call.1} parent=11 // pred_region
          _
        $region108: #{tpu_custom_call.1} parent=11 // pred_fallthru
          _
        // Predicated region
        $region109: #{tpu_custom_call.1} parent=11 // pred_check
          %p1010 = pneg %p662
        $region110: #{tpu_custom_call.1} parent=11 // pred_check_branch
          %1012 = sbr.rel (%p1010) target = $region112
        $region111: #{tpu_custom_call.1} parent=11 // pred_region
          %s1014 = ssub.s32 512, 512
          %1015 = vsyncadd [#allocation27], %s1014
          %s1016 = sshll.u32 [#allocation28], 4
          %s1017 = int_to_ptr.vmem [resolvable:$true] %s1016
          %1022 = dma.hbm_to_vmem [thread:$0]  %s53, 512, %s1017, [#allocation27], 128, 128, 8
        $region112: #{tpu_custom_call.1} parent=11 // pred_fallthru
          _
        // Predicated region
        $region113: #{tpu_custom_call.1} parent=11 // pred_check
          %p1023 = pneg %p683
        $region114: #{tpu_custom_call.1} parent=11 // pred_check_branch
          %1025 = sbr.rel (%p1023) target = $region116
        $region115: #{tpu_custom_call.1} parent=11 // pred_region
          _
        $region116: #{tpu_custom_call.1} parent=11 // pred_fallthru
          _
        // Predicated region
        $region117: #{tpu_custom_call.1} parent=11 // pred_check
          %p1026 = pneg %p704
        $region118: #{tpu_custom_call.1} parent=11 // pred_check_branch
          %1028 = sbr.rel (%p1026) target = $region120
        $region119: #{tpu_custom_call.1} parent=11 // pred_region
          _
        $region120: #{tpu_custom_call.1} parent=11 // pred_fallthru
          _
        // Predicated region
        $region121: #{tpu_custom_call.1} parent=11 // pred_check
          %p1029 = pneg %p725
        $region122: #{tpu_custom_call.1} parent=11 // pred_check_branch
          %1031 = sbr.rel (%p1029) target = $region124
        $region123: #{tpu_custom_call.1} parent=11 // pred_region
          _
        $region124: #{tpu_custom_call.1} parent=11 // pred_fallthru
          _
        // Predicated region
        $region125: #{tpu_custom_call.1} parent=11 // pred_check
          %p1032 = pneg %p746
        $region126: #{tpu_custom_call.1} parent=11 // pred_check_branch
          %1034 = sbr.rel (%p1032) target = $region128
        $region127: #{tpu_custom_call.1} parent=11 // pred_region
          _
        $region128: #{tpu_custom_call.1} parent=11 // pred_fallthru
          _
        // Predicated region
        $region129: #{tpu_custom_call.1} parent=11 // pred_check
          %p1035 = pneg %p767
        $region130: #{tpu_custom_call.1} parent=11 // pred_check_branch
          %1037 = sbr.rel (%p1035) target = $region132
        $region131: #{tpu_custom_call.1} parent=11 // pred_region
          _
        $region132: #{tpu_custom_call.1} parent=11 // pred_fallthru
          _
      $region12: #{tpu_custom_call.1} parent=5 // pred_fallthru
        _
      %p1038 = scmp.lt.s32.totalorder %s85, 2
      // Predicated region
      $region133: #{tpu_custom_call.1} parent=5 // pred_check
        %p1039 = pneg %p1038
      $region134: #{tpu_custom_call.1} parent=5 // pred_check_branch
        %1041 = sbr.rel (%p1039) target = $region136
      $region135: #{tpu_custom_call.1} parent=5 // pred_region
        // Predicated region
        $region137: #{tpu_custom_call.1} parent=135 // pred_check
          %p1042 = pneg %p105
        $region138: #{tpu_custom_call.1} parent=135 // pred_check_branch
          %1044 = sbr.rel (%p1042) target = $region140
        $region139: #{tpu_custom_call.1} parent=135 // pred_region
          %s1045 = sand.u32 %s95, 1
          %s1046 = scalar_lea.sflag [#allocation3], %s1045
          %s1047 = sand.u32 %s95, 1
          %s1048 = smul.addr %s1047, 8
          %s1049 = scalar_lea.vmem [#allocation2], %s1048
          %s1051 = ssub.s32 128, 128
          %1052 = vsyncadd %s1046, %s1051
          %s1053 = smul.addr %s85, 128
          %s1054 = scalar_lea.hbm %s1, %s1053
          %s1056 = sshll.u32 %s1049, 4
          %s1057 = int_to_ptr.vmem [resolvable:$true] %s1056
          %1059 = dma.hbm_to_vmem [thread:$0]  %s1054, 128, %s1057, %s1046
        $region140: #{tpu_custom_call.1} parent=135 // pred_fallthru
          _
        // Predicated region
        $region141: #{tpu_custom_call.1} parent=135 // pred_check
          %p1060 = pneg %p131
        $region142: #{tpu_custom_call.1} parent=135 // pred_check_branch
          %1062 = sbr.rel (%p1060) target = $region144
        $region143: #{tpu_custom_call.1} parent=135 // pred_region
          %p1063 = scmp.lt.s32.totalorder %s85, 1
          %s1064 = scalar_select %p1063, %s85, 1
          %s1065 = smul.addr %s1064, 2
          %s1066 = smul.addr %s1065, 8
          %s1067 = scalar_lea.vmem %s3, %s1066
        $region144: #{tpu_custom_call.1} parent=135 // pred_fallthru
          _
      $region136: #{tpu_custom_call.1} parent=5 // pred_fallthru
        _
      %p1068 = scmp.le.s32.totalorder 1, %s85
      %p1069 = scmp.lt.s32.totalorder %s85, 3
      %p1070 = pnand %p1068, %p1069
      %p1071 = pneg %p1070
      // Predicated region
      $region145: #{tpu_custom_call.1} parent=5 // pred_check
        _
      $region146: #{tpu_custom_call.1} parent=5 // pred_check_branch
        %1073 = sbr.rel (%p1070) target = $region148
      $region147: #{tpu_custom_call.1} parent=5 // pred_region
        %s1074 = ssub.s32 %s85, 1
        %s1075 = sand.u32 %s98, 1
        %s1076 = scalar_lea.sflag [#allocation3], %s1075
        %s1077 = sand.u32 %s98, 1
        %s1078 = smul.addr %s1077, 8
        %s1079 = scalar_lea.vmem [#allocation2], %s1078
        // Predicated region
        $region149: #{tpu_custom_call.1} parent=147 // pred_check
          %p1080 = pneg %p111
        $region150: #{tpu_custom_call.1} parent=147 // pred_check_branch
          %1082 = sbr.rel (%p1080) target = $region152
        $region151: #{tpu_custom_call.1} parent=147 // pred_region
          %1083 = dma.done %s1076, 128
        $region152: #{tpu_custom_call.1} parent=147 // pred_fallthru
          _
        // Predicated region
        $region153: #{tpu_custom_call.1} parent=147 // pred_check
          %p1084 = pneg %p179
        $region154: #{tpu_custom_call.1} parent=147 // pred_check_branch
          %1086 = sbr.rel (%p1084) target = $region156
        $region155: #{tpu_custom_call.1} parent=147 // pred_region
          %1087 = dma.done [#allocation6], 16
        $region156: #{tpu_custom_call.1} parent=147 // pred_fallthru
          _
        // Predicated region
        $region157: #{tpu_custom_call.1} parent=147 // pred_check
          %p1088 = pneg %p221
        $region158: #{tpu_custom_call.1} parent=147 // pred_check_branch
          %1090 = sbr.rel (%p1088) target = $region160
        $region159: #{tpu_custom_call.1} parent=147 // pred_region
          %1091 = dma.done [#allocation6], 16
        $region160: #{tpu_custom_call.1} parent=147 // pred_fallthru
          _
        // Predicated region
        $region161: #{tpu_custom_call.1} parent=147 // pred_check
          %p1092 = pneg %p242
        $region162: #{tpu_custom_call.1} parent=147 // pred_check_branch
          %1094 = sbr.rel (%p1092) target = $region164
        $region163: #{tpu_custom_call.1} parent=147 // pred_region
          %1095 = dma.done [#allocation9], 512
        $region164: #{tpu_custom_call.1} parent=147 // pred_fallthru
          _
        // Predicated region
        $region165: #{tpu_custom_call.1} parent=147 // pred_check
          %p1096 = pneg %p263
        $region166: #{tpu_custom_call.1} parent=147 // pred_check_branch
          %1098 = sbr.rel (%p1096) target = $region168
        $region167: #{tpu_custom_call.1} parent=147 // pred_region
          %1099 = dma.done [#allocation9], 16
        $region168: #{tpu_custom_call.1} parent=147 // pred_fallthru
          _
        // Predicated region
        $region169: #{tpu_custom_call.1} parent=147 // pred_check
          %p1100 = pneg %p284
        $region170: #{tpu_custom_call.1} parent=147 // pred_check_branch
          %1102 = sbr.rel (%p1100) target = $region172
        $region171: #{tpu_custom_call.1} parent=147 // pred_region
          %1103 = dma.done [#allocation12], 512
        $region172: #{tpu_custom_call.1} parent=147 // pred_fallthru
          _
        // Predicated region
        $region173: #{tpu_custom_call.1} parent=147 // pred_check
          %p1104 = pneg %p305
        $region174: #{tpu_custom_call.1} parent=147 // pred_check_branch
          %1106 = sbr.rel (%p1104) target = $region176
        $region175: #{tpu_custom_call.1} parent=147 // pred_region
          %1107 = dma.done [#allocation12], 16
        $region176: #{tpu_custom_call.1} parent=147 // pred_fallthru
          _
        // Predicated region
        $region177: #{tpu_custom_call.1} parent=147 // pred_check
          %p1108 = pneg %p326
        $region178: #{tpu_custom_call.1} parent=147 // pred_check_branch
          %1110 = sbr.rel (%p1108) target = $region180
        $region179: #{tpu_custom_call.1} parent=147 // pred_region
          %1111 = dma.done [#allocation15], 16
        $region180: #{tpu_custom_call.1} parent=147 // pred_fallthru
          _
        // Predicated region
        $region181: #{tpu_custom_call.1} parent=147 // pred_check
          %p1112 = pneg %p347
        $region182: #{tpu_custom_call.1} parent=147 // pred_check_branch
          %1114 = sbr.rel (%p1112) target = $region184
        $region183: #{tpu_custom_call.1} parent=147 // pred_region
          %1115 = dma.done [#allocation15], 16
        $region184: #{tpu_custom_call.1} parent=147 // pred_fallthru
          _
        // Predicated region
        $region185: #{tpu_custom_call.1} parent=147 // pred_check
          %p1116 = pneg %p368
        $region186: #{tpu_custom_call.1} parent=147 // pred_check_branch
          %1118 = sbr.rel (%p1116) target = $region188
        $region187: #{tpu_custom_call.1} parent=147 // pred_region
          %1119 = dma.done [#allocation18], 16
        $region188: #{tpu_custom_call.1} parent=147 // pred_fallthru
          _
        // Predicated region
        $region189: #{tpu_custom_call.1} parent=147 // pred_check
          %p1120 = pneg %p389
        $region190: #{tpu_custom_call.1} parent=147 // pred_check_branch
          %1122 = sbr.rel (%p1120) target = $region192
        $region191: #{tpu_custom_call.1} parent=147 // pred_region
          %1123 = dma.done [#allocation18], 16
        $region192: #{tpu_custom_call.1} parent=147 // pred_fallthru
          _
        // Predicated region
        $region193: #{tpu_custom_call.1} parent=147 // pred_check
          %p1124 = pneg %p410
        $region194: #{tpu_custom_call.1} parent=147 // pred_check_branch
          %1126 = sbr.rel (%p1124) target = $region196
        $region195: #{tpu_custom_call.1} parent=147 // pred_region
          %1127 = dma.done [#allocation21], 512
        $region196: #{tpu_custom_call.1} parent=147 // pred_fallthru
          _
        // Predicated region
        $region197: #{tpu_custom_call.1} parent=147 // pred_check
          %p1128 = pneg %p431
        $region198: #{tpu_custom_call.1} parent=147 // pred_check_branch
          %1130 = sbr.rel (%p1128) target = $region200
        $region199: #{tpu_custom_call.1} parent=147 // pred_region
          %1131 = dma.done [#allocation21], 16
        $region200: #{tpu_custom_call.1} parent=147 // pred_fallthru
          _
        // Predicated region
        $region201: #{tpu_custom_call.1} parent=147 // pred_check
          %p1132 = pneg %p452
        $region202: #{tpu_custom_call.1} parent=147 // pred_check_branch
          %1134 = sbr.rel (%p1132) target = $region204
        $region203: #{tpu_custom_call.1} parent=147 // pred_region
          %1135 = dma.done [#allocation24], 512
        $region204: #{tpu_custom_call.1} parent=147 // pred_fallthru
          _
        // Predicated region
        $region205: #{tpu_custom_call.1} parent=147 // pred_check
          %p1136 = pneg %p473
        $region206: #{tpu_custom_call.1} parent=147 // pred_check_branch
          %1138 = sbr.rel (%p1136) target = $region208
        $region207: #{tpu_custom_call.1} parent=147 // pred_region
          %1139 = dma.done [#allocation24], 16
        $region208: #{tpu_custom_call.1} parent=147 // pred_fallthru
          _
        // Predicated region
        $region209: #{tpu_custom_call.1} parent=147 // pred_check
          %p1140 = pneg %p536
        $region210: #{tpu_custom_call.1} parent=147 // pred_check_branch
          %1142 = sbr.rel (%p1140) target = $region212
        $region211: #{tpu_custom_call.1} parent=147 // pred_region
          %1143 = dma.done [#allocation27], 512
        $region212: #{tpu_custom_call.1} parent=147 // pred_fallthru
          _
        // Predicated region
        $region213: #{tpu_custom_call.1} parent=147 // pred_check
          %p1144 = pneg %p662
        $region214: #{tpu_custom_call.1} parent=147 // pred_check_branch
          %1146 = sbr.rel (%p1144) target = $region216
        $region215: #{tpu_custom_call.1} parent=147 // pred_region
          %1147 = dma.done [#allocation27], 512
        $region216: #{tpu_custom_call.1} parent=147 // pred_fallthru
          _
        %s1148 = sand.u32 %s98, 1
        %s1149 = scalar_lea.sflag [#allocation3], %s1148
        %s1150 = sand.u32 %s98, 1
        %s1151 = smul.addr %s1150, 8
        %s1152 = scalar_lea.vmem [#allocation2], %s1151
        %p1153 = pneg %p111
        %p1154 = pneg %p108
        %p1155 = scmp.lt.s32.totalorder %s90, 1
        %s1156 = scalar_select %p1155, %s90, 1
        %s1157 = smul.addr %s1156, 2
        %s1158 = smul.addr %s1157, 8
        %s1159 = scalar_lea.vmem %s3, %s1158
        %p1160 = pneg %p137
        %p1161 = pneg %p134
        %p1162 = pneg %p158
        %p1163 = pneg %p155
        %p1164 = pneg %p179
        %p1165 = pneg %p176
        %p1166 = pneg %p200
        %p1167 = pneg %p197
        %p1168 = pneg %p221
        %p1169 = pneg %p218
        %p1170 = pneg %p242
        %p1171 = pneg %p239
        %p1172 = pneg %p263
        %p1173 = pneg %p260
        %p1174 = pneg %p284
        %p1175 = pneg %p281
        %p1176 = pneg %p305
        %p1177 = pneg %p302
        %p1178 = pneg %p326
        %p1179 = pneg %p323
        %p1180 = pneg %p347
        %p1181 = pneg %p344
        %p1182 = pneg %p368
        %p1183 = pneg %p365
        %p1184 = pneg %p389
        %p1185 = pneg %p386
        %p1186 = pneg %p410
        %p1187 = pneg %p407
        %p1188 = pneg %p431
        %p1189 = pneg %p428
        %p1190 = pneg %p452
        %p1191 = pneg %p449
        %p1192 = pneg %p473
        %p1193 = pneg %p470
        %p1194 = pneg %p494
        %p1195 = pneg %p491
        %p1196 = pneg %p515
        %p1197 = pneg %p512
        %p1198 = pneg %p536
        %p1199 = pneg %p533
        %p1200 = pneg %p557
        %p1201 = pneg %p554
        %p1202 = pneg %p578
        %p1203 = pneg %p575
        %p1204 = pneg %p599
        %p1205 = pneg %p596
        %p1206 = pneg %p620
        %p1207 = pneg %p617
        %p1208 = pneg %p641
        %p1209 = pneg %p638
        %p1210 = pneg %p662
        %p1211 = pneg %p659
        %p1212 = pneg %p683
        %p1213 = pneg %p680
        %p1214 = pneg %p704
        %p1215 = pneg %p701
        %p1216 = pneg %p725
        %p1217 = pneg %p722
        %p1218 = pneg %p746
        %p1219 = pneg %p743
        %p1220 = pneg %p767
        %p1221 = pneg %p764
        %p1222 = pneg %p793
        %p1223 = pneg %p790
        %s1224 = sand.u32 %s780, 1
        %s1225 = scalar_lea.sflag [#allocation4], %s1224
        %s1226 = sand.u32 %s780, 1
        %s1227 = smul.addr %s1226, 8
        %s1228 = scalar_lea.vmem [#allocation29], %s1227
        %p1229 = scmp.lt.s32.totalorder %s90, 1
        %s1230 = scalar_select %p1229, %s90, 1
        %s1231 = smul.addr %s1230, 2
        %s1232 = smul.addr %s1231, 8
        %s1233 = scalar_lea.vmem %s3, %s1232
        %v1234 = vld [vmem:[%s1079] sm:$0xff]
        %v1235 = vld [vmem:[%s1233] sm:$0xff]
        %v1236 = vld [vmem:[%s1233 + $0x8] sm:$0xff]
        %v1237 = vld [vmem:[%s5] sm:$0xff]
        %v1238 = vld [vmem:[%s5 + $0x8] sm:$0xff]
        %v1239 = vld [vmem:[%s5 + $0x10] sm:$0xff]
        %v1240 = vld [vmem:[%s5 + $0x18] sm:$0xff]
        %v1241 = vld [vmem:[#allocation5] sm:$0x1]
        %v1242 = vld [vmem:[%s9] sm:$0xff]
        %v1243 = vld [vmem:[%s9 + $0x8] sm:$0xff]
        %v1244 = vld [vmem:[%s9 + $0x10] sm:$0xff]
        %v1245 = vld [vmem:[%s9 + $0x18] sm:$0xff]
        %v1246 = vld [vmem:[#allocation7] sm:$0x1]
        %v1247 = vld [vmem:[#allocation8] sm:$0xff]
        %v1248 = vld [vmem:[#allocation8 + $0x8] sm:$0xff]
        %v1249 = vld [vmem:[#allocation8 + $0x10] sm:$0xff]
        %v1250 = vld [vmem:[#allocation8 + $0x18] sm:$0xff]
        %v1251 = vld [vmem:[#allocation10] sm:$0x1]
        %v1252 = vld [vmem:[#allocation11] sm:$0xff]
        %v1253 = vld [vmem:[#allocation11 + $0x8] sm:$0xff]
        %v1254 = vld [vmem:[#allocation11 + $0x10] sm:$0xff]
        %v1255 = vld [vmem:[#allocation11 + $0x18] sm:$0xff]
        %v1256 = vld [vmem:[#allocation13] sm:$0x1]
        %v1257 = vld [vmem:[#allocation14] sm:$0x1]
        %v1258 = vld [vmem:[#allocation16] sm:$0x1]
        %v1260 = vlaneseq
        %v1261 = vshrl.u32 %v1260, 7
        %v1262 = vsub.s32 0, %v1261
        %v1263 = vrot.slane %v1241, %v1262
        %vm1265 = vcmask 261120
        %v1267 = vsel %vm1265, %v1234, 0
        %1269 = vmatprep.subr.mxu0 0.0
        %1270 = vmatpush1.msra.mxu0 0.0
        %1271 = vmatprep.subr.mxu0 0.0
        %1272 = vmatpush1.msra.mxu0 0.0
        %1273 = vmatprep.subr.mxu0 0.0
        %1274 = vmatpush1.msra.mxu0 0.0
        %1275 = vmatprep.subr.mxu0 0.0
        %1276 = vmatpush1.msra.mxu0 0.0
        %1277 = vmatprep.subr.mxu0 0.0
        %1278 = vmatpush1.msra.mxu0 0.0
        %1279 = vmatprep.subr.mxu0 0.0
        %1280 = vmatpush1.msra.mxu0 0.0
        %1281 = vmatprep.subr.mxu0 0.0
        %1282 = vmatpush1.msra.mxu0 0.0
        %1283 = vmatprep.subr.mxu0 0.0
        %1284 = vmatpush1.msra.mxu0 0.0
        %1285 = vmatprep.subr.mxu0 0.0
        %1286 = vmatpush1.msra.mxu0 0.0
        %1287 = vmatprep.subr.mxu0 0.0
        %1288 = vmatpush1.msra.mxu0 0.0
        %1289 = vmatprep.subr.mxu0 0.0
        %1290 = vmatpush1.msra.mxu0 0.0
        %1291 = vmatprep.subr.mxu0 0.0
        %1292 = vmatpush1.msra.mxu0 0.0
        %1293 = vmatprep.subr.mxu0 0.0
        %1294 = vmatpush1.msra.mxu0 %v1240
        %1295 = vmatprep.subr.mxu0 0.0
        %1296 = vmatpush1.msra.mxu0 %v1239
        %1297 = vmatprep.subr.mxu0 0.0
        %1298 = vmatpush1.msra.mxu0 %v1238
        %1299 = vmatprep.subr.mxu0 0.0
        %1300 = vmatpush1.msra.mxu0 %v1237
        %1301 = vmatprep.subr.mxu0 0.0
        %1302 = vmatpush2.msra.mxu0 0.0
        %1303 = vmatprep.subr.mxu0 0.0
        %1304 = vmatpush2.msra.mxu0 0.0
        %1305 = vmatprep.subr.mxu0 0.0
        %1306 = vmatpush2.msra.mxu0 0.0
        %1307 = vmatprep.subr.mxu0 0.0
        %1308 = vmatpush2.msra.mxu0 0.0
        %1309 = vmatprep.subr.mxu0 0.0
        %1310 = vmatpush2.msra.mxu0 0.0
        %1311 = vmatprep.subr.mxu0 0.0
        %1312 = vmatpush2.msra.mxu0 0.0
        %1313 = vmatprep.subr.mxu0 0.0
        %1314 = vmatpush2.msra.mxu0 0.0
        %1315 = vmatprep.subr.mxu0 0.0
        %1316 = vmatpush2.msra.mxu0 0.0
        %1317 = vmatprep.subr.mxu0 0.0
        %1318 = vmatpush2.msra.mxu0 0.0
        %1319 = vmatprep.subr.mxu0 0.0
        %1320 = vmatpush2.msra.mxu0 0.0
        %1321 = vmatprep.subr.mxu0 0.0
        %1322 = vmatpush2.msra.mxu0 0.0
        %1323 = vmatprep.subr.mxu0 0.0
        %1324 = vmatpush2.msra.mxu0 0.0
        %1325 = vmatprep.subr.mxu0 0.0
        %1326 = vmatpush2.msra.mxu0 0.0
        %1327 = vmatprep.subr.mxu0 0.0
        %1328 = vmatpush2.msra.mxu0 0.0
        %1329 = vmatprep.subr.mxu0 0.0
        %1330 = vmatpush2.msra.mxu0 0.0
        %1331 = vmatprep.subr.mxu0 0.0
        %1332 = vmatpush2.msra.mxu0 0.0
        %1333 = vmatprep.mubr.f32.mxu0 0.0
        %1334 = vmatmul.mubr.f32.gmra.mxu0 %v1267
        %v1335 = vpop.f32.mrf.mxu0
        %v1336 = vadd.f32 %v1263, %v1335
        %v1337 = vpop.f32.mrf.mxu0
        %1338 = vdwg.mxu0
        %v1339 = vmul.f32 %v1336, 0.35355338
        %v1341 = vlaneseq
        %v1342 = vshrl.u32 %v1341, 7
        %v1343 = vsub.s32 0, %v1342
        %v1344 = vrot.slane %v1246, %v1343
        %1346 = vmatprep.subr.mxu0 0.0
        %1347 = vmatpush1.msra.mxu0 0.0
        %1348 = vmatprep.subr.mxu0 0.0
        %1349 = vmatpush1.msra.mxu0 0.0
        %1350 = vmatprep.subr.mxu0 0.0
        %1351 = vmatpush1.msra.mxu0 0.0
        %1352 = vmatprep.subr.mxu0 0.0
        %1353 = vmatpush1.msra.mxu0 0.0
        %1354 = vmatprep.subr.mxu0 0.0
        %1355 = vmatpush1.msra.mxu0 0.0
        %1356 = vmatprep.subr.mxu0 0.0
        %1357 = vmatpush1.msra.mxu0 0.0
        %1358 = vmatprep.subr.mxu0 0.0
        %1359 = vmatpush1.msra.mxu0 0.0
        %1360 = vmatprep.subr.mxu0 0.0
        %1361 = vmatpush1.msra.mxu0 0.0
        %1362 = vmatprep.subr.mxu0 0.0
        %1363 = vmatpush1.msra.mxu0 0.0
        %1364 = vmatprep.subr.mxu0 0.0
        %1365 = vmatpush1.msra.mxu0 0.0
        %1366 = vmatprep.subr.mxu0 0.0
        %1367 = vmatpush1.msra.mxu0 0.0
        %1368 = vmatprep.subr.mxu0 0.0
        %1369 = vmatpush1.msra.mxu0 0.0
        %1370 = vmatprep.subr.mxu0 0.0
        %1371 = vmatpush1.msra.mxu0 %v1245
        %1372 = vmatprep.subr.mxu0 0.0
        %1373 = vmatpush1.msra.mxu0 %v1244
        %1374 = vmatprep.subr.mxu0 0.0
        %1375 = vmatpush1.msra.mxu0 %v1243
        %1376 = vmatprep.subr.mxu0 0.0
        %1377 = vmatpush1.msra.mxu0 %v1242
        %1378 = vmatprep.subr.mxu0 0.0
        %1379 = vmatpush2.msra.mxu0 0.0
        %1380 = vmatprep.subr.mxu0 0.0
        %1381 = vmatpush2.msra.mxu0 0.0
        %1382 = vmatprep.subr.mxu0 0.0
        %1383 = vmatpush2.msra.mxu0 0.0
        %1384 = vmatprep.subr.mxu0 0.0
        %1385 = vmatpush2.msra.mxu0 0.0
        %1386 = vmatprep.subr.mxu0 0.0
        %1387 = vmatpush2.msra.mxu0 0.0
        %1388 = vmatprep.subr.mxu0 0.0
        %1389 = vmatpush2.msra.mxu0 0.0
        %1390 = vmatprep.subr.mxu0 0.0
        %1391 = vmatpush2.msra.mxu0 0.0
        %1392 = vmatprep.subr.mxu0 0.0
        %1393 = vmatpush2.msra.mxu0 0.0
        %1394 = vmatprep.subr.mxu0 0.0
        %1395 = vmatpush2.msra.mxu0 0.0
        %1396 = vmatprep.subr.mxu0 0.0
        %1397 = vmatpush2.msra.mxu0 0.0
        %1398 = vmatprep.subr.mxu0 0.0
        %1399 = vmatpush2.msra.mxu0 0.0
        %1400 = vmatprep.subr.mxu0 0.0
        %1401 = vmatpush2.msra.mxu0 0.0
        %1402 = vmatprep.subr.mxu0 0.0
        %1403 = vmatpush2.msra.mxu0 0.0
        %1404 = vmatprep.subr.mxu0 0.0
        %1405 = vmatpush2.msra.mxu0 0.0
        %1406 = vmatprep.subr.mxu0 0.0
        %1407 = vmatpush2.msra.mxu0 0.0
        %1408 = vmatprep.subr.mxu0 0.0
        %1409 = vmatpush2.msra.mxu0 0.0
        %1410 = vmatprep.mubr.f32.mxu0 0.0
        %1411 = vmatmul.mubr.f32.gmra.mxu0 %v1267
        %v1412 = vpop.f32.mrf.mxu0
        %v1413 = vadd.f32 %v1344, %v1412
        %v1414 = vpop.f32.mrf.mxu0
        %1415 = vdwg.mxu0
        %v1417 = vlaneseq
        %v1418 = vshrl.u32 %v1417, 7
        %v1419 = vsub.s32 0, %v1418
        %v1420 = vrot.slane %v1251, %v1419
        %1422 = vmatprep.subr.mxu0 0.0
        %1423 = vmatpush1.msra.mxu0 0.0
        %1424 = vmatprep.subr.mxu0 0.0
        %1425 = vmatpush1.msra.mxu0 0.0
        %1426 = vmatprep.subr.mxu0 0.0
        %1427 = vmatpush1.msra.mxu0 0.0
        %1428 = vmatprep.subr.mxu0 0.0
        %1429 = vmatpush1.msra.mxu0 0.0
        %1430 = vmatprep.subr.mxu0 0.0
        %1431 = vmatpush1.msra.mxu0 0.0
        %1432 = vmatprep.subr.mxu0 0.0
        %1433 = vmatpush1.msra.mxu0 0.0
        %1434 = vmatprep.subr.mxu0 0.0
        %1435 = vmatpush1.msra.mxu0 0.0
        %1436 = vmatprep.subr.mxu0 0.0
        %1437 = vmatpush1.msra.mxu0 0.0
        %1438 = vmatprep.subr.mxu0 0.0
        %1439 = vmatpush1.msra.mxu0 0.0
        %1440 = vmatprep.subr.mxu0 0.0
        %1441 = vmatpush1.msra.mxu0 0.0
        %1442 = vmatprep.subr.mxu0 0.0
        %1443 = vmatpush1.msra.mxu0 0.0
        %1444 = vmatprep.subr.mxu0 0.0
        %1445 = vmatpush1.msra.mxu0 0.0
        %1446 = vmatprep.subr.mxu0 0.0
        %1447 = vmatpush1.msra.mxu0 %v1250
        %1448 = vmatprep.subr.mxu0 0.0
        %1449 = vmatpush1.msra.mxu0 %v1249
        %1450 = vmatprep.subr.mxu0 0.0
        %1451 = vmatpush1.msra.mxu0 %v1248
        %1452 = vmatprep.subr.mxu0 0.0
        %1453 = vmatpush1.msra.mxu0 %v1247
        %1454 = vmatprep.subr.mxu0 0.0
        %1455 = vmatpush2.msra.mxu0 0.0
        %1456 = vmatprep.subr.mxu0 0.0
        %1457 = vmatpush2.msra.mxu0 0.0
        %1458 = vmatprep.subr.mxu0 0.0
        %1459 = vmatpush2.msra.mxu0 0.0
        %1460 = vmatprep.subr.mxu0 0.0
        %1461 = vmatpush2.msra.mxu0 0.0
        %1462 = vmatprep.subr.mxu0 0.0
        %1463 = vmatpush2.msra.mxu0 0.0
        %1464 = vmatprep.subr.mxu0 0.0
        %1465 = vmatpush2.msra.mxu0 0.0
        %1466 = vmatprep.subr.mxu0 0.0
        %1467 = vmatpush2.msra.mxu0 0.0
        %1468 = vmatprep.subr.mxu0 0.0
        %1469 = vmatpush2.msra.mxu0 0.0
        %1470 = vmatprep.subr.mxu0 0.0
        %1471 = vmatpush2.msra.mxu0 0.0
        %1472 = vmatprep.subr.mxu0 0.0
        %1473 = vmatpush2.msra.mxu0 0.0
        %1474 = vmatprep.subr.mxu0 0.0
        %1475 = vmatpush2.msra.mxu0 0.0
        %1476 = vmatprep.subr.mxu0 0.0
        %1477 = vmatpush2.msra.mxu0 0.0
        %1478 = vmatprep.subr.mxu0 0.0
        %1479 = vmatpush2.msra.mxu0 0.0
        %1480 = vmatprep.subr.mxu0 0.0
        %1481 = vmatpush2.msra.mxu0 0.0
        %1482 = vmatprep.subr.mxu0 0.0
        %1483 = vmatpush2.msra.mxu0 0.0
        %1484 = vmatprep.subr.mxu0 0.0
        %1485 = vmatpush2.msra.mxu0 0.0
        %1486 = vmatprep.mubr.f32.mxu0 0.0
        %1487 = vmatmul.mubr.f32.gmra.mxu0 %v1267
        %v1488 = vpop.f32.mrf.mxu0
        %v1489 = vadd.f32 %v1420, %v1488
        %v1490 = vpop.f32.mrf.mxu0
        %1491 = vdwg.mxu0
        %vm1492 = vcmask 64512
        %v1494 = vsel %vm1492, %v1339, 0
        %v1497 = vsel %vm1492, %v1413, 0
        %1499 = vmatprep.subr.mxu0 0.0
        %1500 = vmatpush1.xpose.msra.mxu0 0.0
        %1501 = vmatprep.subr.mxu0 0.0
        %1502 = vmatpush1.xpose.msra.mxu0 0.0
        %1503 = vmatprep.subr.mxu0 0.0
        %1504 = vmatpush1.xpose.msra.mxu0 0.0
        %1505 = vmatprep.subr.mxu0 0.0
        %1506 = vmatpush1.xpose.msra.mxu0 0.0
        %1507 = vmatprep.subr.mxu0 0.0
        %1508 = vmatpush1.xpose.msra.mxu0 0.0
        %1509 = vmatprep.subr.mxu0 0.0
        %1510 = vmatpush1.xpose.msra.mxu0 0.0
        %1511 = vmatprep.subr.mxu0 0.0
        %1512 = vmatpush1.xpose.msra.mxu0 0.0
        %1513 = vmatprep.subr.mxu0 0.0
        %1514 = vmatpush1.xpose.msra.mxu0 0.0
        %1515 = vmatprep.subr.mxu0 0.0
        %1516 = vmatpush1.xpose.msra.mxu0 0.0
        %1517 = vmatprep.subr.mxu0 0.0
        %1518 = vmatpush1.xpose.msra.mxu0 0.0
        %1519 = vmatprep.subr.mxu0 0.0
        %1520 = vmatpush1.xpose.msra.mxu0 0.0
        %1521 = vmatprep.subr.mxu0 0.0
        %1522 = vmatpush1.xpose.msra.mxu0 0.0
        %1523 = vmatprep.subr.mxu0 0.0
        %1524 = vmatpush1.xpose.msra.mxu0 0.0
        %1525 = vmatprep.subr.mxu0 0.0
        %1526 = vmatpush1.xpose.msra.mxu0 0.0
        %1527 = vmatprep.subr.mxu0 0.0
        %1528 = vmatpush1.xpose.msra.mxu0 0.0
        %1529 = vmatprep.subr.mxu0 0.0
        %1530 = vmatpush1.xpose.msra.mxu0 %v1497
        %1531 = vmatprep.subr.mxu0 0.0
        %1532 = vmatpush2.xpose.msra.mxu0 0.0
        %1533 = vmatprep.subr.mxu0 0.0
        %1534 = vmatpush2.xpose.msra.mxu0 0.0
        %1535 = vmatprep.subr.mxu0 0.0
        %1536 = vmatpush2.xpose.msra.mxu0 0.0
        %1537 = vmatprep.subr.mxu0 0.0
        %1538 = vmatpush2.xpose.msra.mxu0 0.0
        %1539 = vmatprep.subr.mxu0 0.0
        %1540 = vmatpush2.xpose.msra.mxu0 0.0
        %1541 = vmatprep.subr.mxu0 0.0
        %1542 = vmatpush2.xpose.msra.mxu0 0.0
        %1543 = vmatprep.subr.mxu0 0.0
        %1544 = vmatpush2.xpose.msra.mxu0 0.0
        %1545 = vmatprep.subr.mxu0 0.0
        %1546 = vmatpush2.xpose.msra.mxu0 0.0
        %1547 = vmatprep.subr.mxu0 0.0
        %1548 = vmatpush2.xpose.msra.mxu0 0.0
        %1549 = vmatprep.subr.mxu0 0.0
        %1550 = vmatpush2.xpose.msra.mxu0 0.0
        %1551 = vmatprep.subr.mxu0 0.0
        %1552 = vmatpush2.xpose.msra.mxu0 0.0
        %1553 = vmatprep.subr.mxu0 0.0
        %1554 = vmatpush2.xpose.msra.mxu0 0.0
        %1555 = vmatprep.subr.mxu0 0.0
        %1556 = vmatpush2.xpose.msra.mxu0 0.0
        %1557 = vmatprep.subr.mxu0 0.0
        %1558 = vmatpush2.xpose.msra.mxu0 0.0
        %1559 = vmatprep.subr.mxu0 0.0
        %1560 = vmatpush2.xpose.msra.mxu0 0.0
        %1561 = vmatprep.subr.mxu0 0.0
        %1562 = vmatpush2.xpose.msra.mxu0 0.0
        %1563 = vmatprep.mubr.f32.mxu0 0.0
        %1564 = vmatmul.mubr.f32.gmra.mxu0 %v1494
        %v1565 = vpop.f32.mrf.mxu0
        %v1566 = vadd.f32 0.0, %v1565
        %v1567 = vpop.f32.mrf.mxu0
        %1568 = vdwg.mxu0
        %v1569 = vsel %vm1492, %v1566, -inf
        %1570 = vmax.xlane.f32.xlu0 %v1569
        %v1571 = vpop.xlane.xlu0 %1570
        %v1572 = vsub.f32 %v1566, %v1571
        %v1573 = vmul.f32 %v1572, 1.442695
        %v1574 = vpow.pop %v1573
        %v1575 = vsel %vm1492, %v1574, 0.0
        %1576 = vadd.xlane.f32.xlu0 %v1575
        %v1577 = vpop.xlane.xlu0 %1576
        %v1578 = vrcp.pop %v1577
        %v1579 = vmul.f32 %v1574, %v1578
        %v1581 = vsel %vm1492, %v1579, 0
        %1583 = vmatprep.subr.mxu0 0.0
        %1584 = vmatpush1.msra.mxu0 0.0
        %1585 = vmatprep.subr.mxu0 0.0
        %1586 = vmatpush1.msra.mxu0 0.0
        %1587 = vmatprep.subr.mxu0 0.0
        %1588 = vmatpush1.msra.mxu0 0.0
        %1589 = vmatprep.subr.mxu0 0.0
        %1590 = vmatpush1.msra.mxu0 0.0
        %1591 = vmatprep.subr.mxu0 0.0
        %1592 = vmatpush1.msra.mxu0 0.0
        %1593 = vmatprep.subr.mxu0 0.0
        %1594 = vmatpush1.msra.mxu0 0.0
        %1595 = vmatprep.subr.mxu0 0.0
        %1596 = vmatpush1.msra.mxu0 0.0
        %1597 = vmatprep.subr.mxu0 0.0
        %1598 = vmatpush1.msra.mxu0 0.0
        %1599 = vmatprep.subr.mxu0 0.0
        %1600 = vmatpush1.msra.mxu0 0.0
        %1601 = vmatprep.subr.mxu0 0.0
        %1602 = vmatpush1.msra.mxu0 0.0
        %1603 = vmatprep.subr.mxu0 0.0
        %1604 = vmatpush1.msra.mxu0 0.0
        %1605 = vmatprep.subr.mxu0 0.0
        %1606 = vmatpush1.msra.mxu0 0.0
        %1607 = vmatprep.subr.mxu0 0.0
        %1608 = vmatpush1.msra.mxu0 0.0
        %1609 = vmatprep.subr.mxu0 0.0
        %1610 = vmatpush1.msra.mxu0 0.0
        %1611 = vmatprep.subr.mxu0 0.0
        %1612 = vmatpush1.msra.mxu0 0.0
        %1613 = vmatprep.subr.mxu0 0.0
        %1614 = vmatpush1.msra.mxu0 %v1489
        %1615 = vmatprep.subr.mxu0 0.0
        %1616 = vmatpush2.msra.mxu0 0.0
        %1617 = vmatprep.subr.mxu0 0.0
        %1618 = vmatpush2.msra.mxu0 0.0
        %1619 = vmatprep.subr.mxu0 0.0
        %1620 = vmatpush2.msra.mxu0 0.0
        %1621 = vmatprep.subr.mxu0 0.0
        %1622 = vmatpush2.msra.mxu0 0.0
        %1623 = vmatprep.subr.mxu0 0.0
        %1624 = vmatpush2.msra.mxu0 0.0
        %1625 = vmatprep.subr.mxu0 0.0
        %1626 = vmatpush2.msra.mxu0 0.0
        %1627 = vmatprep.subr.mxu0 0.0
        %1628 = vmatpush2.msra.mxu0 0.0
        %1629 = vmatprep.subr.mxu0 0.0
        %1630 = vmatpush2.msra.mxu0 0.0
        %1631 = vmatprep.subr.mxu0 0.0
        %1632 = vmatpush2.msra.mxu0 0.0
        %1633 = vmatprep.subr.mxu0 0.0
        %1634 = vmatpush2.msra.mxu0 0.0
        %1635 = vmatprep.subr.mxu0 0.0
        %1636 = vmatpush2.msra.mxu0 0.0
        %1637 = vmatprep.subr.mxu0 0.0
        %1638 = vmatpush2.msra.mxu0 0.0
        %1639 = vmatprep.subr.mxu0 0.0
        %1640 = vmatpush2.msra.mxu0 0.0
        %1641 = vmatprep.subr.mxu0 0.0
        %1642 = vmatpush2.msra.mxu0 0.0
        %1643 = vmatprep.subr.mxu0 0.0
        %1644 = vmatpush2.msra.mxu0 0.0
        %1645 = vmatprep.subr.mxu0 0.0
        %1646 = vmatpush2.msra.mxu0 0.0
        %1647 = vmatprep.mubr.f32.mxu0 0.0
        %1648 = vmatmul.mubr.f32.gmra.mxu0 %v1581
        %v1649 = vpop.f32.mrf.mxu0
        %v1650 = vadd.f32 0.0, %v1649
        %v1651 = vpop.f32.mrf.mxu0
        %1652 = vdwg.mxu0
        %1653 = vrot.lane.b32.xlu0 %v1339, 120
        %v1654 = vpop.permute.xlu0 %1653
        %1655 = vrot.lane.b32.xlu0 %v1413, 120
        %v1656 = vpop.permute.xlu0 %1655
        %v1657 = vsel %vm1492, %v1654, 0
        %v1659 = vsel %vm1492, %v1656, 0
        %1661 = vmatprep.subr.mxu0 0.0
        %1662 = vmatpush1.xpose.msra.mxu0 0.0
        %1663 = vmatprep.subr.mxu0 0.0
        %1664 = vmatpush1.xpose.msra.mxu0 0.0
        %1665 = vmatprep.subr.mxu0 0.0
        %1666 = vmatpush1.xpose.msra.mxu0 0.0
        %1667 = vmatprep.subr.mxu0 0.0
        %1668 = vmatpush1.xpose.msra.mxu0 0.0
        %1669 = vmatprep.subr.mxu0 0.0
        %1670 = vmatpush1.xpose.msra.mxu0 0.0
        %1671 = vmatprep.subr.mxu0 0.0
        %1672 = vmatpush1.xpose.msra.mxu0 0.0
        %1673 = vmatprep.subr.mxu0 0.0
        %1674 = vmatpush1.xpose.msra.mxu0 0.0
        %1675 = vmatprep.subr.mxu0 0.0
        %1676 = vmatpush1.xpose.msra.mxu0 0.0
        %1677 = vmatprep.subr.mxu0 0.0
        %1678 = vmatpush1.xpose.msra.mxu0 0.0
        %1679 = vmatprep.subr.mxu0 0.0
        %1680 = vmatpush1.xpose.msra.mxu0 0.0
        %1681 = vmatprep.subr.mxu0 0.0
        %1682 = vmatpush1.xpose.msra.mxu0 0.0
        %1683 = vmatprep.subr.mxu0 0.0
        %1684 = vmatpush1.xpose.msra.mxu0 0.0
        %1685 = vmatprep.subr.mxu0 0.0
        %1686 = vmatpush1.xpose.msra.mxu0 0.0
        %1687 = vmatprep.subr.mxu0 0.0
        %1688 = vmatpush1.xpose.msra.mxu0 0.0
        %1689 = vmatprep.subr.mxu0 0.0
        %1690 = vmatpush1.xpose.msra.mxu0 0.0
        %1691 = vmatprep.subr.mxu0 0.0
        %1692 = vmatpush1.xpose.msra.mxu0 %v1659
        %1693 = vmatprep.subr.mxu0 0.0
        %1694 = vmatpush2.xpose.msra.mxu0 0.0
        %1695 = vmatprep.subr.mxu0 0.0
        %1696 = vmatpush2.xpose.msra.mxu0 0.0
        %1697 = vmatprep.subr.mxu0 0.0
        %1698 = vmatpush2.xpose.msra.mxu0 0.0
        %1699 = vmatprep.subr.mxu0 0.0
        %1700 = vmatpush2.xpose.msra.mxu0 0.0
        %1701 = vmatprep.subr.mxu0 0.0
        %1702 = vmatpush2.xpose.msra.mxu0 0.0
        %1703 = vmatprep.subr.mxu0 0.0
        %1704 = vmatpush2.xpose.msra.mxu0 0.0
        %1705 = vmatprep.subr.mxu0 0.0
        %1706 = vmatpush2.xpose.msra.mxu0 0.0
        %1707 = vmatprep.subr.mxu0 0.0
        %1708 = vmatpush2.xpose.msra.mxu0 0.0
        %1709 = vmatprep.subr.mxu0 0.0
        %1710 = vmatpush2.xpose.msra.mxu0 0.0
        %1711 = vmatprep.subr.mxu0 0.0
        %1712 = vmatpush2.xpose.msra.mxu0 0.0
        %1713 = vmatprep.subr.mxu0 0.0
        %1714 = vmatpush2.xpose.msra.mxu0 0.0
        %1715 = vmatprep.subr.mxu0 0.0
        %1716 = vmatpush2.xpose.msra.mxu0 0.0
        %1717 = vmatprep.subr.mxu0 0.0
        %1718 = vmatpush2.xpose.msra.mxu0 0.0
        %1719 = vmatprep.subr.mxu0 0.0
        %1720 = vmatpush2.xpose.msra.mxu0 0.0
        %1721 = vmatprep.subr.mxu0 0.0
        %1722 = vmatpush2.xpose.msra.mxu0 0.0
        %1723 = vmatprep.subr.mxu0 0.0
        %1724 = vmatpush2.xpose.msra.mxu0 0.0
        %1725 = vmatprep.mubr.f32.mxu0 0.0
        %1726 = vmatmul.mubr.f32.gmra.mxu0 %v1657
        %v1727 = vpop.f32.mrf.mxu0
        %v1728 = vadd.f32 0.0, %v1727
        %v1729 = vpop.f32.mrf.mxu0
        %1730 = vdwg.mxu0
        %v1731 = vsel %vm1492, %v1728, -inf
        %1732 = vmax.xlane.f32.xlu0 %v1731
        %v1733 = vpop.xlane.xlu0 %1732
        %v1734 = vsub.f32 %v1728, %v1733
        %v1735 = vmul.f32 %v1734, 1.442695
        %v1736 = vpow.pop %v1735
        %v1737 = vsel %vm1492, %v1736, 0.0
        %1738 = vadd.xlane.f32.xlu0 %v1737
        %v1739 = vpop.xlane.xlu0 %1738
        %v1740 = vrcp.pop %v1739
        %v1741 = vmul.f32 %v1736, %v1740
        %1743 = vrot.lane.b32.xlu0 %v1489, 120
        %v1744 = vpop.permute.xlu0 %1743
        %v1747 = vsel %vm1492, %v1741, 0
        %1749 = vmatprep.subr.mxu0 0.0
        %1750 = vmatpush1.msra.mxu0 0.0
        %1751 = vmatprep.subr.mxu0 0.0
        %1752 = vmatpush1.msra.mxu0 0.0
        %1753 = vmatprep.subr.mxu0 0.0
        %1754 = vmatpush1.msra.mxu0 0.0
        %1755 = vmatprep.subr.mxu0 0.0
        %1756 = vmatpush1.msra.mxu0 0.0
        %1757 = vmatprep.subr.mxu0 0.0
        %1758 = vmatpush1.msra.mxu0 0.0
        %1759 = vmatprep.subr.mxu0 0.0
        %1760 = vmatpush1.msra.mxu0 0.0
        %1761 = vmatprep.subr.mxu0 0.0
        %1762 = vmatpush1.msra.mxu0 0.0
        %1763 = vmatprep.subr.mxu0 0.0
        %1764 = vmatpush1.msra.mxu0 0.0
        %1765 = vmatprep.subr.mxu0 0.0
        %1766 = vmatpush1.msra.mxu0 0.0
        %1767 = vmatprep.subr.mxu0 0.0
        %1768 = vmatpush1.msra.mxu0 0.0
        %1769 = vmatprep.subr.mxu0 0.0
        %1770 = vmatpush1.msra.mxu0 0.0
        %1771 = vmatprep.subr.mxu0 0.0
        %1772 = vmatpush1.msra.mxu0 0.0
        %1773 = vmatprep.subr.mxu0 0.0
        %1774 = vmatpush1.msra.mxu0 0.0
        %1775 = vmatprep.subr.mxu0 0.0
        %1776 = vmatpush1.msra.mxu0 0.0
        %1777 = vmatprep.subr.mxu0 0.0
        %1778 = vmatpush1.msra.mxu0 0.0
        %1779 = vmatprep.subr.mxu0 0.0
        %1780 = vmatpush1.msra.mxu0 %v1744
        %1781 = vmatprep.subr.mxu0 0.0
        %1782 = vmatpush2.msra.mxu0 0.0
        %1783 = vmatprep.subr.mxu0 0.0
        %1784 = vmatpush2.msra.mxu0 0.0
        %1785 = vmatprep.subr.mxu0 0.0
        %1786 = vmatpush2.msra.mxu0 0.0
        %1787 = vmatprep.subr.mxu0 0.0
        %1788 = vmatpush2.msra.mxu0 0.0
        %1789 = vmatprep.subr.mxu0 0.0
        %1790 = vmatpush2.msra.mxu0 0.0
        %1791 = vmatprep.subr.mxu0 0.0
        %1792 = vmatpush2.msra.mxu0 0.0
        %1793 = vmatprep.subr.mxu0 0.0
        %1794 = vmatpush2.msra.mxu0 0.0
        %1795 = vmatprep.subr.mxu0 0.0
        %1796 = vmatpush2.msra.mxu0 0.0
        %1797 = vmatprep.subr.mxu0 0.0
        %1798 = vmatpush2.msra.mxu0 0.0
        %1799 = vmatprep.subr.mxu0 0.0
        %1800 = vmatpush2.msra.mxu0 0.0
        %1801 = vmatprep.subr.mxu0 0.0
        %1802 = vmatpush2.msra.mxu0 0.0
        %1803 = vmatprep.subr.mxu0 0.0
        %1804 = vmatpush2.msra.mxu0 0.0
        %1805 = vmatprep.subr.mxu0 0.0
        %1806 = vmatpush2.msra.mxu0 0.0
        %1807 = vmatprep.subr.mxu0 0.0
        %1808 = vmatpush2.msra.mxu0 0.0
        %1809 = vmatprep.subr.mxu0 0.0
        %1810 = vmatpush2.msra.mxu0 0.0
        %1811 = vmatprep.subr.mxu0 0.0
        %1812 = vmatpush2.msra.mxu0 0.0
        %1813 = vmatprep.mubr.f32.mxu0 0.0
        %1814 = vmatmul.mubr.f32.gmra.mxu0 %v1747
        %v1815 = vpop.f32.mrf.mxu0
        %v1816 = vadd.f32 0.0, %v1815
        %v1817 = vpop.f32.mrf.mxu0
        %1818 = vdwg.mxu0
        %v1820 = vsel %vm1492, %v1816, 0
        %1822 = vmatprep.subr.mxu0 0.0
        %1823 = vmatpush1.msra.mxu0 0.0
        %1824 = vmatprep.subr.mxu0 0.0
        %1825 = vmatpush1.msra.mxu0 0.0
        %1826 = vmatprep.subr.mxu0 0.0
        %1827 = vmatpush1.msra.mxu0 0.0
        %1828 = vmatprep.subr.mxu0 0.0
        %1829 = vmatpush1.msra.mxu0 0.0
        %1830 = vmatprep.subr.mxu0 0.0
        %1831 = vmatpush1.msra.mxu0 0.0
        %1832 = vmatprep.subr.mxu0 0.0
        %1833 = vmatpush1.msra.mxu0 0.0
        %1834 = vmatprep.subr.mxu0 0.0
        %1835 = vmatpush1.msra.mxu0 0.0
        %1836 = vmatprep.subr.mxu0 0.0
        %1837 = vmatpush1.msra.mxu0 0.0
        %1838 = vmatprep.subr.mxu0 0.0
        %1839 = vmatpush1.msra.mxu0 0.0
        %1840 = vmatprep.subr.mxu0 0.0
        %1841 = vmatpush1.msra.mxu0 0.0
        %1842 = vmatprep.subr.mxu0 0.0
        %1843 = vmatpush1.msra.mxu0 0.0
        %1844 = vmatprep.subr.mxu0 0.0
        %1845 = vmatpush1.msra.mxu0 0.0
        %1846 = vmatprep.subr.mxu0 0.0
        %1847 = vmatpush1.msra.mxu0 0.0
        %1848 = vmatprep.subr.mxu0 0.0
        %1849 = vmatpush1.msra.mxu0 0.0
        %1850 = vmatprep.subr.mxu0 0.0
        %1851 = vmatpush1.msra.mxu0 0.0
        %1852 = vmatprep.subr.mxu0 0.0
        %1853 = vmatpush1.msra.mxu0 %v1253
        %1854 = vmatprep.subr.mxu0 0.0
        %1855 = vmatpush2.msra.mxu0 0.0
        %1856 = vmatprep.subr.mxu0 0.0
        %1857 = vmatpush2.msra.mxu0 0.0
        %1858 = vmatprep.subr.mxu0 0.0
        %1859 = vmatpush2.msra.mxu0 0.0
        %1860 = vmatprep.subr.mxu0 0.0
        %1861 = vmatpush2.msra.mxu0 0.0
        %1862 = vmatprep.subr.mxu0 0.0
        %1863 = vmatpush2.msra.mxu0 0.0
        %1864 = vmatprep.subr.mxu0 0.0
        %1865 = vmatpush2.msra.mxu0 0.0
        %1866 = vmatprep.subr.mxu0 0.0
        %1867 = vmatpush2.msra.mxu0 0.0
        %1868 = vmatprep.subr.mxu0 0.0
        %1869 = vmatpush2.msra.mxu0 0.0
        %1870 = vmatprep.subr.mxu0 0.0
        %1871 = vmatpush2.msra.mxu0 0.0
        %1872 = vmatprep.subr.mxu0 0.0
        %1873 = vmatpush2.msra.mxu0 0.0
        %1874 = vmatprep.subr.mxu0 0.0
        %1875 = vmatpush2.msra.mxu0 0.0
        %1876 = vmatprep.subr.mxu0 0.0
        %1877 = vmatpush2.msra.mxu0 0.0
        %1878 = vmatprep.subr.mxu0 0.0
        %1879 = vmatpush2.msra.mxu0 0.0
        %1880 = vmatprep.subr.mxu0 0.0
        %1881 = vmatpush2.msra.mxu0 0.0
        %1882 = vmatprep.subr.mxu0 0.0
        %1883 = vmatpush2.msra.mxu0 0.0
        %1884 = vmatprep.subr.mxu0 0.0
        %1885 = vmatpush2.msra.mxu0 0.0
        %1886 = vmatprep.mubr.f32.mxu0 0.0
        %1887 = vmatmul.mubr.f32.gmra.mxu0 %v1820
        %v1888 = vpop.f32.mrf.mxu0
        %v1889 = vadd.f32 0.0, %v1888
        %v1890 = vpop.f32.mrf.mxu0
        %1891 = vdwg.mxu0
        %v1893 = vsel %vm1492, %v1650, 0
        %1895 = vmatprep.subr.mxu0 0.0
        %1896 = vmatpush1.msra.mxu0 0.0
        %1897 = vmatprep.subr.mxu0 0.0
        %1898 = vmatpush1.msra.mxu0 0.0
        %1899 = vmatprep.subr.mxu0 0.0
        %1900 = vmatpush1.msra.mxu0 0.0
        %1901 = vmatprep.subr.mxu0 0.0
        %1902 = vmatpush1.msra.mxu0 0.0
        %1903 = vmatprep.subr.mxu0 0.0
        %1904 = vmatpush1.msra.mxu0 0.0
        %1905 = vmatprep.subr.mxu0 0.0
        %1906 = vmatpush1.msra.mxu0 0.0
        %1907 = vmatprep.subr.mxu0 0.0
        %1908 = vmatpush1.msra.mxu0 0.0
        %1909 = vmatprep.subr.mxu0 0.0
        %1910 = vmatpush1.msra.mxu0 0.0
        %1911 = vmatprep.subr.mxu0 0.0
        %1912 = vmatpush1.msra.mxu0 0.0
        %1913 = vmatprep.subr.mxu0 0.0
        %1914 = vmatpush1.msra.mxu0 0.0
        %1915 = vmatprep.subr.mxu0 0.0
        %1916 = vmatpush1.msra.mxu0 0.0
        %1917 = vmatprep.subr.mxu0 0.0
        %1918 = vmatpush1.msra.mxu0 0.0
        %1919 = vmatprep.subr.mxu0 0.0
        %1920 = vmatpush1.msra.mxu0 0.0
        %1921 = vmatprep.subr.mxu0 0.0
        %1922 = vmatpush1.msra.mxu0 0.0
        %1923 = vmatprep.subr.mxu0 0.0
        %1924 = vmatpush1.msra.mxu0 0.0
        %1925 = vmatprep.subr.mxu0 0.0
        %1926 = vmatpush1.msra.mxu0 %v1252
        %1927 = vmatprep.subr.mxu0 0.0
        %1928 = vmatpush2.msra.mxu0 0.0
        %1929 = vmatprep.subr.mxu0 0.0
        %1930 = vmatpush2.msra.mxu0 0.0
        %1931 = vmatprep.subr.mxu0 0.0
        %1932 = vmatpush2.msra.mxu0 0.0
        %1933 = vmatprep.subr.mxu0 0.0
        %1934 = vmatpush2.msra.mxu0 0.0
        %1935 = vmatprep.subr.mxu0 0.0
        %1936 = vmatpush2.msra.mxu0 0.0
        %1937 = vmatprep.subr.mxu0 0.0
        %1938 = vmatpush2.msra.mxu0 0.0
        %1939 = vmatprep.subr.mxu0 0.0
        %1940 = vmatpush2.msra.mxu0 0.0
        %1941 = vmatprep.subr.mxu0 0.0
        %1942 = vmatpush2.msra.mxu0 0.0
        %1943 = vmatprep.subr.mxu0 0.0
        %1944 = vmatpush2.msra.mxu0 0.0
        %1945 = vmatprep.subr.mxu0 0.0
        %1946 = vmatpush2.msra.mxu0 0.0
        %1947 = vmatprep.subr.mxu0 0.0
        %1948 = vmatpush2.msra.mxu0 0.0
        %1949 = vmatprep.subr.mxu0 0.0
        %1950 = vmatpush2.msra.mxu0 0.0
        %1951 = vmatprep.subr.mxu0 0.0
        %1952 = vmatpush2.msra.mxu0 0.0
        %1953 = vmatprep.subr.mxu0 0.0
        %1954 = vmatpush2.msra.mxu0 0.0
        %1955 = vmatprep.subr.mxu0 0.0
        %1956 = vmatpush2.msra.mxu0 0.0
        %1957 = vmatprep.subr.mxu0 0.0
        %1958 = vmatpush2.msra.mxu0 0.0
        %1959 = vmatprep.mubr.f32.mxu0 0.0
        %1960 = vmatmul.mubr.f32.gmra.mxu0 %v1893
        %v1961 = vpop.f32.mrf.mxu0
        %v1962 = vadd.f32 %v1889, %v1961
        %v1963 = vpop.f32.mrf.mxu0
        %1964 = vdwg.mxu0
        %1965 = vrot.lane.b32.xlu0 %v1339, 112
        %v1966 = vpop.permute.xlu0 %1965
        %1967 = vrot.lane.b32.xlu0 %v1413, 112
        %v1968 = vpop.permute.xlu0 %1967
        %v1969 = vsel %vm1492, %v1966, 0
        %v1971 = vsel %vm1492, %v1968, 0
        %1973 = vmatprep.subr.mxu0 0.0
        %1974 = vmatpush1.xpose.msra.mxu0 0.0
        %1975 = vmatprep.subr.mxu0 0.0
        %1976 = vmatpush1.xpose.msra.mxu0 0.0
        %1977 = vmatprep.subr.mxu0 0.0
        %1978 = vmatpush1.xpose.msra.mxu0 0.0
        %1979 = vmatprep.subr.mxu0 0.0
        %1980 = vmatpush1.xpose.msra.mxu0 0.0
        %1981 = vmatprep.subr.mxu0 0.0
        %1982 = vmatpush1.xpose.msra.mxu0 0.0
        %1983 = vmatprep.subr.mxu0 0.0
        %1984 = vmatpush1.xpose.msra.mxu0 0.0
        %1985 = vmatprep.subr.mxu0 0.0
        %1986 = vmatpush1.xpose.msra.mxu0 0.0
        %1987 = vmatprep.subr.mxu0 0.0
        %1988 = vmatpush1.xpose.msra.mxu0 0.0
        %1989 = vmatprep.subr.mxu0 0.0
        %1990 = vmatpush1.xpose.msra.mxu0 0.0
        %1991 = vmatprep.subr.mxu0 0.0
        %1992 = vmatpush1.xpose.msra.mxu0 0.0
        %1993 = vmatprep.subr.mxu0 0.0
        %1994 = vmatpush1.xpose.msra.mxu0 0.0
        %1995 = vmatprep.subr.mxu0 0.0
        %1996 = vmatpush1.xpose.msra.mxu0 0.0
        %1997 = vmatprep.subr.mxu0 0.0
        %1998 = vmatpush1.xpose.msra.mxu0 0.0
        %1999 = vmatprep.subr.mxu0 0.0
        %2000 = vmatpush1.xpose.msra.mxu0 0.0
        %2001 = vmatprep.subr.mxu0 0.0
        %2002 = vmatpush1.xpose.msra.mxu0 0.0
        %2003 = vmatprep.subr.mxu0 0.0
        %2004 = vmatpush1.xpose.msra.mxu0 %v1971
        %2005 = vmatprep.subr.mxu0 0.0
        %2006 = vmatpush2.xpose.msra.mxu0 0.0
        %2007 = vmatprep.subr.mxu0 0.0
        %2008 = vmatpush2.xpose.msra.mxu0 0.0
        %2009 = vmatprep.subr.mxu0 0.0
        %2010 = vmatpush2.xpose.msra.mxu0 0.0
        %2011 = vmatprep.subr.mxu0 0.0
        %2012 = vmatpush2.xpose.msra.mxu0 0.0
        %2013 = vmatprep.subr.mxu0 0.0
        %2014 = vmatpush2.xpose.msra.mxu0 0.0
        %2015 = vmatprep.subr.mxu0 0.0
        %2016 = vmatpush2.xpose.msra.mxu0 0.0
        %2017 = vmatprep.subr.mxu0 0.0
        %2018 = vmatpush2.xpose.msra.mxu0 0.0
        %2019 = vmatprep.subr.mxu0 0.0
        %2020 = vmatpush2.xpose.msra.mxu0 0.0
        %2021 = vmatprep.subr.mxu0 0.0
        %2022 = vmatpush2.xpose.msra.mxu0 0.0
        %2023 = vmatprep.subr.mxu0 0.0
        %2024 = vmatpush2.xpose.msra.mxu0 0.0
        %2025 = vmatprep.subr.mxu0 0.0
        %2026 = vmatpush2.xpose.msra.mxu0 0.0
        %2027 = vmatprep.subr.mxu0 0.0
        %2028 = vmatpush2.xpose.msra.mxu0 0.0
        %2029 = vmatprep.subr.mxu0 0.0
        %2030 = vmatpush2.xpose.msra.mxu0 0.0
        %2031 = vmatprep.subr.mxu0 0.0
        %2032 = vmatpush2.xpose.msra.mxu0 0.0
        %2033 = vmatprep.subr.mxu0 0.0
        %2034 = vmatpush2.xpose.msra.mxu0 0.0
        %2035 = vmatprep.subr.mxu0 0.0
        %2036 = vmatpush2.xpose.msra.mxu0 0.0
        %2037 = vmatprep.mubr.f32.mxu0 0.0
        %2038 = vmatmul.mubr.f32.gmra.mxu0 %v1969
        %v2039 = vpop.f32.mrf.mxu0
        %v2040 = vadd.f32 0.0, %v2039
        %v2041 = vpop.f32.mrf.mxu0
        %2042 = vdwg.mxu0
        %v2043 = vsel %vm1492, %v2040, -inf
        %2044 = vmax.xlane.f32.xlu0 %v2043
        %v2045 = vpop.xlane.xlu0 %2044
        %v2046 = vsub.f32 %v2040, %v2045
        %v2047 = vmul.f32 %v2046, 1.442695
        %v2048 = vpow.pop %v2047
        %v2049 = vsel %vm1492, %v2048, 0.0
        %2050 = vadd.xlane.f32.xlu0 %v2049
        %v2051 = vpop.xlane.xlu0 %2050
        %v2052 = vrcp.pop %v2051
        %v2053 = vmul.f32 %v2048, %v2052
        %2054 = vrot.lane.b32.xlu0 %v1489, 112
        %v2055 = vpop.permute.xlu0 %2054
        %v2058 = vsel %vm1492, %v2053, 0
        %2060 = vmatprep.subr.mxu0 0.0
        %2061 = vmatpush1.msra.mxu0 0.0
        %2062 = vmatprep.subr.mxu0 0.0
        %2063 = vmatpush1.msra.mxu0 0.0
        %2064 = vmatprep.subr.mxu0 0.0
        %2065 = vmatpush1.msra.mxu0 0.0
        %2066 = vmatprep.subr.mxu0 0.0
        %2067 = vmatpush1.msra.mxu0 0.0
        %2068 = vmatprep.subr.mxu0 0.0
        %2069 = vmatpush1.msra.mxu0 0.0
        %2070 = vmatprep.subr.mxu0 0.0
        %2071 = vmatpush1.msra.mxu0 0.0
        %2072 = vmatprep.subr.mxu0 0.0
        %2073 = vmatpush1.msra.mxu0 0.0
        %2074 = vmatprep.subr.mxu0 0.0
        %2075 = vmatpush1.msra.mxu0 0.0
        %2076 = vmatprep.subr.mxu0 0.0
        %2077 = vmatpush1.msra.mxu0 0.0
        %2078 = vmatprep.subr.mxu0 0.0
        %2079 = vmatpush1.msra.mxu0 0.0
        %2080 = vmatprep.subr.mxu0 0.0
        %2081 = vmatpush1.msra.mxu0 0.0
        %2082 = vmatprep.subr.mxu0 0.0
        %2083 = vmatpush1.msra.mxu0 0.0
        %2084 = vmatprep.subr.mxu0 0.0
        %2085 = vmatpush1.msra.mxu0 0.0
        %2086 = vmatprep.subr.mxu0 0.0
        %2087 = vmatpush1.msra.mxu0 0.0
        %2088 = vmatprep.subr.mxu0 0.0
        %2089 = vmatpush1.msra.mxu0 0.0
        %2090 = vmatprep.subr.mxu0 0.0
        %2091 = vmatpush1.msra.mxu0 %v2055
        %2092 = vmatprep.subr.mxu0 0.0
        %2093 = vmatpush2.msra.mxu0 0.0
        %2094 = vmatprep.subr.mxu0 0.0
        %2095 = vmatpush2.msra.mxu0 0.0
        %2096 = vmatprep.subr.mxu0 0.0
        %2097 = vmatpush2.msra.mxu0 0.0
        %2098 = vmatprep.subr.mxu0 0.0
        %2099 = vmatpush2.msra.mxu0 0.0
        %2100 = vmatprep.subr.mxu0 0.0
        %2101 = vmatpush2.msra.mxu0 0.0
        %2102 = vmatprep.subr.mxu0 0.0
        %2103 = vmatpush2.msra.mxu0 0.0
        %2104 = vmatprep.subr.mxu0 0.0
        %2105 = vmatpush2.msra.mxu0 0.0
        %2106 = vmatprep.subr.mxu0 0.0
        %2107 = vmatpush2.msra.mxu0 0.0
        %2108 = vmatprep.subr.mxu0 0.0
        %2109 = vmatpush2.msra.mxu0 0.0
        %2110 = vmatprep.subr.mxu0 0.0
        %2111 = vmatpush2.msra.mxu0 0.0
        %2112 = vmatprep.subr.mxu0 0.0
        %2113 = vmatpush2.msra.mxu0 0.0
        %2114 = vmatprep.subr.mxu0 0.0
        %2115 = vmatpush2.msra.mxu0 0.0
        %2116 = vmatprep.subr.mxu0 0.0
        %2117 = vmatpush2.msra.mxu0 0.0
        %2118 = vmatprep.subr.mxu0 0.0
        %2119 = vmatpush2.msra.mxu0 0.0
        %2120 = vmatprep.subr.mxu0 0.0
        %2121 = vmatpush2.msra.mxu0 0.0
        %2122 = vmatprep.subr.mxu0 0.0
        %2123 = vmatpush2.msra.mxu0 0.0
        %2124 = vmatprep.mubr.f32.mxu0 0.0
        %2125 = vmatmul.mubr.f32.gmra.mxu0 %v2058
        %v2126 = vpop.f32.mrf.mxu0
        %v2127 = vadd.f32 0.0, %v2126
        %v2128 = vpop.f32.mrf.mxu0
        %2129 = vdwg.mxu0
        %v2131 = vsel %vm1492, %v2127, 0
        %2133 = vmatprep.subr.mxu0 0.0
        %2134 = vmatpush1.msra.mxu0 0.0
        %2135 = vmatprep.subr.mxu0 0.0
        %2136 = vmatpush1.msra.mxu0 0.0
        %2137 = vmatprep.subr.mxu0 0.0
        %2138 = vmatpush1.msra.mxu0 0.0
        %2139 = vmatprep.subr.mxu0 0.0
        %2140 = vmatpush1.msra.mxu0 0.0
        %2141 = vmatprep.subr.mxu0 0.0
        %2142 = vmatpush1.msra.mxu0 0.0
        %2143 = vmatprep.subr.mxu0 0.0
        %2144 = vmatpush1.msra.mxu0 0.0
        %2145 = vmatprep.subr.mxu0 0.0
        %2146 = vmatpush1.msra.mxu0 0.0
        %2147 = vmatprep.subr.mxu0 0.0
        %2148 = vmatpush1.msra.mxu0 0.0
        %2149 = vmatprep.subr.mxu0 0.0
        %2150 = vmatpush1.msra.mxu0 0.0
        %2151 = vmatprep.subr.mxu0 0.0
        %2152 = vmatpush1.msra.mxu0 0.0
        %2153 = vmatprep.subr.mxu0 0.0
        %2154 = vmatpush1.msra.mxu0 0.0
        %2155 = vmatprep.subr.mxu0 0.0
        %2156 = vmatpush1.msra.mxu0 0.0
        %2157 = vmatprep.subr.mxu0 0.0
        %2158 = vmatpush1.msra.mxu0 0.0
        %2159 = vmatprep.subr.mxu0 0.0
        %2160 = vmatpush1.msra.mxu0 0.0
        %2161 = vmatprep.subr.mxu0 0.0
        %2162 = vmatpush1.msra.mxu0 0.0
        %2163 = vmatprep.subr.mxu0 0.0
        %2164 = vmatpush1.msra.mxu0 %v1254
        %2165 = vmatprep.subr.mxu0 0.0
        %2166 = vmatpush2.msra.mxu0 0.0
        %2167 = vmatprep.subr.mxu0 0.0
        %2168 = vmatpush2.msra.mxu0 0.0
        %2169 = vmatprep.subr.mxu0 0.0
        %2170 = vmatpush2.msra.mxu0 0.0
        %2171 = vmatprep.subr.mxu0 0.0
        %2172 = vmatpush2.msra.mxu0 0.0
        %2173 = vmatprep.subr.mxu0 0.0
        %2174 = vmatpush2.msra.mxu0 0.0
        %2175 = vmatprep.subr.mxu0 0.0
        %2176 = vmatpush2.msra.mxu0 0.0
        %2177 = vmatprep.subr.mxu0 0.0
        %2178 = vmatpush2.msra.mxu0 0.0
        %2179 = vmatprep.subr.mxu0 0.0
        %2180 = vmatpush2.msra.mxu0 0.0
        %2181 = vmatprep.subr.mxu0 0.0
        %2182 = vmatpush2.msra.mxu0 0.0
        %2183 = vmatprep.subr.mxu0 0.0
        %2184 = vmatpush2.msra.mxu0 0.0
        %2185 = vmatprep.subr.mxu0 0.0
        %2186 = vmatpush2.msra.mxu0 0.0
        %2187 = vmatprep.subr.mxu0 0.0
        %2188 = vmatpush2.msra.mxu0 0.0
        %2189 = vmatprep.subr.mxu0 0.0
        %2190 = vmatpush2.msra.mxu0 0.0
        %2191 = vmatprep.subr.mxu0 0.0
        %2192 = vmatpush2.msra.mxu0 0.0
        %2193 = vmatprep.subr.mxu0 0.0
        %2194 = vmatpush2.msra.mxu0 0.0
        %2195 = vmatprep.subr.mxu0 0.0
        %2196 = vmatpush2.msra.mxu0 0.0
        %2197 = vmatprep.mubr.f32.mxu0 0.0
        %2198 = vmatmul.mubr.f32.gmra.mxu0 %v2131
        %v2199 = vpop.f32.mrf.mxu0
        %v2200 = vadd.f32 0.0, %v2199
        %v2201 = vpop.f32.mrf.mxu0
        %2202 = vdwg.mxu0
        %v2203 = vadd.f32 %v1962, %v2200
        %2204 = vrot.lane.b32.xlu0 %v1339, 104
        %v2205 = vpop.permute.xlu0 %2204
        %2206 = vrot.lane.b32.xlu0 %v1413, 104
        %v2207 = vpop.permute.xlu0 %2206
        %v2208 = vsel %vm1492, %v2205, 0
        %v2210 = vsel %vm1492, %v2207, 0
        %2212 = vmatprep.subr.mxu0 0.0
        %2213 = vmatpush1.xpose.msra.mxu0 0.0
        %2214 = vmatprep.subr.mxu0 0.0
        %2215 = vmatpush1.xpose.msra.mxu0 0.0
        %2216 = vmatprep.subr.mxu0 0.0
        %2217 = vmatpush1.xpose.msra.mxu0 0.0
        %2218 = vmatprep.subr.mxu0 0.0
        %2219 = vmatpush1.xpose.msra.mxu0 0.0
        %2220 = vmatprep.subr.mxu0 0.0
        %2221 = vmatpush1.xpose.msra.mxu0 0.0
        %2222 = vmatprep.subr.mxu0 0.0
        %2223 = vmatpush1.xpose.msra.mxu0 0.0
        %2224 = vmatprep.subr.mxu0 0.0
        %2225 = vmatpush1.xpose.msra.mxu0 0.0
        %2226 = vmatprep.subr.mxu0 0.0
        %2227 = vmatpush1.xpose.msra.mxu0 0.0
        %2228 = vmatprep.subr.mxu0 0.0
        %2229 = vmatpush1.xpose.msra.mxu0 0.0
        %2230 = vmatprep.subr.mxu0 0.0
        %2231 = vmatpush1.xpose.msra.mxu0 0.0
        %2232 = vmatprep.subr.mxu0 0.0
        %2233 = vmatpush1.xpose.msra.mxu0 0.0
        %2234 = vmatprep.subr.mxu0 0.0
        %2235 = vmatpush1.xpose.msra.mxu0 0.0
        %2236 = vmatprep.subr.mxu0 0.0
        %2237 = vmatpush1.xpose.msra.mxu0 0.0
        %2238 = vmatprep.subr.mxu0 0.0
        %2239 = vmatpush1.xpose.msra.mxu0 0.0
        %2240 = vmatprep.subr.mxu0 0.0
        %2241 = vmatpush1.xpose.msra.mxu0 0.0
        %2242 = vmatprep.subr.mxu0 0.0
        %2243 = vmatpush1.xpose.msra.mxu0 %v2210
        %2244 = vmatprep.subr.mxu0 0.0
        %2245 = vmatpush2.xpose.msra.mxu0 0.0
        %2246 = vmatprep.subr.mxu0 0.0
        %2247 = vmatpush2.xpose.msra.mxu0 0.0
        %2248 = vmatprep.subr.mxu0 0.0
        %2249 = vmatpush2.xpose.msra.mxu0 0.0
        %2250 = vmatprep.subr.mxu0 0.0
        %2251 = vmatpush2.xpose.msra.mxu0 0.0
        %2252 = vmatprep.subr.mxu0 0.0
        %2253 = vmatpush2.xpose.msra.mxu0 0.0
        %2254 = vmatprep.subr.mxu0 0.0
        %2255 = vmatpush2.xpose.msra.mxu0 0.0
        %2256 = vmatprep.subr.mxu0 0.0
        %2257 = vmatpush2.xpose.msra.mxu0 0.0
        %2258 = vmatprep.subr.mxu0 0.0
        %2259 = vmatpush2.xpose.msra.mxu0 0.0
        %2260 = vmatprep.subr.mxu0 0.0
        %2261 = vmatpush2.xpose.msra.mxu0 0.0
        %2262 = vmatprep.subr.mxu0 0.0
        %2263 = vmatpush2.xpose.msra.mxu0 0.0
        %2264 = vmatprep.subr.mxu0 0.0
        %2265 = vmatpush2.xpose.msra.mxu0 0.0
        %2266 = vmatprep.subr.mxu0 0.0
        %2267 = vmatpush2.xpose.msra.mxu0 0.0
        %2268 = vmatprep.subr.mxu0 0.0
        %2269 = vmatpush2.xpose.msra.mxu0 0.0
        %2270 = vmatprep.subr.mxu0 0.0
        %2271 = vmatpush2.xpose.msra.mxu0 0.0
        %2272 = vmatprep.subr.mxu0 0.0
        %2273 = vmatpush2.xpose.msra.mxu0 0.0
        %2274 = vmatprep.subr.mxu0 0.0
        %2275 = vmatpush2.xpose.msra.mxu0 0.0
        %2276 = vmatprep.mubr.f32.mxu0 0.0
        %2277 = vmatmul.mubr.f32.gmra.mxu0 %v2208
        %v2278 = vpop.f32.mrf.mxu0
        %v2279 = vadd.f32 0.0, %v2278
        %v2280 = vpop.f32.mrf.mxu0
        %2281 = vdwg.mxu0
        %v2282 = vsel %vm1492, %v2279, -inf
        %2283 = vmax.xlane.f32.xlu0 %v2282
        %v2284 = vpop.xlane.xlu0 %2283
        %v2285 = vsub.f32 %v2279, %v2284
        %v2286 = vmul.f32 %v2285, 1.442695
        %v2287 = vpow.pop %v2286
        %v2288 = vsel %vm1492, %v2287, 0.0
        %2289 = vadd.xlane.f32.xlu0 %v2288
        %v2290 = vpop.xlane.xlu0 %2289
        %v2291 = vrcp.pop %v2290
        %v2292 = vmul.f32 %v2287, %v2291
        %2293 = vrot.lane.b32.xlu0 %v1489, 104
        %v2294 = vpop.permute.xlu0 %2293
        %v2297 = vsel %vm1492, %v2292, 0
        %2299 = vmatprep.subr.mxu0 0.0
        %2300 = vmatpush1.msra.mxu0 0.0
        %2301 = vmatprep.subr.mxu0 0.0
        %2302 = vmatpush1.msra.mxu0 0.0
        %2303 = vmatprep.subr.mxu0 0.0
        %2304 = vmatpush1.msra.mxu0 0.0
        %2305 = vmatprep.subr.mxu0 0.0
        %2306 = vmatpush1.msra.mxu0 0.0
        %2307 = vmatprep.subr.mxu0 0.0
        %2308 = vmatpush1.msra.mxu0 0.0
        %2309 = vmatprep.subr.mxu0 0.0
        %2310 = vmatpush1.msra.mxu0 0.0
        %2311 = vmatprep.subr.mxu0 0.0
        %2312 = vmatpush1.msra.mxu0 0.0
        %2313 = vmatprep.subr.mxu0 0.0
        %2314 = vmatpush1.msra.mxu0 0.0
        %2315 = vmatprep.subr.mxu0 0.0
        %2316 = vmatpush1.msra.mxu0 0.0
        %2317 = vmatprep.subr.mxu0 0.0
        %2318 = vmatpush1.msra.mxu0 0.0
        %2319 = vmatprep.subr.mxu0 0.0
        %2320 = vmatpush1.msra.mxu0 0.0
        %2321 = vmatprep.subr.mxu0 0.0
        %2322 = vmatpush1.msra.mxu0 0.0
        %2323 = vmatprep.subr.mxu0 0.0
        %2324 = vmatpush1.msra.mxu0 0.0
        %2325 = vmatprep.subr.mxu0 0.0
        %2326 = vmatpush1.msra.mxu0 0.0
        %2327 = vmatprep.subr.mxu0 0.0
        %2328 = vmatpush1.msra.mxu0 0.0
        %2329 = vmatprep.subr.mxu0 0.0
        %2330 = vmatpush1.msra.mxu0 %v2294
        %2331 = vmatprep.subr.mxu0 0.0
        %2332 = vmatpush2.msra.mxu0 0.0
        %2333 = vmatprep.subr.mxu0 0.0
        %2334 = vmatpush2.msra.mxu0 0.0
        %2335 = vmatprep.subr.mxu0 0.0
        %2336 = vmatpush2.msra.mxu0 0.0
        %2337 = vmatprep.subr.mxu0 0.0
        %2338 = vmatpush2.msra.mxu0 0.0
        %2339 = vmatprep.subr.mxu0 0.0
        %2340 = vmatpush2.msra.mxu0 0.0
        %2341 = vmatprep.subr.mxu0 0.0
        %2342 = vmatpush2.msra.mxu0 0.0
        %2343 = vmatprep.subr.mxu0 0.0
        %2344 = vmatpush2.msra.mxu0 0.0
        %2345 = vmatprep.subr.mxu0 0.0
        %2346 = vmatpush2.msra.mxu0 0.0
        %2347 = vmatprep.subr.mxu0 0.0
        %2348 = vmatpush2.msra.mxu0 0.0
        %2349 = vmatprep.subr.mxu0 0.0
        %2350 = vmatpush2.msra.mxu0 0.0
        %2351 = vmatprep.subr.mxu0 0.0
        %2352 = vmatpush2.msra.mxu0 0.0
        %2353 = vmatprep.subr.mxu0 0.0
        %2354 = vmatpush2.msra.mxu0 0.0
        %2355 = vmatprep.subr.mxu0 0.0
        %2356 = vmatpush2.msra.mxu0 0.0
        %2357 = vmatprep.subr.mxu0 0.0
        %2358 = vmatpush2.msra.mxu0 0.0
        %2359 = vmatprep.subr.mxu0 0.0
        %2360 = vmatpush2.msra.mxu0 0.0
        %2361 = vmatprep.subr.mxu0 0.0
        %2362 = vmatpush2.msra.mxu0 0.0
        %2363 = vmatprep.mubr.f32.mxu0 0.0
        %2364 = vmatmul.mubr.f32.gmra.mxu0 %v2297
        %v2365 = vpop.f32.mrf.mxu0
        %v2366 = vadd.f32 0.0, %v2365
        %v2367 = vpop.f32.mrf.mxu0
        %2368 = vdwg.mxu0
        %v2370 = vsel %vm1492, %v2366, 0
        %2372 = vmatprep.subr.mxu0 0.0
        %2373 = vmatpush1.msra.mxu0 0.0
        %2374 = vmatprep.subr.mxu0 0.0
        %2375 = vmatpush1.msra.mxu0 0.0
        %2376 = vmatprep.subr.mxu0 0.0
        %2377 = vmatpush1.msra.mxu0 0.0
        %2378 = vmatprep.subr.mxu0 0.0
        %2379 = vmatpush1.msra.mxu0 0.0
        %2380 = vmatprep.subr.mxu0 0.0
        %2381 = vmatpush1.msra.mxu0 0.0
        %2382 = vmatprep.subr.mxu0 0.0
        %2383 = vmatpush1.msra.mxu0 0.0
        %2384 = vmatprep.subr.mxu0 0.0
        %2385 = vmatpush1.msra.mxu0 0.0
        %2386 = vmatprep.subr.mxu0 0.0
        %2387 = vmatpush1.msra.mxu0 0.0
        %2388 = vmatprep.subr.mxu0 0.0
        %2389 = vmatpush1.msra.mxu0 0.0
        %2390 = vmatprep.subr.mxu0 0.0
        %2391 = vmatpush1.msra.mxu0 0.0
        %2392 = vmatprep.subr.mxu0 0.0
        %2393 = vmatpush1.msra.mxu0 0.0
        %2394 = vmatprep.subr.mxu0 0.0
        %2395 = vmatpush1.msra.mxu0 0.0
        %2396 = vmatprep.subr.mxu0 0.0
        %2397 = vmatpush1.msra.mxu0 0.0
        %2398 = vmatprep.subr.mxu0 0.0
        %2399 = vmatpush1.msra.mxu0 0.0
        %2400 = vmatprep.subr.mxu0 0.0
        %2401 = vmatpush1.msra.mxu0 0.0
        %2402 = vmatprep.subr.mxu0 0.0
        %2403 = vmatpush1.msra.mxu0 %v1255
        %2404 = vmatprep.subr.mxu0 0.0
        %2405 = vmatpush2.msra.mxu0 0.0
        %2406 = vmatprep.subr.mxu0 0.0
        %2407 = vmatpush2.msra.mxu0 0.0
        %2408 = vmatprep.subr.mxu0 0.0
        %2409 = vmatpush2.msra.mxu0 0.0
        %2410 = vmatprep.subr.mxu0 0.0
        %2411 = vmatpush2.msra.mxu0 0.0
        %2412 = vmatprep.subr.mxu0 0.0
        %2413 = vmatpush2.msra.mxu0 0.0
        %2414 = vmatprep.subr.mxu0 0.0
        %2415 = vmatpush2.msra.mxu0 0.0
        %2416 = vmatprep.subr.mxu0 0.0
        %2417 = vmatpush2.msra.mxu0 0.0
        %2418 = vmatprep.subr.mxu0 0.0
        %2419 = vmatpush2.msra.mxu0 0.0
        %2420 = vmatprep.subr.mxu0 0.0
        %2421 = vmatpush2.msra.mxu0 0.0
        %2422 = vmatprep.subr.mxu0 0.0
        %2423 = vmatpush2.msra.mxu0 0.0
        %2424 = vmatprep.subr.mxu0 0.0
        %2425 = vmatpush2.msra.mxu0 0.0
        %2426 = vmatprep.subr.mxu0 0.0
        %2427 = vmatpush2.msra.mxu0 0.0
        %2428 = vmatprep.subr.mxu0 0.0
        %2429 = vmatpush2.msra.mxu0 0.0
        %2430 = vmatprep.subr.mxu0 0.0
        %2431 = vmatpush2.msra.mxu0 0.0
        %2432 = vmatprep.subr.mxu0 0.0
        %2433 = vmatpush2.msra.mxu0 0.0
        %2434 = vmatprep.subr.mxu0 0.0
        %2435 = vmatpush2.msra.mxu0 0.0
        %2436 = vmatprep.mubr.f32.mxu0 0.0
        %2437 = vmatmul.mubr.f32.gmra.mxu0 %v2370
        %v2438 = vpop.f32.mrf.mxu0
        %v2439 = vadd.f32 0.0, %v2438
        %v2440 = vpop.f32.mrf.mxu0
        %2441 = vdwg.mxu0
        %v2442 = vadd.f32 %v2203, %v2439
        %v2444 = vlaneseq
        %v2445 = vshrl.u32 %v2444, 7
        %v2446 = vsub.s32 0, %v2445
        %v2447 = vrot.slane %v1256, %v2446
        %v2449 = vadd.f32 %v2442, %v2447
        %v2450 = vadd.f32 %v1234, %v2449
        %v2451 = vsel %vm1265, %v2450, 0.0
        %2452 = vadd.xlane.f32.xlu0 %v2451
        %v2453 = vpop.xlane.xlu0 %2452
        %v2454 = vrcp.pop 32.0
        %v2455 = vmul.f32 %v2453, %v2454
        %v2456 = vsub.f32 %v2450, %v2455
        %v2457 = vmul.f32 %v2456, %v2456
        %v2458 = vsel %vm1265, %v2457, 0.0
        %2459 = vadd.xlane.f32.xlu0 %v2458
        %v2460 = vpop.xlane.xlu0 %2459
        %v2461 = vmul.f32 %v2460, %v2454
        %v2462 = vadd.f32 %v2461, 1e-05
        %v2463 = vrsqrt.pop %v2462
        %v2464 = vmul.f32 %v2456, %v2463
        %v2466 = vlaneseq
        %v2467 = vshrl.u32 %v2466, 7
        %v2468 = vsub.s32 0, %v2467
        %v2469 = vrot.slane %v1257, %v2468
        %v2471 = vmul.f32 %v2464, %v2469
        %v2473 = vlaneseq
        %v2474 = vshrl.u32 %v2473, 7
        %v2475 = vsub.s32 0, %v2474
        %v2476 = vrot.slane %v1258, %v2475
        %v2478 = vadd.f32 %v2471, %v2476
        %v2479 = vadd.f32 %v1234, %v2478
        %v2480 = vld [vmem:[#allocation17] sm:$0x1]
        %v2481 = vld [vmem:[#allocation19] sm:$0x1]
        %v2482 = vsel %vm1265, %v2479, 0.0
        %2483 = vadd.xlane.f32.xlu0 %v2482
        %v2484 = vpop.xlane.xlu0 %2483
        %v2485 = vmul.f32 %v2484, %v2454
        %v2486 = vsub.f32 %v2479, %v2485
        %v2487 = vmul.f32 %v2486, %v2486
        %v2488 = vsel %vm1265, %v2487, 0.0
        %2489 = vadd.xlane.f32.xlu0 %v2488
        %v2490 = vpop.xlane.xlu0 %2489
        %v2491 = vmul.f32 %v2490, %v2454
        %v2492 = vadd.f32 %v2491, 1e-05
        %v2493 = vrsqrt.pop %v2492
        %v2494 = vmul.f32 %v2486, %v2493
        %v2496 = vlaneseq
        %v2497 = vshrl.u32 %v2496, 7
        %v2498 = vsub.s32 0, %v2497
        %v2499 = vrot.slane %v2480, %v2498
        %v2501 = vmul.f32 %v2494, %v2499
        %v2503 = vlaneseq
        %v2504 = vshrl.u32 %v2503, 7
        %v2505 = vsub.s32 0, %v2504
        %v2506 = vrot.slane %v2481, %v2505
        %v2508 = vadd.f32 %v2501, %v2506
        %v2509 = vld [vmem:[#allocation20] sm:$0xff]
        %v2510 = vld [vmem:[#allocation20 + $0x8] sm:$0xff]
        %v2511 = vld [vmem:[#allocation20 + $0x10] sm:$0xff]
        %v2512 = vld [vmem:[#allocation20 + $0x18] sm:$0xff]
        %v2513 = vld [vmem:[#allocation22] sm:$0x1]
        %v2514 = vld [vmem:[#allocation23] sm:$0xff]
        %v2515 = vld [vmem:[#allocation23 + $0x8] sm:$0xff]
        %v2516 = vld [vmem:[#allocation23 + $0x10] sm:$0xff]
        %v2517 = vld [vmem:[#allocation23 + $0x18] sm:$0xff]
        %v2518 = vld [vmem:[#allocation25] sm:$0x1]
        %v2519 = vld [vmem:[%s37] sm:$0xff]
        %v2520 = vld [vmem:[%s37 + $0x8] sm:$0xff]
        %v2521 = vld [vmem:[%s37 + $0x10] sm:$0xff]
        %v2522 = vld [vmem:[%s37 + $0x18] sm:$0xff]
        %v2523 = vld [vmem:[%s39] sm:$0x1]
        %v2524 = vld [vmem:[#allocation26] sm:$0xff]
        %v2525 = vld [vmem:[#allocation26 + $0x8] sm:$0xff]
        %v2526 = vld [vmem:[#allocation26 + $0x10] sm:$0xff]
        %v2527 = vld [vmem:[#allocation26 + $0x18] sm:$0xff]
        %v2528 = vld [vmem:[%s43] sm:$0x1]
        %v2529 = vld [vmem:[%s45] sm:$0x1]
        %v2530 = vld [vmem:[%s47] sm:$0x1]
        %v2532 = vlaneseq
        %v2533 = vshrl.u32 %v2532, 7
        %v2534 = vsub.s32 0, %v2533
        %v2535 = vrot.slane %v2513, %v2534
        %v2538 = vsel %vm1265, %v2508, 0
        %2540 = vmatprep.subr.mxu0 0.0
        %2541 = vmatpush1.msra.mxu0 0.0
        %2542 = vmatprep.subr.mxu0 0.0
        %2543 = vmatpush1.msra.mxu0 0.0
        %2544 = vmatprep.subr.mxu0 0.0
        %2545 = vmatpush1.msra.mxu0 0.0
        %2546 = vmatprep.subr.mxu0 0.0
        %2547 = vmatpush1.msra.mxu0 0.0
        %2548 = vmatprep.subr.mxu0 0.0
        %2549 = vmatpush1.msra.mxu0 0.0
        %2550 = vmatprep.subr.mxu0 0.0
        %2551 = vmatpush1.msra.mxu0 0.0
        %2552 = vmatprep.subr.mxu0 0.0
        %2553 = vmatpush1.msra.mxu0 0.0
        %2554 = vmatprep.subr.mxu0 0.0
        %2555 = vmatpush1.msra.mxu0 0.0
        %2556 = vmatprep.subr.mxu0 0.0
        %2557 = vmatpush1.msra.mxu0 0.0
        %2558 = vmatprep.subr.mxu0 0.0
        %2559 = vmatpush1.msra.mxu0 0.0
        %2560 = vmatprep.subr.mxu0 0.0
        %2561 = vmatpush1.msra.mxu0 0.0
        %2562 = vmatprep.subr.mxu0 0.0
        %2563 = vmatpush1.msra.mxu0 0.0
        %2564 = vmatprep.subr.mxu0 0.0
        %2565 = vmatpush1.msra.mxu0 %v2512
        %2566 = vmatprep.subr.mxu0 0.0
        %2567 = vmatpush1.msra.mxu0 %v2511
        %2568 = vmatprep.subr.mxu0 0.0
        %2569 = vmatpush1.msra.mxu0 %v2510
        %2570 = vmatprep.subr.mxu0 0.0
        %2571 = vmatpush1.msra.mxu0 %v2509
        %2572 = vmatprep.subr.mxu0 0.0
        %2573 = vmatpush2.msra.mxu0 0.0
        %2574 = vmatprep.subr.mxu0 0.0
        %2575 = vmatpush2.msra.mxu0 0.0
        %2576 = vmatprep.subr.mxu0 0.0
        %2577 = vmatpush2.msra.mxu0 0.0
        %2578 = vmatprep.subr.mxu0 0.0
        %2579 = vmatpush2.msra.mxu0 0.0
        %2580 = vmatprep.subr.mxu0 0.0
        %2581 = vmatpush2.msra.mxu0 0.0
        %2582 = vmatprep.subr.mxu0 0.0
        %2583 = vmatpush2.msra.mxu0 0.0
        %2584 = vmatprep.subr.mxu0 0.0
        %2585 = vmatpush2.msra.mxu0 0.0
        %2586 = vmatprep.subr.mxu0 0.0
        %2587 = vmatpush2.msra.mxu0 0.0
        %2588 = vmatprep.subr.mxu0 0.0
        %2589 = vmatpush2.msra.mxu0 0.0
        %2590 = vmatprep.subr.mxu0 0.0
        %2591 = vmatpush2.msra.mxu0 0.0
        %2592 = vmatprep.subr.mxu0 0.0
        %2593 = vmatpush2.msra.mxu0 0.0
        %2594 = vmatprep.subr.mxu0 0.0
        %2595 = vmatpush2.msra.mxu0 0.0
        %2596 = vmatprep.subr.mxu0 0.0
        %2597 = vmatpush2.msra.mxu0 0.0
        %2598 = vmatprep.subr.mxu0 0.0
        %2599 = vmatpush2.msra.mxu0 0.0
        %2600 = vmatprep.subr.mxu0 0.0
        %2601 = vmatpush2.msra.mxu0 0.0
        %2602 = vmatprep.subr.mxu0 0.0
        %2603 = vmatpush2.msra.mxu0 0.0
        %2604 = vmatprep.mubr.f32.mxu0 0.0
        %2605 = vmatmul.mubr.f32.gmra.mxu0 %v2538
        %v2606 = vpop.f32.mrf.mxu0
        %v2607 = vadd.f32 %v2535, %v2606
        %v2608 = vpop.f32.mrf.mxu0
        %2609 = vdwg.mxu0
        %v2610 = vmul.f32 %v2607, 0.35355338
        %v2612 = vlaneseq
        %v2613 = vshrl.u32 %v2612, 7
        %v2614 = vsub.s32 0, %v2613
        %v2615 = vrot.slane %v2518, %v2614
        %v2618 = vsel %vm1265, %v1235, 0
        %v2621 = vsel %vm1265, %v1236, 0
        %2623 = vmatprep.subr.mxu0 0.0
        %2624 = vmatpush1.msra.mxu0 0.0
        %2625 = vmatprep.subr.mxu0 0.0
        %2626 = vmatpush1.msra.mxu0 0.0
        %2627 = vmatprep.subr.mxu0 0.0
        %2628 = vmatpush1.msra.mxu0 0.0
        %2629 = vmatprep.subr.mxu0 0.0
        %2630 = vmatpush1.msra.mxu0 0.0
        %2631 = vmatprep.subr.mxu0 0.0
        %2632 = vmatpush1.msra.mxu0 0.0
        %2633 = vmatprep.subr.mxu0 0.0
        %2634 = vmatpush1.msra.mxu0 0.0
        %2635 = vmatprep.subr.mxu0 0.0
        %2636 = vmatpush1.msra.mxu0 0.0
        %2637 = vmatprep.subr.mxu0 0.0
        %2638 = vmatpush1.msra.mxu0 0.0
        %2639 = vmatprep.subr.mxu0 0.0
        %2640 = vmatpush1.msra.mxu0 0.0
        %2641 = vmatprep.subr.mxu0 0.0
        %2642 = vmatpush1.msra.mxu0 0.0
        %2643 = vmatprep.subr.mxu0 0.0
        %2644 = vmatpush1.msra.mxu0 0.0
        %2645 = vmatprep.subr.mxu0 0.0
        %2646 = vmatpush1.msra.mxu0 0.0
        %2647 = vmatprep.subr.mxu0 0.0
        %2648 = vmatpush1.msra.mxu0 %v2517
        %2649 = vmatprep.subr.mxu0 0.0
        %2650 = vmatpush1.msra.mxu0 %v2516
        %2651 = vmatprep.subr.mxu0 0.0
        %2652 = vmatpush1.msra.mxu0 %v2515
        %2653 = vmatprep.subr.mxu0 0.0
        %2654 = vmatpush1.msra.mxu0 %v2514
        %2655 = vmatprep.subr.mxu0 0.0
        %2656 = vmatpush2.msra.mxu0 0.0
        %2657 = vmatprep.subr.mxu0 0.0
        %2658 = vmatpush2.msra.mxu0 0.0
        %2659 = vmatprep.subr.mxu0 0.0
        %2660 = vmatpush2.msra.mxu0 0.0
        %2661 = vmatprep.subr.mxu0 0.0
        %2662 = vmatpush2.msra.mxu0 0.0
        %2663 = vmatprep.subr.mxu0 0.0
        %2664 = vmatpush2.msra.mxu0 0.0
        %2665 = vmatprep.subr.mxu0 0.0
        %2666 = vmatpush2.msra.mxu0 0.0
        %2667 = vmatprep.subr.mxu0 0.0
        %2668 = vmatpush2.msra.mxu0 0.0
        %2669 = vmatprep.subr.mxu0 0.0
        %2670 = vmatpush2.msra.mxu0 0.0
        %2671 = vmatprep.subr.mxu0 0.0
        %2672 = vmatpush2.msra.mxu0 0.0
        %2673 = vmatprep.subr.mxu0 0.0
        %2674 = vmatpush2.msra.mxu0 0.0
        %2675 = vmatprep.subr.mxu0 0.0
        %2676 = vmatpush2.msra.mxu0 0.0
        %2677 = vmatprep.subr.mxu0 0.0
        %2678 = vmatpush2.msra.mxu0 0.0
        %2679 = vmatprep.subr.mxu0 0.0
        %2680 = vmatpush2.msra.mxu0 0.0
        %2681 = vmatprep.subr.mxu0 0.0
        %2682 = vmatpush2.msra.mxu0 0.0
        %2683 = vmatprep.subr.mxu0 0.0
        %2684 = vmatpush2.msra.mxu0 0.0
        %2685 = vmatprep.subr.mxu0 0.0
        %2686 = vmatpush2.msra.mxu0 0.0
        %2687 = vmatprep.mubr.f32.mxu0 0.0
        %2688 = vmatmul.mubr.f32.gmra.mxu0 %v2618
        %v2689 = vpop.f32.mrf.mxu0
        %v2690 = vadd.f32 %v2615, %v2689
        %v2691 = vpop.f32.mrf.mxu0
        %2692 = vmatprep.mubr.f32.mxu0 0.0
        %2693 = vmatmul.mubr.f32.gmra.mxu0 %v2621
        %v2694 = vpop.f32.mrf.mxu0
        %v2695 = vadd.f32 %v2615, %v2694
        %v2696 = vpop.f32.mrf.mxu0
        %2697 = vdwg.mxu0
        %v2699 = vlaneseq
        %v2700 = vshrl.u32 %v2699, 7
        %v2701 = vsub.s32 0, %v2700
        %v2702 = vrot.slane %v2523, %v2701
        %2704 = vmatprep.subr.mxu0 0.0
        %2705 = vmatpush1.msra.mxu0 0.0
        %2706 = vmatprep.subr.mxu0 0.0
        %2707 = vmatpush1.msra.mxu0 0.0
        %2708 = vmatprep.subr.mxu0 0.0
        %2709 = vmatpush1.msra.mxu0 0.0
        %2710 = vmatprep.subr.mxu0 0.0
        %2711 = vmatpush1.msra.mxu0 0.0
        %2712 = vmatprep.subr.mxu0 0.0
        %2713 = vmatpush1.msra.mxu0 0.0
        %2714 = vmatprep.subr.mxu0 0.0
        %2715 = vmatpush1.msra.mxu0 0.0
        %2716 = vmatprep.subr.mxu0 0.0
        %2717 = vmatpush1.msra.mxu0 0.0
        %2718 = vmatprep.subr.mxu0 0.0
        %2719 = vmatpush1.msra.mxu0 0.0
        %2720 = vmatprep.subr.mxu0 0.0
        %2721 = vmatpush1.msra.mxu0 0.0
        %2722 = vmatprep.subr.mxu0 0.0
        %2723 = vmatpush1.msra.mxu0 0.0
        %2724 = vmatprep.subr.mxu0 0.0
        %2725 = vmatpush1.msra.mxu0 0.0
        %2726 = vmatprep.subr.mxu0 0.0
        %2727 = vmatpush1.msra.mxu0 0.0
        %2728 = vmatprep.subr.mxu0 0.0
        %2729 = vmatpush1.msra.mxu0 %v2522
        %2730 = vmatprep.subr.mxu0 0.0
        %2731 = vmatpush1.msra.mxu0 %v2521
        %2732 = vmatprep.subr.mxu0 0.0
        %2733 = vmatpush1.msra.mxu0 %v2520
        %2734 = vmatprep.subr.mxu0 0.0
        %2735 = vmatpush1.msra.mxu0 %v2519
        %2736 = vmatprep.subr.mxu0 0.0
        %2737 = vmatpush2.msra.mxu0 0.0
        %2738 = vmatprep.subr.mxu0 0.0
        %2739 = vmatpush2.msra.mxu0 0.0
        %2740 = vmatprep.subr.mxu0 0.0
        %2741 = vmatpush2.msra.mxu0 0.0
        %2742 = vmatprep.subr.mxu0 0.0
        %2743 = vmatpush2.msra.mxu0 0.0
        %2744 = vmatprep.subr.mxu0 0.0
        %2745 = vmatpush2.msra.mxu0 0.0
        %2746 = vmatprep.subr.mxu0 0.0
        %2747 = vmatpush2.msra.mxu0 0.0
        %2748 = vmatprep.subr.mxu0 0.0
        %2749 = vmatpush2.msra.mxu0 0.0
        %2750 = vmatprep.subr.mxu0 0.0
        %2751 = vmatpush2.msra.mxu0 0.0
        %2752 = vmatprep.subr.mxu0 0.0
        %2753 = vmatpush2.msra.mxu0 0.0
        %2754 = vmatprep.subr.mxu0 0.0
        %2755 = vmatpush2.msra.mxu0 0.0
        %2756 = vmatprep.subr.mxu0 0.0
        %2757 = vmatpush2.msra.mxu0 0.0
        %2758 = vmatprep.subr.mxu0 0.0
        %2759 = vmatpush2.msra.mxu0 0.0
        %2760 = vmatprep.subr.mxu0 0.0
        %2761 = vmatpush2.msra.mxu0 0.0
        %2762 = vmatprep.subr.mxu0 0.0
        %2763 = vmatpush2.msra.mxu0 0.0
        %2764 = vmatprep.subr.mxu0 0.0
        %2765 = vmatpush2.msra.mxu0 0.0
        %2766 = vmatprep.subr.mxu0 0.0
        %2767 = vmatpush2.msra.mxu0 0.0
        %2768 = vmatprep.mubr.f32.mxu0 0.0
        %2769 = vmatmul.mubr.f32.gmra.mxu0 %v2618
        %v2770 = vpop.f32.mrf.mxu0
        %v2771 = vadd.f32 %v2702, %v2770
        %v2772 = vpop.f32.mrf.mxu0
        %2773 = vmatprep.mubr.f32.mxu0 0.0
        %2774 = vmatmul.mubr.f32.gmra.mxu0 %v2621
        %v2775 = vpop.f32.mrf.mxu0
        %v2776 = vadd.f32 %v2702, %v2775
        %v2777 = vpop.f32.mrf.mxu0
        %2778 = vdwg.mxu0
        %v2780 = vsel %vm1492, %v2610, 0
        %v2783 = vsel %vm1492, %v2690, 0
        %v2786 = vsel %vm1492, %v2695, 0
        %2788 = vmatprep.subr.mxu0 0.0
        %2789 = vmatpush1.xpose.msra.mxu0 0.0
        %2790 = vmatprep.subr.mxu0 0.0
        %2791 = vmatpush1.xpose.msra.mxu0 0.0
        %2792 = vmatprep.subr.mxu0 0.0
        %2793 = vmatpush1.xpose.msra.mxu0 0.0
        %2794 = vmatprep.subr.mxu0 0.0
        %2795 = vmatpush1.xpose.msra.mxu0 0.0
        %2796 = vmatprep.subr.mxu0 0.0
        %2797 = vmatpush1.xpose.msra.mxu0 0.0
        %2798 = vmatprep.subr.mxu0 0.0
        %2799 = vmatpush1.xpose.msra.mxu0 0.0
        %2800 = vmatprep.subr.mxu0 0.0
        %2801 = vmatpush1.xpose.msra.mxu0 0.0
        %2802 = vmatprep.subr.mxu0 0.0
        %2803 = vmatpush1.xpose.msra.mxu0 0.0
        %2804 = vmatprep.subr.mxu0 0.0
        %2805 = vmatpush1.xpose.msra.mxu0 0.0
        %2806 = vmatprep.subr.mxu0 0.0
        %2807 = vmatpush1.xpose.msra.mxu0 0.0
        %2808 = vmatprep.subr.mxu0 0.0
        %2809 = vmatpush1.xpose.msra.mxu0 0.0
        %2810 = vmatprep.subr.mxu0 0.0
        %2811 = vmatpush1.xpose.msra.mxu0 0.0
        %2812 = vmatprep.subr.mxu0 0.0
        %2813 = vmatpush1.xpose.msra.mxu0 0.0
        %2814 = vmatprep.subr.mxu0 0.0
        %2815 = vmatpush1.xpose.msra.mxu0 0.0
        %2816 = vmatprep.subr.mxu0 0.0
        %2817 = vmatpush1.xpose.msra.mxu0 %v2786
        %2818 = vmatprep.subr.mxu0 0.0
        %2819 = vmatpush1.xpose.msra.mxu0 %v2783
        %2820 = vmatprep.subr.mxu0 0.0
        %2821 = vmatpush2.xpose.msra.mxu0 0.0
        %2822 = vmatprep.subr.mxu0 0.0
        %2823 = vmatpush2.xpose.msra.mxu0 0.0
        %2824 = vmatprep.subr.mxu0 0.0
        %2825 = vmatpush2.xpose.msra.mxu0 0.0
        %2826 = vmatprep.subr.mxu0 0.0
        %2827 = vmatpush2.xpose.msra.mxu0 0.0
        %2828 = vmatprep.subr.mxu0 0.0
        %2829 = vmatpush2.xpose.msra.mxu0 0.0
        %2830 = vmatprep.subr.mxu0 0.0
        %2831 = vmatpush2.xpose.msra.mxu0 0.0
        %2832 = vmatprep.subr.mxu0 0.0
        %2833 = vmatpush2.xpose.msra.mxu0 0.0
        %2834 = vmatprep.subr.mxu0 0.0
        %2835 = vmatpush2.xpose.msra.mxu0 0.0
        %2836 = vmatprep.subr.mxu0 0.0
        %2837 = vmatpush2.xpose.msra.mxu0 0.0
        %2838 = vmatprep.subr.mxu0 0.0
        %2839 = vmatpush2.xpose.msra.mxu0 0.0
        %2840 = vmatprep.subr.mxu0 0.0
        %2841 = vmatpush2.xpose.msra.mxu0 0.0
        %2842 = vmatprep.subr.mxu0 0.0
        %2843 = vmatpush2.xpose.msra.mxu0 0.0
        %2844 = vmatprep.subr.mxu0 0.0
        %2845 = vmatpush2.xpose.msra.mxu0 0.0
        %2846 = vmatprep.subr.mxu0 0.0
        %2847 = vmatpush2.xpose.msra.mxu0 0.0
        %2848 = vmatprep.subr.mxu0 0.0
        %2849 = vmatpush2.xpose.msra.mxu0 0.0
        %2850 = vmatprep.subr.mxu0 0.0
        %2851 = vmatpush2.xpose.msra.mxu0 0.0
        %2852 = vmatprep.mubr.f32.mxu0 0.0
        %2853 = vmatmul.mubr.f32.gmra.mxu0 %v2780
        %v2854 = vpop.f32.mrf.mxu0
        %v2855 = vadd.f32 0.0, %v2854
        %v2856 = vpop.f32.mrf.mxu0
        %2857 = vdwg.mxu0
        %vm2858 = vcmask 130048
        %v2859 = vsel %vm2858, %v2855, -inf
        %2860 = vmax.xlane.f32.xlu0 %v2859
        %v2861 = vpop.xlane.xlu0 %2860
        %v2862 = vsub.f32 %v2855, %v2861
        %v2863 = vmul.f32 %v2862, 1.442695
        %v2864 = vpow.pop %v2863
        %v2865 = vsel %vm2858, %v2864, 0.0
        %2866 = vadd.xlane.f32.xlu0 %v2865
        %v2867 = vpop.xlane.xlu0 %2866
        %v2868 = vrcp.pop %v2867
        %v2869 = vmul.f32 %v2864, %v2868
        %v2871 = vsel %vm2858, %v2869, 0
        %2873 = vmatprep.subr.mxu0 0.0
        %2874 = vmatpush1.msra.mxu0 0.0
        %2875 = vmatprep.subr.mxu0 0.0
        %2876 = vmatpush1.msra.mxu0 0.0
        %2877 = vmatprep.subr.mxu0 0.0
        %2878 = vmatpush1.msra.mxu0 0.0
        %2879 = vmatprep.subr.mxu0 0.0
        %2880 = vmatpush1.msra.mxu0 0.0
        %2881 = vmatprep.subr.mxu0 0.0
        %2882 = vmatpush1.msra.mxu0 0.0
        %2883 = vmatprep.subr.mxu0 0.0
        %2884 = vmatpush1.msra.mxu0 0.0
        %2885 = vmatprep.subr.mxu0 0.0
        %2886 = vmatpush1.msra.mxu0 0.0
        %2887 = vmatprep.subr.mxu0 0.0
        %2888 = vmatpush1.msra.mxu0 0.0
        %2889 = vmatprep.subr.mxu0 0.0
        %2890 = vmatpush1.msra.mxu0 0.0
        %2891 = vmatprep.subr.mxu0 0.0
        %2892 = vmatpush1.msra.mxu0 0.0
        %2893 = vmatprep.subr.mxu0 0.0
        %2894 = vmatpush1.msra.mxu0 0.0
        %2895 = vmatprep.subr.mxu0 0.0
        %2896 = vmatpush1.msra.mxu0 0.0
        %2897 = vmatprep.subr.mxu0 0.0
        %2898 = vmatpush1.msra.mxu0 0.0
        %2899 = vmatprep.subr.mxu0 0.0
        %2900 = vmatpush1.msra.mxu0 0.0
        %2901 = vmatprep.subr.mxu0 0.0
        %2902 = vmatpush1.msra.mxu0 %v2776
        %2903 = vmatprep.subr.mxu0 0.0
        %2904 = vmatpush1.msra.mxu0 %v2771
        %2905 = vmatprep.subr.mxu0 0.0
        %2906 = vmatpush2.msra.mxu0 0.0
        %2907 = vmatprep.subr.mxu0 0.0
        %2908 = vmatpush2.msra.mxu0 0.0
        %2909 = vmatprep.subr.mxu0 0.0
        %2910 = vmatpush2.msra.mxu0 0.0
        %2911 = vmatprep.subr.mxu0 0.0
        %2912 = vmatpush2.msra.mxu0 0.0
        %2913 = vmatprep.subr.mxu0 0.0
        %2914 = vmatpush2.msra.mxu0 0.0
        %2915 = vmatprep.subr.mxu0 0.0
        %2916 = vmatpush2.msra.mxu0 0.0
        %2917 = vmatprep.subr.mxu0 0.0
        %2918 = vmatpush2.msra.mxu0 0.0
        %2919 = vmatprep.subr.mxu0 0.0
        %2920 = vmatpush2.msra.mxu0 0.0
        %2921 = vmatprep.subr.mxu0 0.0
        %2922 = vmatpush2.msra.mxu0 0.0
        %2923 = vmatprep.subr.mxu0 0.0
        %2924 = vmatpush2.msra.mxu0 0.0
        %2925 = vmatprep.subr.mxu0 0.0
        %2926 = vmatpush2.msra.mxu0 0.0
        %2927 = vmatprep.subr.mxu0 0.0
        %2928 = vmatpush2.msra.mxu0 0.0
        %2929 = vmatprep.subr.mxu0 0.0
        %2930 = vmatpush2.msra.mxu0 0.0
        %2931 = vmatprep.subr.mxu0 0.0
        %2932 = vmatpush2.msra.mxu0 0.0
        %2933 = vmatprep.subr.mxu0 0.0
        %2934 = vmatpush2.msra.mxu0 0.0
        %2935 = vmatprep.subr.mxu0 0.0
        %2936 = vmatpush2.msra.mxu0 0.0
        %2937 = vmatprep.mubr.f32.mxu0 0.0
        %2938 = vmatmul.mubr.f32.gmra.mxu0 %v2871
        %v2939 = vpop.f32.mrf.mxu0
        %v2940 = vadd.f32 0.0, %v2939
        %v2941 = vpop.f32.mrf.mxu0
        %2942 = vdwg.mxu0
        %2943 = vrot.lane.b32.xlu0 %v2610, 120
        %v2944 = vpop.permute.xlu0 %2943
        %2945 = vrot.lane.b32.xlu0 %v2690, 120
        %v2946 = vpop.permute.xlu0 %2945
        %2947 = vrot.lane.b32.xlu0 %v2695, 120
        %v2948 = vpop.permute.xlu0 %2947
        %v2949 = vsel %vm1492, %v2944, 0
        %v2951 = vsel %vm1492, %v2946, 0
        %v2953 = vsel %vm1492, %v2948, 0
        %2955 = vmatprep.subr.mxu0 0.0
        %2956 = vmatpush1.xpose.msra.mxu0 0.0
        %2957 = vmatprep.subr.mxu0 0.0
        %2958 = vmatpush1.xpose.msra.mxu0 0.0
        %2959 = vmatprep.subr.mxu0 0.0
        %2960 = vmatpush1.xpose.msra.mxu0 0.0
        %2961 = vmatprep.subr.mxu0 0.0
        %2962 = vmatpush1.xpose.msra.mxu0 0.0
        %2963 = vmatprep.subr.mxu0 0.0
        %2964 = vmatpush1.xpose.msra.mxu0 0.0
        %2965 = vmatprep.subr.mxu0 0.0
        %2966 = vmatpush1.xpose.msra.mxu0 0.0
        %2967 = vmatprep.subr.mxu0 0.0
        %2968 = vmatpush1.xpose.msra.mxu0 0.0
        %2969 = vmatprep.subr.mxu0 0.0
        %2970 = vmatpush1.xpose.msra.mxu0 0.0
        %2971 = vmatprep.subr.mxu0 0.0
        %2972 = vmatpush1.xpose.msra.mxu0 0.0
        %2973 = vmatprep.subr.mxu0 0.0
        %2974 = vmatpush1.xpose.msra.mxu0 0.0
        %2975 = vmatprep.subr.mxu0 0.0
        %2976 = vmatpush1.xpose.msra.mxu0 0.0
        %2977 = vmatprep.subr.mxu0 0.0
        %2978 = vmatpush1.xpose.msra.mxu0 0.0
        %2979 = vmatprep.subr.mxu0 0.0
        %2980 = vmatpush1.xpose.msra.mxu0 0.0
        %2981 = vmatprep.subr.mxu0 0.0
        %2982 = vmatpush1.xpose.msra.mxu0 0.0
        %2983 = vmatprep.subr.mxu0 0.0
        %2984 = vmatpush1.xpose.msra.mxu0 %v2953
        %2985 = vmatprep.subr.mxu0 0.0
        %2986 = vmatpush1.xpose.msra.mxu0 %v2951
        %2987 = vmatprep.subr.mxu0 0.0
        %2988 = vmatpush2.xpose.msra.mxu0 0.0
        %2989 = vmatprep.subr.mxu0 0.0
        %2990 = vmatpush2.xpose.msra.mxu0 0.0
        %2991 = vmatprep.subr.mxu0 0.0
        %2992 = vmatpush2.xpose.msra.mxu0 0.0
        %2993 = vmatprep.subr.mxu0 0.0
        %2994 = vmatpush2.xpose.msra.mxu0 0.0
        %2995 = vmatprep.subr.mxu0 0.0
        %2996 = vmatpush2.xpose.msra.mxu0 0.0
        %2997 = vmatprep.subr.mxu0 0.0
        %2998 = vmatpush2.xpose.msra.mxu0 0.0
        %2999 = vmatprep.subr.mxu0 0.0
        %3000 = vmatpush2.xpose.msra.mxu0 0.0
        %3001 = vmatprep.subr.mxu0 0.0
        %3002 = vmatpush2.xpose.msra.mxu0 0.0
        %3003 = vmatprep.subr.mxu0 0.0
        %3004 = vmatpush2.xpose.msra.mxu0 0.0
        %3005 = vmatprep.subr.mxu0 0.0
        %3006 = vmatpush2.xpose.msra.mxu0 0.0
        %3007 = vmatprep.subr.mxu0 0.0
        %3008 = vmatpush2.xpose.msra.mxu0 0.0
        %3009 = vmatprep.subr.mxu0 0.0
        %3010 = vmatpush2.xpose.msra.mxu0 0.0
        %3011 = vmatprep.subr.mxu0 0.0
        %3012 = vmatpush2.xpose.msra.mxu0 0.0
        %3013 = vmatprep.subr.mxu0 0.0
        %3014 = vmatpush2.xpose.msra.mxu0 0.0
        %3015 = vmatprep.subr.mxu0 0.0
        %3016 = vmatpush2.xpose.msra.mxu0 0.0
        %3017 = vmatprep.subr.mxu0 0.0
        %3018 = vmatpush2.xpose.msra.mxu0 0.0
        %3019 = vmatprep.mubr.f32.mxu0 0.0
        %3020 = vmatmul.mubr.f32.gmra.mxu0 %v2949
        %v3021 = vpop.f32.mrf.mxu0
        %v3022 = vadd.f32 0.0, %v3021
        %v3023 = vpop.f32.mrf.mxu0
        %3024 = vdwg.mxu0
        %v3025 = vsel %vm2858, %v3022, -inf
        %3026 = vmax.xlane.f32.xlu0 %v3025
        %v3027 = vpop.xlane.xlu0 %3026
        %v3028 = vsub.f32 %v3022, %v3027
        %v3029 = vmul.f32 %v3028, 1.442695
        %v3030 = vpow.pop %v3029
        %v3031 = vsel %vm2858, %v3030, 0.0
        %3032 = vadd.xlane.f32.xlu0 %v3031
        %v3033 = vpop.xlane.xlu0 %3032
        %v3034 = vrcp.pop %v3033
        %v3035 = vmul.f32 %v3030, %v3034
        %3038 = vrot.lane.b32.xlu0 %v2771, 120
        %v3039 = vpop.permute.xlu0 %3038
        %3040 = vrot.lane.b32.xlu0 %v2776, 120
        %v3041 = vpop.permute.xlu0 %3040
        %v3045 = vsel %vm2858, %v3035, 0
        %3047 = vmatprep.subr.mxu0 0.0
        %3048 = vmatpush1.msra.mxu0 0.0
        %3049 = vmatprep.subr.mxu0 0.0
        %3050 = vmatpush1.msra.mxu0 0.0
        %3051 = vmatprep.subr.mxu0 0.0
        %3052 = vmatpush1.msra.mxu0 0.0
        %3053 = vmatprep.subr.mxu0 0.0
        %3054 = vmatpush1.msra.mxu0 0.0
        %3055 = vmatprep.subr.mxu0 0.0
        %3056 = vmatpush1.msra.mxu0 0.0
        %3057 = vmatprep.subr.mxu0 0.0
        %3058 = vmatpush1.msra.mxu0 0.0
        %3059 = vmatprep.subr.mxu0 0.0
        %3060 = vmatpush1.msra.mxu0 0.0
        %3061 = vmatprep.subr.mxu0 0.0
        %3062 = vmatpush1.msra.mxu0 0.0
        %3063 = vmatprep.subr.mxu0 0.0
        %3064 = vmatpush1.msra.mxu0 0.0
        %3065 = vmatprep.subr.mxu0 0.0
        %3066 = vmatpush1.msra.mxu0 0.0
        %3067 = vmatprep.subr.mxu0 0.0
        %3068 = vmatpush1.msra.mxu0 0.0
        %3069 = vmatprep.subr.mxu0 0.0
        %3070 = vmatpush1.msra.mxu0 0.0
        %3071 = vmatprep.subr.mxu0 0.0
        %3072 = vmatpush1.msra.mxu0 0.0
        %3073 = vmatprep.subr.mxu0 0.0
        %3074 = vmatpush1.msra.mxu0 0.0
        %3075 = vmatprep.subr.mxu0 0.0
        %3076 = vmatpush1.msra.mxu0 %v3041
        %3077 = vmatprep.subr.mxu0 0.0
        %3078 = vmatpush1.msra.mxu0 %v3039
        %3079 = vmatprep.subr.mxu0 0.0
        %3080 = vmatpush2.msra.mxu0 0.0
        %3081 = vmatprep.subr.mxu0 0.0
        %3082 = vmatpush2.msra.mxu0 0.0
        %3083 = vmatprep.subr.mxu0 0.0
        %3084 = vmatpush2.msra.mxu0 0.0
        %3085 = vmatprep.subr.mxu0 0.0
        %3086 = vmatpush2.msra.mxu0 0.0
        %3087 = vmatprep.subr.mxu0 0.0
        %3088 = vmatpush2.msra.mxu0 0.0
        %3089 = vmatprep.subr.mxu0 0.0
        %3090 = vmatpush2.msra.mxu0 0.0
        %3091 = vmatprep.subr.mxu0 0.0
        %3092 = vmatpush2.msra.mxu0 0.0
        %3093 = vmatprep.subr.mxu0 0.0
        %3094 = vmatpush2.msra.mxu0 0.0
        %3095 = vmatprep.subr.mxu0 0.0
        %3096 = vmatpush2.msra.mxu0 0.0
        %3097 = vmatprep.subr.mxu0 0.0
        %3098 = vmatpush2.msra.mxu0 0.0
        %3099 = vmatprep.subr.mxu0 0.0
        %3100 = vmatpush2.msra.mxu0 0.0
        %3101 = vmatprep.subr.mxu0 0.0
        %3102 = vmatpush2.msra.mxu0 0.0
        %3103 = vmatprep.subr.mxu0 0.0
        %3104 = vmatpush2.msra.mxu0 0.0
        %3105 = vmatprep.subr.mxu0 0.0
        %3106 = vmatpush2.msra.mxu0 0.0
        %3107 = vmatprep.subr.mxu0 0.0
        %3108 = vmatpush2.msra.mxu0 0.0
        %3109 = vmatprep.subr.mxu0 0.0
        %3110 = vmatpush2.msra.mxu0 0.0
        %3111 = vmatprep.mubr.f32.mxu0 0.0
        %3112 = vmatmul.mubr.f32.gmra.mxu0 %v3045
        %v3113 = vpop.f32.mrf.mxu0
        %v3114 = vadd.f32 0.0, %v3113
        %v3115 = vpop.f32.mrf.mxu0
        %3116 = vdwg.mxu0
        %v3118 = vsel %vm1492, %v3114, 0
        %3120 = vmatprep.subr.mxu0 0.0
        %3121 = vmatpush1.msra.mxu0 0.0
        %3122 = vmatprep.subr.mxu0 0.0
        %3123 = vmatpush1.msra.mxu0 0.0
        %3124 = vmatprep.subr.mxu0 0.0
        %3125 = vmatpush1.msra.mxu0 0.0
        %3126 = vmatprep.subr.mxu0 0.0
        %3127 = vmatpush1.msra.mxu0 0.0
        %3128 = vmatprep.subr.mxu0 0.0
        %3129 = vmatpush1.msra.mxu0 0.0
        %3130 = vmatprep.subr.mxu0 0.0
        %3131 = vmatpush1.msra.mxu0 0.0
        %3132 = vmatprep.subr.mxu0 0.0
        %3133 = vmatpush1.msra.mxu0 0.0
        %3134 = vmatprep.subr.mxu0 0.0
        %3135 = vmatpush1.msra.mxu0 0.0
        %3136 = vmatprep.subr.mxu0 0.0
        %3137 = vmatpush1.msra.mxu0 0.0
        %3138 = vmatprep.subr.mxu0 0.0
        %3139 = vmatpush1.msra.mxu0 0.0
        %3140 = vmatprep.subr.mxu0 0.0
        %3141 = vmatpush1.msra.mxu0 0.0
        %3142 = vmatprep.subr.mxu0 0.0
        %3143 = vmatpush1.msra.mxu0 0.0
        %3144 = vmatprep.subr.mxu0 0.0
        %3145 = vmatpush1.msra.mxu0 0.0
        %3146 = vmatprep.subr.mxu0 0.0
        %3147 = vmatpush1.msra.mxu0 0.0
        %3148 = vmatprep.subr.mxu0 0.0
        %3149 = vmatpush1.msra.mxu0 0.0
        %3150 = vmatprep.subr.mxu0 0.0
        %3151 = vmatpush1.msra.mxu0 %v2525
        %3152 = vmatprep.subr.mxu0 0.0
        %3153 = vmatpush2.msra.mxu0 0.0
        %3154 = vmatprep.subr.mxu0 0.0
        %3155 = vmatpush2.msra.mxu0 0.0
        %3156 = vmatprep.subr.mxu0 0.0
        %3157 = vmatpush2.msra.mxu0 0.0
        %3158 = vmatprep.subr.mxu0 0.0
        %3159 = vmatpush2.msra.mxu0 0.0
        %3160 = vmatprep.subr.mxu0 0.0
        %3161 = vmatpush2.msra.mxu0 0.0
        %3162 = vmatprep.subr.mxu0 0.0
        %3163 = vmatpush2.msra.mxu0 0.0
        %3164 = vmatprep.subr.mxu0 0.0
        %3165 = vmatpush2.msra.mxu0 0.0
        %3166 = vmatprep.subr.mxu0 0.0
        %3167 = vmatpush2.msra.mxu0 0.0
        %3168 = vmatprep.subr.mxu0 0.0
        %3169 = vmatpush2.msra.mxu0 0.0
        %3170 = vmatprep.subr.mxu0 0.0
        %3171 = vmatpush2.msra.mxu0 0.0
        %3172 = vmatprep.subr.mxu0 0.0
        %3173 = vmatpush2.msra.mxu0 0.0
        %3174 = vmatprep.subr.mxu0 0.0
        %3175 = vmatpush2.msra.mxu0 0.0
        %3176 = vmatprep.subr.mxu0 0.0
        %3177 = vmatpush2.msra.mxu0 0.0
        %3178 = vmatprep.subr.mxu0 0.0
        %3179 = vmatpush2.msra.mxu0 0.0
        %3180 = vmatprep.subr.mxu0 0.0
        %3181 = vmatpush2.msra.mxu0 0.0
        %3182 = vmatprep.subr.mxu0 0.0
        %3183 = vmatpush2.msra.mxu0 0.0
        %3184 = vmatprep.mubr.f32.mxu0 0.0
        %3185 = vmatmul.mubr.f32.gmra.mxu0 %v3118
        %v3186 = vpop.f32.mrf.mxu0
        %v3187 = vadd.f32 0.0, %v3186
        %v3188 = vpop.f32.mrf.mxu0
        %3189 = vdwg.mxu0
        %v3191 = vsel %vm1492, %v2940, 0
        %3193 = vmatprep.subr.mxu0 0.0
        %3194 = vmatpush1.msra.mxu0 0.0
        %3195 = vmatprep.subr.mxu0 0.0
        %3196 = vmatpush1.msra.mxu0 0.0
        %3197 = vmatprep.subr.mxu0 0.0
        %3198 = vmatpush1.msra.mxu0 0.0
        %3199 = vmatprep.subr.mxu0 0.0
        %3200 = vmatpush1.msra.mxu0 0.0
        %3201 = vmatprep.subr.mxu0 0.0
        %3202 = vmatpush1.msra.mxu0 0.0
        %3203 = vmatprep.subr.mxu0 0.0
        %3204 = vmatpush1.msra.mxu0 0.0
        %3205 = vmatprep.subr.mxu0 0.0
        %3206 = vmatpush1.msra.mxu0 0.0
        %3207 = vmatprep.subr.mxu0 0.0
        %3208 = vmatpush1.msra.mxu0 0.0
        %3209 = vmatprep.subr.mxu0 0.0
        %3210 = vmatpush1.msra.mxu0 0.0
        %3211 = vmatprep.subr.mxu0 0.0
        %3212 = vmatpush1.msra.mxu0 0.0
        %3213 = vmatprep.subr.mxu0 0.0
        %3214 = vmatpush1.msra.mxu0 0.0
        %3215 = vmatprep.subr.mxu0 0.0
        %3216 = vmatpush1.msra.mxu0 0.0
        %3217 = vmatprep.subr.mxu0 0.0
        %3218 = vmatpush1.msra.mxu0 0.0
        %3219 = vmatprep.subr.mxu0 0.0
        %3220 = vmatpush1.msra.mxu0 0.0
        %3221 = vmatprep.subr.mxu0 0.0
        %3222 = vmatpush1.msra.mxu0 0.0
        %3223 = vmatprep.subr.mxu0 0.0
        %3224 = vmatpush1.msra.mxu0 %v2524
        %3225 = vmatprep.subr.mxu0 0.0
        %3226 = vmatpush2.msra.mxu0 0.0
        %3227 = vmatprep.subr.mxu0 0.0
        %3228 = vmatpush2.msra.mxu0 0.0
        %3229 = vmatprep.subr.mxu0 0.0
        %3230 = vmatpush2.msra.mxu0 0.0
        %3231 = vmatprep.subr.mxu0 0.0
        %3232 = vmatpush2.msra.mxu0 0.0
        %3233 = vmatprep.subr.mxu0 0.0
        %3234 = vmatpush2.msra.mxu0 0.0
        %3235 = vmatprep.subr.mxu0 0.0
        %3236 = vmatpush2.msra.mxu0 0.0
        %3237 = vmatprep.subr.mxu0 0.0
        %3238 = vmatpush2.msra.mxu0 0.0
        %3239 = vmatprep.subr.mxu0 0.0
        %3240 = vmatpush2.msra.mxu0 0.0
        %3241 = vmatprep.subr.mxu0 0.0
        %3242 = vmatpush2.msra.mxu0 0.0
        %3243 = vmatprep.subr.mxu0 0.0
        %3244 = vmatpush2.msra.mxu0 0.0
        %3245 = vmatprep.subr.mxu0 0.0
        %3246 = vmatpush2.msra.mxu0 0.0
        %3247 = vmatprep.subr.mxu0 0.0
        %3248 = vmatpush2.msra.mxu0 0.0
        %3249 = vmatprep.subr.mxu0 0.0
        %3250 = vmatpush2.msra.mxu0 0.0
        %3251 = vmatprep.subr.mxu0 0.0
        %3252 = vmatpush2.msra.mxu0 0.0
        %3253 = vmatprep.subr.mxu0 0.0
        %3254 = vmatpush2.msra.mxu0 0.0
        %3255 = vmatprep.subr.mxu0 0.0
        %3256 = vmatpush2.msra.mxu0 0.0
        %3257 = vmatprep.mubr.f32.mxu0 0.0
        %3258 = vmatmul.mubr.f32.gmra.mxu0 %v3191
        %v3259 = vpop.f32.mrf.mxu0
        %v3260 = vadd.f32 %v3187, %v3259
        %v3261 = vpop.f32.mrf.mxu0
        %3262 = vdwg.mxu0
        %3263 = vrot.lane.b32.xlu0 %v2610, 112
        %v3264 = vpop.permute.xlu0 %3263
        %3265 = vrot.lane.b32.xlu0 %v2690, 112
        %v3266 = vpop.permute.xlu0 %3265
        %3267 = vrot.lane.b32.xlu0 %v2695, 112
        %v3268 = vpop.permute.xlu0 %3267
        %v3269 = vsel %vm1492, %v3264, 0
        %v3271 = vsel %vm1492, %v3266, 0
        %v3273 = vsel %vm1492, %v3268, 0
        %3275 = vmatprep.subr.mxu0 0.0
        %3276 = vmatpush1.xpose.msra.mxu0 0.0
        %3277 = vmatprep.subr.mxu0 0.0
        %3278 = vmatpush1.xpose.msra.mxu0 0.0
        %3279 = vmatprep.subr.mxu0 0.0
        %3280 = vmatpush1.xpose.msra.mxu0 0.0
        %3281 = vmatprep.subr.mxu0 0.0
        %3282 = vmatpush1.xpose.msra.mxu0 0.0
        %3283 = vmatprep.subr.mxu0 0.0
        %3284 = vmatpush1.xpose.msra.mxu0 0.0
        %3285 = vmatprep.subr.mxu0 0.0
        %3286 = vmatpush1.xpose.msra.mxu0 0.0
        %3287 = vmatprep.subr.mxu0 0.0
        %3288 = vmatpush1.xpose.msra.mxu0 0.0
        %3289 = vmatprep.subr.mxu0 0.0
        %3290 = vmatpush1.xpose.msra.mxu0 0.0
        %3291 = vmatprep.subr.mxu0 0.0
        %3292 = vmatpush1.xpose.msra.mxu0 0.0
        %3293 = vmatprep.subr.mxu0 0.0
        %3294 = vmatpush1.xpose.msra.mxu0 0.0
        %3295 = vmatprep.subr.mxu0 0.0
        %3296 = vmatpush1.xpose.msra.mxu0 0.0
        %3297 = vmatprep.subr.mxu0 0.0
        %3298 = vmatpush1.xpose.msra.mxu0 0.0
        %3299 = vmatprep.subr.mxu0 0.0
        %3300 = vmatpush1.xpose.msra.mxu0 0.0
        %3301 = vmatprep.subr.mxu0 0.0
        %3302 = vmatpush1.xpose.msra.mxu0 0.0
        %3303 = vmatprep.subr.mxu0 0.0
        %3304 = vmatpush1.xpose.msra.mxu0 %v3273
        %3305 = vmatprep.subr.mxu0 0.0
        %3306 = vmatpush1.xpose.msra.mxu0 %v3271
        %3307 = vmatprep.subr.mxu0 0.0
        %3308 = vmatpush2.xpose.msra.mxu0 0.0
        %3309 = vmatprep.subr.mxu0 0.0
        %3310 = vmatpush2.xpose.msra.mxu0 0.0
        %3311 = vmatprep.subr.mxu0 0.0
        %3312 = vmatpush2.xpose.msra.mxu0 0.0
        %3313 = vmatprep.subr.mxu0 0.0
        %3314 = vmatpush2.xpose.msra.mxu0 0.0
        %3315 = vmatprep.subr.mxu0 0.0
        %3316 = vmatpush2.xpose.msra.mxu0 0.0
        %3317 = vmatprep.subr.mxu0 0.0
        %3318 = vmatpush2.xpose.msra.mxu0 0.0
        %3319 = vmatprep.subr.mxu0 0.0
        %3320 = vmatpush2.xpose.msra.mxu0 0.0
        %3321 = vmatprep.subr.mxu0 0.0
        %3322 = vmatpush2.xpose.msra.mxu0 0.0
        %3323 = vmatprep.subr.mxu0 0.0
        %3324 = vmatpush2.xpose.msra.mxu0 0.0
        %3325 = vmatprep.subr.mxu0 0.0
        %3326 = vmatpush2.xpose.msra.mxu0 0.0
        %3327 = vmatprep.subr.mxu0 0.0
        %3328 = vmatpush2.xpose.msra.mxu0 0.0
        %3329 = vmatprep.subr.mxu0 0.0
        %3330 = vmatpush2.xpose.msra.mxu0 0.0
        %3331 = vmatprep.subr.mxu0 0.0
        %3332 = vmatpush2.xpose.msra.mxu0 0.0
        %3333 = vmatprep.subr.mxu0 0.0
        %3334 = vmatpush2.xpose.msra.mxu0 0.0
        %3335 = vmatprep.subr.mxu0 0.0
        %3336 = vmatpush2.xpose.msra.mxu0 0.0
        %3337 = vmatprep.subr.mxu0 0.0
        %3338 = vmatpush2.xpose.msra.mxu0 0.0
        %3339 = vmatprep.mubr.f32.mxu0 0.0
        %3340 = vmatmul.mubr.f32.gmra.mxu0 %v3269
        %v3341 = vpop.f32.mrf.mxu0
        %v3342 = vadd.f32 0.0, %v3341
        %v3343 = vpop.f32.mrf.mxu0
        %3344 = vdwg.mxu0
        %v3345 = vsel %vm2858, %v3342, -inf
        %3346 = vmax.xlane.f32.xlu0 %v3345
        %v3347 = vpop.xlane.xlu0 %3346
        %v3348 = vsub.f32 %v3342, %v3347
        %v3349 = vmul.f32 %v3348, 1.442695
        %v3350 = vpow.pop %v3349
        %v3351 = vsel %vm2858, %v3350, 0.0
        %3352 = vadd.xlane.f32.xlu0 %v3351
        %v3353 = vpop.xlane.xlu0 %3352
        %v3354 = vrcp.pop %v3353
        %v3355 = vmul.f32 %v3350, %v3354
        %3356 = vrot.lane.b32.xlu0 %v2771, 112
        %v3357 = vpop.permute.xlu0 %3356
        %3358 = vrot.lane.b32.xlu0 %v2776, 112
        %v3359 = vpop.permute.xlu0 %3358
        %v3363 = vsel %vm2858, %v3355, 0
        %3365 = vmatprep.subr.mxu0 0.0
        %3366 = vmatpush1.msra.mxu0 0.0
        %3367 = vmatprep.subr.mxu0 0.0
        %3368 = vmatpush1.msra.mxu0 0.0
        %3369 = vmatprep.subr.mxu0 0.0
        %3370 = vmatpush1.msra.mxu0 0.0
        %3371 = vmatprep.subr.mxu0 0.0
        %3372 = vmatpush1.msra.mxu0 0.0
        %3373 = vmatprep.subr.mxu0 0.0
        %3374 = vmatpush1.msra.mxu0 0.0
        %3375 = vmatprep.subr.mxu0 0.0
        %3376 = vmatpush1.msra.mxu0 0.0
        %3377 = vmatprep.subr.mxu0 0.0
        %3378 = vmatpush1.msra.mxu0 0.0
        %3379 = vmatprep.subr.mxu0 0.0
        %3380 = vmatpush1.msra.mxu0 0.0
        %3381 = vmatprep.subr.mxu0 0.0
        %3382 = vmatpush1.msra.mxu0 0.0
        %3383 = vmatprep.subr.mxu0 0.0
        %3384 = vmatpush1.msra.mxu0 0.0
        %3385 = vmatprep.subr.mxu0 0.0
        %3386 = vmatpush1.msra.mxu0 0.0
        %3387 = vmatprep.subr.mxu0 0.0
        %3388 = vmatpush1.msra.mxu0 0.0
        %3389 = vmatprep.subr.mxu0 0.0
        %3390 = vmatpush1.msra.mxu0 0.0
        %3391 = vmatprep.subr.mxu0 0.0
        %3392 = vmatpush1.msra.mxu0 0.0
        %3393 = vmatprep.subr.mxu0 0.0
        %3394 = vmatpush1.msra.mxu0 %v3359
        %3395 = vmatprep.subr.mxu0 0.0
        %3396 = vmatpush1.msra.mxu0 %v3357
        %3397 = vmatprep.subr.mxu0 0.0
        %3398 = vmatpush2.msra.mxu0 0.0
        %3399 = vmatprep.subr.mxu0 0.0
        %3400 = vmatpush2.msra.mxu0 0.0
        %3401 = vmatprep.subr.mxu0 0.0
        %3402 = vmatpush2.msra.mxu0 0.0
        %3403 = vmatprep.subr.mxu0 0.0
        %3404 = vmatpush2.msra.mxu0 0.0
        %3405 = vmatprep.subr.mxu0 0.0
        %3406 = vmatpush2.msra.mxu0 0.0
        %3407 = vmatprep.subr.mxu0 0.0
        %3408 = vmatpush2.msra.mxu0 0.0
        %3409 = vmatprep.subr.mxu0 0.0
        %3410 = vmatpush2.msra.mxu0 0.0
        %3411 = vmatprep.subr.mxu0 0.0
        %3412 = vmatpush2.msra.mxu0 0.0
        %3413 = vmatprep.subr.mxu0 0.0
        %3414 = vmatpush2.msra.mxu0 0.0
        %3415 = vmatprep.subr.mxu0 0.0
        %3416 = vmatpush2.msra.mxu0 0.0
        %3417 = vmatprep.subr.mxu0 0.0
        %3418 = vmatpush2.msra.mxu0 0.0
        %3419 = vmatprep.subr.mxu0 0.0
        %3420 = vmatpush2.msra.mxu0 0.0
        %3421 = vmatprep.subr.mxu0 0.0
        %3422 = vmatpush2.msra.mxu0 0.0
        %3423 = vmatprep.subr.mxu0 0.0
        %3424 = vmatpush2.msra.mxu0 0.0
        %3425 = vmatprep.subr.mxu0 0.0
        %3426 = vmatpush2.msra.mxu0 0.0
        %3427 = vmatprep.subr.mxu0 0.0
        %3428 = vmatpush2.msra.mxu0 0.0
        %3429 = vmatprep.mubr.f32.mxu0 0.0
        %3430 = vmatmul.mubr.f32.gmra.mxu0 %v3363
        %v3431 = vpop.f32.mrf.mxu0
        %v3432 = vadd.f32 0.0, %v3431
        %v3433 = vpop.f32.mrf.mxu0
        %3434 = vdwg.mxu0
        %v3436 = vsel %vm1492, %v3432, 0
        %3438 = vmatprep.subr.mxu0 0.0
        %3439 = vmatpush1.msra.mxu0 0.0
        %3440 = vmatprep.subr.mxu0 0.0
        %3441 = vmatpush1.msra.mxu0 0.0
        %3442 = vmatprep.subr.mxu0 0.0
        %3443 = vmatpush1.msra.mxu0 0.0
        %3444 = vmatprep.subr.mxu0 0.0
        %3445 = vmatpush1.msra.mxu0 0.0
        %3446 = vmatprep.subr.mxu0 0.0
        %3447 = vmatpush1.msra.mxu0 0.0
        %3448 = vmatprep.subr.mxu0 0.0
        %3449 = vmatpush1.msra.mxu0 0.0
        %3450 = vmatprep.subr.mxu0 0.0
        %3451 = vmatpush1.msra.mxu0 0.0
        %3452 = vmatprep.subr.mxu0 0.0
        %3453 = vmatpush1.msra.mxu0 0.0
        %3454 = vmatprep.subr.mxu0 0.0
        %3455 = vmatpush1.msra.mxu0 0.0
        %3456 = vmatprep.subr.mxu0 0.0
        %3457 = vmatpush1.msra.mxu0 0.0
        %3458 = vmatprep.subr.mxu0 0.0
        %3459 = vmatpush1.msra.mxu0 0.0
        %3460 = vmatprep.subr.mxu0 0.0
        %3461 = vmatpush1.msra.mxu0 0.0
        %3462 = vmatprep.subr.mxu0 0.0
        %3463 = vmatpush1.msra.mxu0 0.0
        %3464 = vmatprep.subr.mxu0 0.0
        %3465 = vmatpush1.msra.mxu0 0.0
        %3466 = vmatprep.subr.mxu0 0.0
        %3467 = vmatpush1.msra.mxu0 0.0
        %3468 = vmatprep.subr.mxu0 0.0
        %3469 = vmatpush1.msra.mxu0 %v2526
        %3470 = vmatprep.subr.mxu0 0.0
        %3471 = vmatpush2.msra.mxu0 0.0
        %3472 = vmatprep.subr.mxu0 0.0
        %3473 = vmatpush2.msra.mxu0 0.0
        %3474 = vmatprep.subr.mxu0 0.0
        %3475 = vmatpush2.msra.mxu0 0.0
        %3476 = vmatprep.subr.mxu0 0.0
        %3477 = vmatpush2.msra.mxu0 0.0
        %3478 = vmatprep.subr.mxu0 0.0
        %3479 = vmatpush2.msra.mxu0 0.0
        %3480 = vmatprep.subr.mxu0 0.0
        %3481 = vmatpush2.msra.mxu0 0.0
        %3482 = vmatprep.subr.mxu0 0.0
        %3483 = vmatpush2.msra.mxu0 0.0
        %3484 = vmatprep.subr.mxu0 0.0
        %3485 = vmatpush2.msra.mxu0 0.0
        %3486 = vmatprep.subr.mxu0 0.0
        %3487 = vmatpush2.msra.mxu0 0.0
        %3488 = vmatprep.subr.mxu0 0.0
        %3489 = vmatpush2.msra.mxu0 0.0
        %3490 = vmatprep.subr.mxu0 0.0
        %3491 = vmatpush2.msra.mxu0 0.0
        %3492 = vmatprep.subr.mxu0 0.0
        %3493 = vmatpush2.msra.mxu0 0.0
        %3494 = vmatprep.subr.mxu0 0.0
        %3495 = vmatpush2.msra.mxu0 0.0
        %3496 = vmatprep.subr.mxu0 0.0
        %3497 = vmatpush2.msra.mxu0 0.0
        %3498 = vmatprep.subr.mxu0 0.0
        %3499 = vmatpush2.msra.mxu0 0.0
        %3500 = vmatprep.subr.mxu0 0.0
        %3501 = vmatpush2.msra.mxu0 0.0
        %3502 = vmatprep.mubr.f32.mxu0 0.0
        %3503 = vmatmul.mubr.f32.gmra.mxu0 %v3436
        %v3504 = vpop.f32.mrf.mxu0
        %v3505 = vadd.f32 0.0, %v3504
        %v3506 = vpop.f32.mrf.mxu0
        %3507 = vdwg.mxu0
        %v3508 = vadd.f32 %v3260, %v3505
        %3509 = vrot.lane.b32.xlu0 %v2610, 104
        %v3510 = vpop.permute.xlu0 %3509
        %3511 = vrot.lane.b32.xlu0 %v2690, 104
        %v3512 = vpop.permute.xlu0 %3511
        %3513 = vrot.lane.b32.xlu0 %v2695, 104
        %v3514 = vpop.permute.xlu0 %3513
        %v3515 = vsel %vm1492, %v3510, 0
        %v3517 = vsel %vm1492, %v3512, 0
        %v3519 = vsel %vm1492, %v3514, 0
        %3521 = vmatprep.subr.mxu0 0.0
        %3522 = vmatpush1.xpose.msra.mxu0 0.0
        %3523 = vmatprep.subr.mxu0 0.0
        %3524 = vmatpush1.xpose.msra.mxu0 0.0
        %3525 = vmatprep.subr.mxu0 0.0
        %3526 = vmatpush1.xpose.msra.mxu0 0.0
        %3527 = vmatprep.subr.mxu0 0.0
        %3528 = vmatpush1.xpose.msra.mxu0 0.0
        %3529 = vmatprep.subr.mxu0 0.0
        %3530 = vmatpush1.xpose.msra.mxu0 0.0
        %3531 = vmatprep.subr.mxu0 0.0
        %3532 = vmatpush1.xpose.msra.mxu0 0.0
        %3533 = vmatprep.subr.mxu0 0.0
        %3534 = vmatpush1.xpose.msra.mxu0 0.0
        %3535 = vmatprep.subr.mxu0 0.0
        %3536 = vmatpush1.xpose.msra.mxu0 0.0
        %3537 = vmatprep.subr.mxu0 0.0
        %3538 = vmatpush1.xpose.msra.mxu0 0.0
        %3539 = vmatprep.subr.mxu0 0.0
        %3540 = vmatpush1.xpose.msra.mxu0 0.0
        %3541 = vmatprep.subr.mxu0 0.0
        %3542 = vmatpush1.xpose.msra.mxu0 0.0
        %3543 = vmatprep.subr.mxu0 0.0
        %3544 = vmatpush1.xpose.msra.mxu0 0.0
        %3545 = vmatprep.subr.mxu0 0.0
        %3546 = vmatpush1.xpose.msra.mxu0 0.0
        %3547 = vmatprep.subr.mxu0 0.0
        %3548 = vmatpush1.xpose.msra.mxu0 0.0
        %3549 = vmatprep.subr.mxu0 0.0
        %3550 = vmatpush1.xpose.msra.mxu0 %v3519
        %3551 = vmatprep.subr.mxu0 0.0
        %3552 = vmatpush1.xpose.msra.mxu0 %v3517
        %3553 = vmatprep.subr.mxu0 0.0
        %3554 = vmatpush2.xpose.msra.mxu0 0.0
        %3555 = vmatprep.subr.mxu0 0.0
        %3556 = vmatpush2.xpose.msra.mxu0 0.0
        %3557 = vmatprep.subr.mxu0 0.0
        %3558 = vmatpush2.xpose.msra.mxu0 0.0
        %3559 = vmatprep.subr.mxu0 0.0
        %3560 = vmatpush2.xpose.msra.mxu0 0.0
        %3561 = vmatprep.subr.mxu0 0.0
        %3562 = vmatpush2.xpose.msra.mxu0 0.0
        %3563 = vmatprep.subr.mxu0 0.0
        %3564 = vmatpush2.xpose.msra.mxu0 0.0
        %3565 = vmatprep.subr.mxu0 0.0
        %3566 = vmatpush2.xpose.msra.mxu0 0.0
        %3567 = vmatprep.subr.mxu0 0.0
        %3568 = vmatpush2.xpose.msra.mxu0 0.0
        %3569 = vmatprep.subr.mxu0 0.0
        %3570 = vmatpush2.xpose.msra.mxu0 0.0
        %3571 = vmatprep.subr.mxu0 0.0
        %3572 = vmatpush2.xpose.msra.mxu0 0.0
        %3573 = vmatprep.subr.mxu0 0.0
        %3574 = vmatpush2.xpose.msra.mxu0 0.0
        %3575 = vmatprep.subr.mxu0 0.0
        %3576 = vmatpush2.xpose.msra.mxu0 0.0
        %3577 = vmatprep.subr.mxu0 0.0
        %3578 = vmatpush2.xpose.msra.mxu0 0.0
        %3579 = vmatprep.subr.mxu0 0.0
        %3580 = vmatpush2.xpose.msra.mxu0 0.0
        %3581 = vmatprep.subr.mxu0 0.0
        %3582 = vmatpush2.xpose.msra.mxu0 0.0
        %3583 = vmatprep.subr.mxu0 0.0
        %3584 = vmatpush2.xpose.msra.mxu0 0.0
        %3585 = vmatprep.mubr.f32.mxu0 0.0
        %3586 = vmatmul.mubr.f32.gmra.mxu0 %v3515
        %v3587 = vpop.f32.mrf.mxu0
        %v3588 = vadd.f32 0.0, %v3587
        %v3589 = vpop.f32.mrf.mxu0
        %3590 = vdwg.mxu0
        %v3591 = vsel %vm2858, %v3588, -inf
        %3592 = vmax.xlane.f32.xlu0 %v3591
        %v3593 = vpop.xlane.xlu0 %3592
        %v3594 = vsub.f32 %v3588, %v3593
        %v3595 = vmul.f32 %v3594, 1.442695
        %v3596 = vpow.pop %v3595
        %v3597 = vsel %vm2858, %v3596, 0.0
        %3598 = vadd.xlane.f32.xlu0 %v3597
        %v3599 = vpop.xlane.xlu0 %3598
        %v3600 = vrcp.pop %v3599
        %v3601 = vmul.f32 %v3596, %v3600
        %3602 = vrot.lane.b32.xlu0 %v2771, 104
        %v3603 = vpop.permute.xlu0 %3602
        %3604 = vrot.lane.b32.xlu0 %v2776, 104
        %v3605 = vpop.permute.xlu0 %3604
        %v3609 = vsel %vm2858, %v3601, 0
        %3611 = vmatprep.subr.mxu0 0.0
        %3612 = vmatpush1.msra.mxu0 0.0
        %3613 = vmatprep.subr.mxu0 0.0
        %3614 = vmatpush1.msra.mxu0 0.0
        %3615 = vmatprep.subr.mxu0 0.0
        %3616 = vmatpush1.msra.mxu0 0.0
        %3617 = vmatprep.subr.mxu0 0.0
        %3618 = vmatpush1.msra.mxu0 0.0
        %3619 = vmatprep.subr.mxu0 0.0
        %3620 = vmatpush1.msra.mxu0 0.0
        %3621 = vmatprep.subr.mxu0 0.0
        %3622 = vmatpush1.msra.mxu0 0.0
        %3623 = vmatprep.subr.mxu0 0.0
        %3624 = vmatpush1.msra.mxu0 0.0
        %3625 = vmatprep.subr.mxu0 0.0
        %3626 = vmatpush1.msra.mxu0 0.0
        %3627 = vmatprep.subr.mxu0 0.0
        %3628 = vmatpush1.msra.mxu0 0.0
        %3629 = vmatprep.subr.mxu0 0.0
        %3630 = vmatpush1.msra.mxu0 0.0
        %3631 = vmatprep.subr.mxu0 0.0
        %3632 = vmatpush1.msra.mxu0 0.0
        %3633 = vmatprep.subr.mxu0 0.0
        %3634 = vmatpush1.msra.mxu0 0.0
        %3635 = vmatprep.subr.mxu0 0.0
        %3636 = vmatpush1.msra.mxu0 0.0
        %3637 = vmatprep.subr.mxu0 0.0
        %3638 = vmatpush1.msra.mxu0 0.0
        %3639 = vmatprep.subr.mxu0 0.0
        %3640 = vmatpush1.msra.mxu0 %v3605
        %3641 = vmatprep.subr.mxu0 0.0
        %3642 = vmatpush1.msra.mxu0 %v3603
        %3643 = vmatprep.subr.mxu0 0.0
        %3644 = vmatpush2.msra.mxu0 0.0
        %3645 = vmatprep.subr.mxu0 0.0
        %3646 = vmatpush2.msra.mxu0 0.0
        %3647 = vmatprep.subr.mxu0 0.0
        %3648 = vmatpush2.msra.mxu0 0.0
        %3649 = vmatprep.subr.mxu0 0.0
        %3650 = vmatpush2.msra.mxu0 0.0
        %3651 = vmatprep.subr.mxu0 0.0
        %3652 = vmatpush2.msra.mxu0 0.0
        %3653 = vmatprep.subr.mxu0 0.0
        %3654 = vmatpush2.msra.mxu0 0.0
        %3655 = vmatprep.subr.mxu0 0.0
        %3656 = vmatpush2.msra.mxu0 0.0
        %3657 = vmatprep.subr.mxu0 0.0
        %3658 = vmatpush2.msra.mxu0 0.0
        %3659 = vmatprep.subr.mxu0 0.0
        %3660 = vmatpush2.msra.mxu0 0.0
        %3661 = vmatprep.subr.mxu0 0.0
        %3662 = vmatpush2.msra.mxu0 0.0
        %3663 = vmatprep.subr.mxu0 0.0
        %3664 = vmatpush2.msra.mxu0 0.0
        %3665 = vmatprep.subr.mxu0 0.0
        %3666 = vmatpush2.msra.mxu0 0.0
        %3667 = vmatprep.subr.mxu0 0.0
        %3668 = vmatpush2.msra.mxu0 0.0
        %3669 = vmatprep.subr.mxu0 0.0
        %3670 = vmatpush2.msra.mxu0 0.0
        %3671 = vmatprep.subr.mxu0 0.0
        %3672 = vmatpush2.msra.mxu0 0.0
        %3673 = vmatprep.subr.mxu0 0.0
        %3674 = vmatpush2.msra.mxu0 0.0
        %3675 = vmatprep.mubr.f32.mxu0 0.0
        %3676 = vmatmul.mubr.f32.gmra.mxu0 %v3609
        %v3677 = vpop.f32.mrf.mxu0
        %v3678 = vadd.f32 0.0, %v3677
        %v3679 = vpop.f32.mrf.mxu0
        %3680 = vdwg.mxu0
        %v3682 = vsel %vm1492, %v3678, 0
        %3684 = vmatprep.subr.mxu0 0.0
        %3685 = vmatpush1.msra.mxu0 0.0
        %3686 = vmatprep.subr.mxu0 0.0
        %3687 = vmatpush1.msra.mxu0 0.0
        %3688 = vmatprep.subr.mxu0 0.0
        %3689 = vmatpush1.msra.mxu0 0.0
        %3690 = vmatprep.subr.mxu0 0.0
        %3691 = vmatpush1.msra.mxu0 0.0
        %3692 = vmatprep.subr.mxu0 0.0
        %3693 = vmatpush1.msra.mxu0 0.0
        %3694 = vmatprep.subr.mxu0 0.0
        %3695 = vmatpush1.msra.mxu0 0.0
        %3696 = vmatprep.subr.mxu0 0.0
        %3697 = vmatpush1.msra.mxu0 0.0
        %3698 = vmatprep.subr.mxu0 0.0
        %3699 = vmatpush1.msra.mxu0 0.0
        %3700 = vmatprep.subr.mxu0 0.0
        %3701 = vmatpush1.msra.mxu0 0.0
        %3702 = vmatprep.subr.mxu0 0.0
        %3703 = vmatpush1.msra.mxu0 0.0
        %3704 = vmatprep.subr.mxu0 0.0
        %3705 = vmatpush1.msra.mxu0 0.0
        %3706 = vmatprep.subr.mxu0 0.0
        %3707 = vmatpush1.msra.mxu0 0.0
        %3708 = vmatprep.subr.mxu0 0.0
        %3709 = vmatpush1.msra.mxu0 0.0
        %3710 = vmatprep.subr.mxu0 0.0
        %3711 = vmatpush1.msra.mxu0 0.0
        %3712 = vmatprep.subr.mxu0 0.0
        %3713 = vmatpush1.msra.mxu0 0.0
        %3714 = vmatprep.subr.mxu0 0.0
        %3715 = vmatpush1.msra.mxu0 %v2527
        %3716 = vmatprep.subr.mxu0 0.0
        %3717 = vmatpush2.msra.mxu0 0.0
        %3718 = vmatprep.subr.mxu0 0.0
        %3719 = vmatpush2.msra.mxu0 0.0
        %3720 = vmatprep.subr.mxu0 0.0
        %3721 = vmatpush2.msra.mxu0 0.0
        %3722 = vmatprep.subr.mxu0 0.0
        %3723 = vmatpush2.msra.mxu0 0.0
        %3724 = vmatprep.subr.mxu0 0.0
        %3725 = vmatpush2.msra.mxu0 0.0
        %3726 = vmatprep.subr.mxu0 0.0
        %3727 = vmatpush2.msra.mxu0 0.0
        %3728 = vmatprep.subr.mxu0 0.0
        %3729 = vmatpush2.msra.mxu0 0.0
        %3730 = vmatprep.subr.mxu0 0.0
        %3731 = vmatpush2.msra.mxu0 0.0
        %3732 = vmatprep.subr.mxu0 0.0
        %3733 = vmatpush2.msra.mxu0 0.0
        %3734 = vmatprep.subr.mxu0 0.0
        %3735 = vmatpush2.msra.mxu0 0.0
        %3736 = vmatprep.subr.mxu0 0.0
        %3737 = vmatpush2.msra.mxu0 0.0
        %3738 = vmatprep.subr.mxu0 0.0
        %3739 = vmatpush2.msra.mxu0 0.0
        %3740 = vmatprep.subr.mxu0 0.0
        %3741 = vmatpush2.msra.mxu0 0.0
        %3742 = vmatprep.subr.mxu0 0.0
        %3743 = vmatpush2.msra.mxu0 0.0
        %3744 = vmatprep.subr.mxu0 0.0
        %3745 = vmatpush2.msra.mxu0 0.0
        %3746 = vmatprep.subr.mxu0 0.0
        %3747 = vmatpush2.msra.mxu0 0.0
        %3748 = vmatprep.mubr.f32.mxu0 0.0
        %3749 = vmatmul.mubr.f32.gmra.mxu0 %v3682
        %v3750 = vpop.f32.mrf.mxu0
        %v3751 = vadd.f32 0.0, %v3750
        %v3752 = vpop.f32.mrf.mxu0
        %3753 = vdwg.mxu0
        %v3754 = vadd.f32 %v3508, %v3751
        %v3756 = vlaneseq
        %v3757 = vshrl.u32 %v3756, 7
        %v3758 = vsub.s32 0, %v3757
        %v3759 = vrot.slane %v2528, %v3758
        %v3761 = vadd.f32 %v3754, %v3759
        %v3762 = vadd.f32 %v2508, %v3761
        %v3763 = vsel %vm1265, %v3762, 0.0
        %3764 = vadd.xlane.f32.xlu0 %v3763
        %v3765 = vpop.xlane.xlu0 %3764
        %v3766 = vmul.f32 %v3765, %v2454
        %v3767 = vsub.f32 %v3762, %v3766
        %v3768 = vmul.f32 %v3767, %v3767
        %v3769 = vsel %vm1265, %v3768, 0.0
        %3770 = vadd.xlane.f32.xlu0 %v3769
        %v3771 = vpop.xlane.xlu0 %3770
        %v3772 = vmul.f32 %v3771, %v2454
        %v3773 = vadd.f32 %v3772, 1e-05
        %v3774 = vrsqrt.pop %v3773
        %v3775 = vmul.f32 %v3767, %v3774
        %v3777 = vlaneseq
        %v3778 = vshrl.u32 %v3777, 7
        %v3779 = vsub.s32 0, %v3778
        %v3780 = vrot.slane %v2529, %v3779
        %v3782 = vmul.f32 %v3775, %v3780
        %v3784 = vlaneseq
        %v3785 = vshrl.u32 %v3784, 7
        %v3786 = vsub.s32 0, %v3785
        %v3787 = vrot.slane %v2530, %v3786
        %v3789 = vadd.f32 %v3782, %v3787
        %v3790 = vadd.f32 %v2508, %v3789
        %v3791 = vld [vmem:[%s49] sm:$0x1]
        %v3792 = vld [vmem:[%s51] sm:$0x1]
        %v3793 = vsel %vm1265, %v3790, 0.0
        %3794 = vadd.xlane.f32.xlu0 %v3793
        %v3795 = vpop.xlane.xlu0 %3794
        %v3796 = vmul.f32 %v3795, %v2454
        %v3797 = vsub.f32 %v3790, %v3796
        %v3798 = vmul.f32 %v3797, %v3797
        %v3799 = vsel %vm1265, %v3798, 0.0
        %3800 = vadd.xlane.f32.xlu0 %v3799
        %v3801 = vpop.xlane.xlu0 %3800
        %v3802 = vmul.f32 %v3801, %v2454
        %v3803 = vadd.f32 %v3802, 1e-05
        %v3804 = vrsqrt.pop %v3803
        %v3805 = vmul.f32 %v3797, %v3804
        %v3807 = vlaneseq
        %v3808 = vshrl.u32 %v3807, 7
        %v3809 = vsub.s32 0, %v3808
        %v3810 = vrot.slane %v3791, %v3809
        %v3812 = vmul.f32 %v3805, %v3810
        %v3814 = vlaneseq
        %v3815 = vshrl.u32 %v3814, 7
        %v3816 = vsub.s32 0, %v3815
        %v3817 = vrot.slane %v3792, %v3816
        %v3819 = vadd.f32 %v3812, %v3817
        %v3820 = vld [vmem:[#allocation28] sm:$0xff]
        %v3821 = vld [vmem:[#allocation28 + $0x8] sm:$0xff]
        %v3822 = vld [vmem:[#allocation28 + $0x10] sm:$0xff]
        %v3823 = vld [vmem:[#allocation28 + $0x18] sm:$0xff]
        %v3824 = vld [vmem:[%s55] sm:$0x1]
        %v3826 = vlaneseq
        %v3827 = vshrl.u32 %v3826, 7
        %v3828 = vsub.s32 0, %v3827
        %v3829 = vrot.slane %v3824, %v3828
        %v3832 = vsel %vm1265, %v3819, 0
        %3834 = vmatprep.subr.mxu0 0.0
        %3835 = vmatpush1.msra.mxu0 0.0
        %3836 = vmatprep.subr.mxu0 0.0
        %3837 = vmatpush1.msra.mxu0 0.0
        %3838 = vmatprep.subr.mxu0 0.0
        %3839 = vmatpush1.msra.mxu0 0.0
        %3840 = vmatprep.subr.mxu0 0.0
        %3841 = vmatpush1.msra.mxu0 0.0
        %3842 = vmatprep.subr.mxu0 0.0
        %3843 = vmatpush1.msra.mxu0 0.0
        %3844 = vmatprep.subr.mxu0 0.0
        %3845 = vmatpush1.msra.mxu0 0.0
        %3846 = vmatprep.subr.mxu0 0.0
        %3847 = vmatpush1.msra.mxu0 0.0
        %3848 = vmatprep.subr.mxu0 0.0
        %3849 = vmatpush1.msra.mxu0 0.0
        %3850 = vmatprep.subr.mxu0 0.0
        %3851 = vmatpush1.msra.mxu0 0.0
        %3852 = vmatprep.subr.mxu0 0.0
        %3853 = vmatpush1.msra.mxu0 0.0
        %3854 = vmatprep.subr.mxu0 0.0
        %3855 = vmatpush1.msra.mxu0 0.0
        %3856 = vmatprep.subr.mxu0 0.0
        %3857 = vmatpush1.msra.mxu0 0.0
        %3858 = vmatprep.subr.mxu0 0.0
        %3859 = vmatpush1.msra.mxu0 %v3823
        %3860 = vmatprep.subr.mxu0 0.0
        %3861 = vmatpush1.msra.mxu0 %v3822
        %3862 = vmatprep.subr.mxu0 0.0
        %3863 = vmatpush1.msra.mxu0 %v3821
        %3864 = vmatprep.subr.mxu0 0.0
        %3865 = vmatpush1.msra.mxu0 %v3820
        %3866 = vmatprep.subr.mxu0 0.0
        %3867 = vmatpush2.msra.mxu0 0.0
        %3868 = vmatprep.subr.mxu0 0.0
        %3869 = vmatpush2.msra.mxu0 0.0
        %3870 = vmatprep.subr.mxu0 0.0
        %3871 = vmatpush2.msra.mxu0 0.0
        %3872 = vmatprep.subr.mxu0 0.0
        %3873 = vmatpush2.msra.mxu0 0.0
        %3874 = vmatprep.subr.mxu0 0.0
        %3875 = vmatpush2.msra.mxu0 0.0
        %3876 = vmatprep.subr.mxu0 0.0
        %3877 = vmatpush2.msra.mxu0 0.0
        %3878 = vmatprep.subr.mxu0 0.0
        %3879 = vmatpush2.msra.mxu0 0.0
        %3880 = vmatprep.subr.mxu0 0.0
        %3881 = vmatpush2.msra.mxu0 0.0
        %3882 = vmatprep.subr.mxu0 0.0
        %3883 = vmatpush2.msra.mxu0 0.0
        %3884 = vmatprep.subr.mxu0 0.0
        %3885 = vmatpush2.msra.mxu0 0.0
        %3886 = vmatprep.subr.mxu0 0.0
        %3887 = vmatpush2.msra.mxu0 0.0
        %3888 = vmatprep.subr.mxu0 0.0
        %3889 = vmatpush2.msra.mxu0 0.0
        %3890 = vmatprep.subr.mxu0 0.0
        %3891 = vmatpush2.msra.mxu0 0.0
        %3892 = vmatprep.subr.mxu0 0.0
        %3893 = vmatpush2.msra.mxu0 0.0
        %3894 = vmatprep.subr.mxu0 0.0
        %3895 = vmatpush2.msra.mxu0 0.0
        %3896 = vmatprep.subr.mxu0 0.0
        %3897 = vmatpush2.msra.mxu0 0.0
        %3898 = vmatprep.mubr.f32.mxu0 0.0
        %3899 = vmatmul.mubr.f32.gmra.mxu0 %v3832
        %v3900 = vpop.f32.mrf.mxu0
        %v3901 = vadd.f32 %v3829, %v3900
        %v3902 = vpop.f32.mrf.mxu0
        %3903 = vdwg.mxu0
        %v3904 = vmax.f32 %v3901, 0.0
        %v3905 = vld [vmem:[%s57] sm:$0xff]
        %v3906 = vld [vmem:[%s57 + $0x8] sm:$0xff]
        %v3907 = vld [vmem:[%s57 + $0x10] sm:$0xff]
        %v3908 = vld [vmem:[%s57 + $0x18] sm:$0xff]
        %v3909 = vld [vmem:[%s57 + $0x20] sm:$0xff]
        %v3910 = vld [vmem:[%s57 + $0x28] sm:$0xff]
        %v3911 = vld [vmem:[%s57 + $0x30] sm:$0xff]
        %v3912 = vld [vmem:[%s57 + $0x38] sm:$0xff]
        %v3913 = vld [vmem:[%s59] sm:$0x1]
        %v3915 = vlaneseq
        %v3916 = vshrl.u32 %v3915, 7
        %v3917 = vsub.s32 0, %v3916
        %v3918 = vrot.slane %v3913, %v3917
        %vm3920 = vcmask 523264
        %v3922 = vsel %vm3920, %v3904, 0
        %3924 = vmatprep.subr.mxu0 0.0
        %3925 = vmatpush1.msra.mxu0 0.0
        %3926 = vmatprep.subr.mxu0 0.0
        %3927 = vmatpush1.msra.mxu0 0.0
        %3928 = vmatprep.subr.mxu0 0.0
        %3929 = vmatpush1.msra.mxu0 0.0
        %3930 = vmatprep.subr.mxu0 0.0
        %3931 = vmatpush1.msra.mxu0 0.0
        %3932 = vmatprep.subr.mxu0 0.0
        %3933 = vmatpush1.msra.mxu0 0.0
        %3934 = vmatprep.subr.mxu0 0.0
        %3935 = vmatpush1.msra.mxu0 0.0
        %3936 = vmatprep.subr.mxu0 0.0
        %3937 = vmatpush1.msra.mxu0 0.0
        %3938 = vmatprep.subr.mxu0 0.0
        %3939 = vmatpush1.msra.mxu0 0.0
        %3940 = vmatprep.subr.mxu0 0.0
        %3941 = vmatpush1.msra.mxu0 %v3912
        %3942 = vmatprep.subr.mxu0 0.0
        %3943 = vmatpush1.msra.mxu0 %v3911
        %3944 = vmatprep.subr.mxu0 0.0
        %3945 = vmatpush1.msra.mxu0 %v3910
        %3946 = vmatprep.subr.mxu0 0.0
        %3947 = vmatpush1.msra.mxu0 %v3909
        %3948 = vmatprep.subr.mxu0 0.0
        %3949 = vmatpush1.msra.mxu0 %v3908
        %3950 = vmatprep.subr.mxu0 0.0
        %3951 = vmatpush1.msra.mxu0 %v3907
        %3952 = vmatprep.subr.mxu0 0.0
        %3953 = vmatpush1.msra.mxu0 %v3906
        %3954 = vmatprep.subr.mxu0 0.0
        %3955 = vmatpush1.msra.mxu0 %v3905
        %3956 = vmatprep.subr.mxu0 0.0
        %3957 = vmatpush2.msra.mxu0 0.0
        %3958 = vmatprep.subr.mxu0 0.0
        %3959 = vmatpush2.msra.mxu0 0.0
        %3960 = vmatprep.subr.mxu0 0.0
        %3961 = vmatpush2.msra.mxu0 0.0
        %3962 = vmatprep.subr.mxu0 0.0
        %3963 = vmatpush2.msra.mxu0 0.0
        %3964 = vmatprep.subr.mxu0 0.0
        %3965 = vmatpush2.msra.mxu0 0.0
        %3966 = vmatprep.subr.mxu0 0.0
        %3967 = vmatpush2.msra.mxu0 0.0
        %3968 = vmatprep.subr.mxu0 0.0
        %3969 = vmatpush2.msra.mxu0 0.0
        %3970 = vmatprep.subr.mxu0 0.0
        %3971 = vmatpush2.msra.mxu0 0.0
        %3972 = vmatprep.subr.mxu0 0.0
        %3973 = vmatpush2.msra.mxu0 0.0
        %3974 = vmatprep.subr.mxu0 0.0
        %3975 = vmatpush2.msra.mxu0 0.0
        %3976 = vmatprep.subr.mxu0 0.0
        %3977 = vmatpush2.msra.mxu0 0.0
        %3978 = vmatprep.subr.mxu0 0.0
        %3979 = vmatpush2.msra.mxu0 0.0
        %3980 = vmatprep.subr.mxu0 0.0
        %3981 = vmatpush2.msra.mxu0 0.0
        %3982 = vmatprep.subr.mxu0 0.0
        %3983 = vmatpush2.msra.mxu0 0.0
        %3984 = vmatprep.subr.mxu0 0.0
        %3985 = vmatpush2.msra.mxu0 0.0
        %3986 = vmatprep.subr.mxu0 0.0
        %3987 = vmatpush2.msra.mxu0 0.0
        %3988 = vmatprep.mubr.f32.mxu0 0.0
        %3989 = vmatmul.mubr.f32.gmra.mxu0 %v3922
        %v3990 = vpop.f32.mrf.mxu0
        %v3991 = vadd.f32 %v3918, %v3990
        %v3992 = vpop.f32.mrf.mxu0
        %3993 = vdwg.mxu0
        %v3994 = vadd.f32 %v3819, %v3991
        %v3995 = vld [vmem:[%s61] sm:$0x1]
        %v3996 = vld [vmem:[%s63] sm:$0x1]
        %v3997 = vsel %vm1265, %v3994, 0.0
        %3998 = vadd.xlane.f32.xlu0 %v3997
        %v3999 = vpop.xlane.xlu0 %3998
        %v4000 = vmul.f32 %v3999, %v2454
        %v4001 = vsub.f32 %v3994, %v4000
        %v4002 = vmul.f32 %v4001, %v4001
        %v4003 = vsel %vm1265, %v4002, 0.0
        %4004 = vadd.xlane.f32.xlu0 %v4003
        %v4005 = vpop.xlane.xlu0 %4004
        %v4006 = vmul.f32 %v4005, %v2454
        %v4007 = vadd.f32 %v4006, 1e-05
        %v4008 = vrsqrt.pop %v4007
        %v4009 = vmul.f32 %v4001, %v4008
        %v4011 = vlaneseq
        %v4012 = vshrl.u32 %v4011, 7
        %v4013 = vsub.s32 0, %v4012
        %v4014 = vrot.slane %v3995, %v4013
        %v4016 = vmul.f32 %v4009, %v4014
        %v4018 = vlaneseq
        %v4019 = vshrl.u32 %v4018, 7
        %v4020 = vsub.s32 0, %v4019
        %v4021 = vrot.slane %v3996, %v4020
        %v4023 = vadd.f32 %v4016, %v4021
        %4024 = vst.msk [vmem:[%s1228] sm:$0xff] %vm1265, %v4023
        %s4025 = sand.u32 %s780, 1
        %s4026 = scalar_lea.sflag [#allocation4], %s4025
        %s4027 = sand.u32 %s780, 1
        %s4028 = smul.addr %s4027, 8
        %s4029 = scalar_lea.vmem [#allocation29], %s4028
        // Predicated region
        $region217: #{tpu_custom_call.1} parent=147 // pred_check
          %p4030 = pneg %p790
        $region218: #{tpu_custom_call.1} parent=147 // pred_check_branch
          %4032 = sbr.rel (%p4030) target = $region220
        $region219: #{tpu_custom_call.1} parent=147 // pred_region
          %s4034 = ssub.s32 128, 128
          %4035 = vsyncadd %s4026, %s4034
          %s4036 = smul.addr %s90, 128
          %s4037 = scalar_lea.hbm %s65, %s4036
          %s4039 = sshll.u32 %s4029, 4
          %s4040 = int_to_ptr.vmem [resolvable:$true] %s4039
          %4042 = dma.vmem_to_hbm [thread:$0]  %s4040, 128, %s4037, %s4026
        $region220: #{tpu_custom_call.1} parent=147 // pred_fallthru
          _
      $region148: #{tpu_custom_call.1} parent=5 // pred_fallthru
        _
      %p4043 = scmp.le.s32.totalorder 2, %s85
      // Predicated region
      $region221: #{tpu_custom_call.1} parent=5 // pred_check
        %p4044 = pneg %p4043
      $region222: #{tpu_custom_call.1} parent=5 // pred_check_branch
        %4046 = sbr.rel (%p4044) target = $region224
      $region223: #{tpu_custom_call.1} parent=5 // pred_region
        %s4047 = ssub.s32 %s85, 2
        // Predicated region
        $region225: #{tpu_custom_call.1} parent=223 // pred_check
          %p4048 = pneg %p796
        $region226: #{tpu_custom_call.1} parent=223 // pred_check_branch
          %4050 = sbr.rel (%p4048) target = $region228
        $region227: #{tpu_custom_call.1} parent=223 // pred_region
          %s4051 = sand.u32 %s781, 1
          %s4052 = scalar_lea.sflag [#allocation4], %s4051
          %s4053 = sand.u32 %s781, 1
          %s4054 = smul.addr %s4053, 8
          %s4055 = scalar_lea.vmem [#allocation29], %s4054
          %4056 = dma.done %s4052, 128
        $region228: #{tpu_custom_call.1} parent=223 // pred_fallthru
          _
      $region224: #{tpu_custom_call.1} parent=5 // pred_fallthru
        _
    $region6: #{tpu_custom_call.1} parent=1 // loop_footer
      %s89 = sadd.s32 1, %s85
    $region7: #{tpu_custom_call.1} parent=1 // loop_footer_branch
      %84 = sbr.rel target = $region3
    $region8: #{tpu_custom_call.1} parent=1 // loop_exit
      _
    %4057 = vsyncpa [#allocation3], 1
    %s4058 = scalar_lea.sflag [#allocation3], 1
    %4059 = vsyncpa %s4058, 1
    %4060 = vsyncpa [#allocation6], 1
    %4061 = vsyncpa [#allocation9], 1
    %4062 = vsyncpa [#allocation12], 1
    %4063 = vsyncpa [#allocation15], 1
    %4064 = vsyncpa [#allocation18], 1
    %4065 = vsyncpa [#allocation21], 1
    %4066 = vsyncpa [#allocation24], 1
    %4067 = vsyncpa [#allocation27], 1
    %4068 = vsyncpa [#allocation4], 1
    %s4069 = scalar_lea.sflag [#allocation4], 1
    %4070 = vsyncpa %s4069, 1

</llo_original>
